<compile_context>
chip_gen: v6e
topology: v6e:2x2x1
jax: 0.10.0
libtpu: 0.0.40
codegen_flags: <defaults>
</compile_context>

<pallas_src>
import jax
import jax.numpy as jnp
from jax import lax
from jax.experimental import pallas as pl
from jax.experimental.pallas import tpu as pltpu


def _round_up(x, m):
    return ((x + m - 1) // m) * m


# ---------------------------------------------------------------------------
# Fused kernel: all `num_layers` stacked tanh-RNN layers in one call.
#   refs layout (positional):
#     ctx_ref   : [T, Bp, Cp]   padded, time-major context
#     per layer l: w_in_t[l] : [In_p, Hp], w_hh_t[l] : [Hp, Hp], b[l] : [1, Hp]
#     y_ref     : [T, Bp, Hp]   output (also reused as inter-layer activation)
#     xw_scr    : [T, Bp, Hp]   VMEM scratch for whole-sequence projections
# ---------------------------------------------------------------------------
def _make_fused_kernel(num_layers, T, Bp, Hp):
    def kernel(*refs):
        ctx_ref = refs[0]
        params = refs[1:1 + 3 * num_layers]
        y_ref = refs[1 + 3 * num_layers]
        xw_scr = refs[2 + 3 * num_layers]

        def run_layer(inp_flat, w_in_t, w_hh_t, b):
            # Whole-sequence input projection: one lane-dense MXU matmul with
            # the bias folded into its epilogue add (no sequential dependence).
            xw = jnp.dot(inp_flat, w_in_t,
                         preferred_element_type=jnp.float32) + b
            xw_scr[...] = xw.reshape(T, Bp, Hp)

            # Serial recurrence: one tiny [Bp,Hp]x[Hp,Hp] matmul + tanh per
            # step; h is carried in vregs, the store to y_ref is lane-dense.
            def step(t, h_prev):
                pre = xw_scr[t] + jnp.dot(
                    h_prev, w_hh_t, preferred_element_type=jnp.float32)
                h_new = jnp.tanh(pre)
                y_ref[t] = h_new
                return h_new

            lax.fori_loop(0, T, step,
                          jnp.zeros((Bp, Hp), jnp.float32), unroll=True)

        # Layer 0 consumes the (padded) context; deeper layers consume the
        # previous layer's activations straight out of VMEM (y_ref).
        inp_ref = ctx_ref
        for l in range(num_layers):
            w_in_t = params[3 * l][...]       # [In_p, Hp] == W_ih^T (padded)
            w_hh_t = params[3 * l + 1][...]   # [Hp, Hp]   == W_hh^T (padded)
            b = params[3 * l + 2][...]        # [1, Hp]    == b_ih + b_hh
            in_dim = inp_ref.shape[-1]
            run_layer(inp_ref[...].reshape(T * Bp, in_dim), w_in_t, w_hh_t, b)
            inp_ref = y_ref

    return kernel


def _fused_rnn(ctx_pad, layer_params):
    T, Bp, _ = ctx_pad.shape
    Hp = layer_params[0][1].shape[1]
    inputs = [ctx_pad]
    for (w_in_t, w_hh_t, b) in layer_params:
        inputs += [w_in_t, w_hh_t, b]
    kernel = _make_fused_kernel(len(layer_params), T, Bp, Hp)
    return pl.pallas_call(
        kernel,
        out_shape=jax.ShapeDtypeStruct((T, Bp, Hp), jnp.float32),
        in_specs=[pl.BlockSpec(memory_space=pltpu.MemorySpace.VMEM)] * len(inputs),
        out_specs=pl.BlockSpec(memory_space=pltpu.MemorySpace.VMEM),
        scratch_shapes=[pltpu.VMEM((T, Bp, Hp), jnp.float32)],
    )(*inputs)


# ---------------------------------------------------------------------------
# Module wrapper. Parameters mimic torch.nn.RNN init: U(-1/sqrt(H), 1/sqrt(H)).
# Weights are stored pre-transposed and zero-padded to 128 lanes for the kernel.
# ---------------------------------------------------------------------------
class NeuralAutoregressiveFlowPallas:
    def __init__(self, features, hidden_features, context_features,
                 num_layers=2, key=jax.random.PRNGKey(0)):
        H, C = hidden_features, context_features
        Hp, Cp = _round_up(H, 128), _round_up(C, 128)
        self.H, self.Hp, self.C, self.Cp = H, Hp, C, Cp
        bound = 1.0 / float(H) ** 0.5

        def uni(k, shape):
            return jax.random.uniform(k, shape, jnp.float32, -bound, bound)

        def pad_t(w, in_p, out_p):
            wt = w.T  # [In, H]
            return jnp.zeros((in_p, out_p), jnp.float32).at[
                :wt.shape[0], :wt.shape[1]].set(wt)

        def pad_b(b):
            return jnp.zeros((1, Hp), jnp.float32).at[0, :H].set(b)

        self.raw_params = []     # (w_ih, w_hh, b) unpadded, for the JAX ref
        self.kernel_params = []  # (w_in_t, w_hh_t, b_pad) padded, for kernel

        # context_net = nn.RNN(context_features, H, 1, batch_first=True)
        key, k1, k2, k3, k4 = jax.random.split(key, 5)
        w_ih0, w_hh0 = uni(k1, (H, C)), uni(k2, (H, H))
        b0 = uni(k3, (H,)) + uni(k4, (H,))                    # b_ih + b_hh
        self.raw_params.append((w_ih0, w_hh0, b0))
        self.kernel_params.append((pad_t(w_ih0, Cp, Hp),
                                   pad_t(w_hh0, Hp, Hp), pad_b(b0)))

        # autoregressive_transform = nn.RNN(H, H, num_layers, batch_first=True)
        for _ in range(num_layers):
            key, k1, k2, k3, k4 = jax.random.split(key, 5)
            w_ih, w_hh = uni(k1, (H, H)), uni(k2, (H, H))
            b = uni(k3, (H,)) + uni(k4, (H,))
            self.raw_params.append((w_ih, w_hh, b))
            self.kernel_params.append((pad_t(w_ih, Hp, Hp),
                                       pad_t(w_hh, Hp, Hp), pad_b(b)))

    def forward(self, x, context):
        # TODO(synk): the reference forward calls autoregressive_transform()
        # with no input and returns None (incomplete module); we feed it the
        # context_net output (the evident intent) and return that RNN output.
        # `x` is unused, as in the reference.
        B, T, C = context.shape
        H, Hp, Cp = self.H, self.Hp, self.Cp
        Bp = _round_up(B, 8)

        # Layout plumbing only: time-major, pad batch to 8 sublanes and
        # features to 128 lanes so every in-kernel op is unmasked/lane-dense.
        ctx = jnp.transpose(context.astype(jnp.float32), (1, 0, 2))
        ctx = jnp.pad(ctx, ((0, 0), (0, Bp - B), (0, Cp - C)))

        y = _fused_rnn(ctx, self.kernel_params)            # [T, Bp, Hp]
        return jnp.transpose(y, (1, 0, 2))[:B, :, :H]      # [B, T, H]

    def forward_reference(self, x, context):
        # Pure-JAX reference mirroring torch.nn.RNN (tanh, h0 = 0).
        h_seq = context.astype(jnp.float32)
        for (w_ih, w_hh, b) in self.raw_params:
            def step(h, x_t, w_ih=w_ih, w_hh=w_hh, b=b):
                h_new = jnp.tanh(x_t @ w_ih.T + h @ w_hh.T + b)
                return h_new, h_new
            xs = jnp.transpose(h_seq, (1, 0, 2))
            B = h_seq.shape[0]
            _, ys = lax.scan(step, jnp.zeros((B, w_hh.shape[0]), jnp.float32),
                             xs)
            h_seq = jnp.transpose(ys, (1, 0, 2))
        return h_seq


if __name__ == "__main__":
    B, T = 2, 8
    features = 4
    context_features = 4
    hidden_features = 32

    key = jax.random.PRNGKey(0)
    kx, kc, kp = jax.random.split(key, 3)
    x = jax.random.normal(kx, (B, T, features), jnp.float32)
    context = jax.random.normal(kc, (B, T, context_features), jnp.float32)

    model = NeuralAutoregressiveFlowPallas(features, hidden_features,
                                           context_features, num_layers=2,
                                           key=kp)
    y = model.forward(x, context)
    jax.block_until_ready(y)
    assert y.shape == (B, T, hidden_features)

    y_ref = model.forward_reference(x, context)
    jax.block_until_ready(y_ref)
    max_err = float(jnp.max(jnp.abs(y - y_ref)))
    assert max_err < 1e-4, f"mismatch vs pure-JAX reference: {max_err}"

    print("KERNEL_OK")
</pallas_src>

<mosaic_0001>
module attributes {stable_mosaic.version = 11 : i64} {
  func.func @kernel(%arg0: memref<8x8x128xf32, #tpu.memory_space<vmem>>, %arg1: memref<128x128xf32, #tpu.memory_space<vmem>>, %arg2: memref<128x128xf32, #tpu.memory_space<vmem>>, %arg3: memref<1x128xf32, #tpu.memory_space<vmem>>, %arg4: memref<128x128xf32, #tpu.memory_space<vmem>>, %arg5: memref<128x128xf32, #tpu.memory_space<vmem>>, %arg6: memref<1x128xf32, #tpu.memory_space<vmem>>, %arg7: memref<128x128xf32, #tpu.memory_space<vmem>>, %arg8: memref<128x128xf32, #tpu.memory_space<vmem>>, %arg9: memref<1x128xf32, #tpu.memory_space<vmem>>, %arg10: memref<8x8x128xf32, #tpu.memory_space<vmem>>, %arg11: memref<8x8x128xf32, #tpu.memory_space<vmem>>) attributes {dimension_semantics = [], scalar_prefetch = 0 : i64, scratch_operands = 1 : i64, tpu.core_type = #tpu.core_type<tc>} {
    %c0 = arith.constant 0 : index
    %c0_0 = arith.constant 0 : index
    %0 = vector.load %arg1[%c0, %c0_0] : memref<128x128xf32, #tpu.memory_space<vmem>>, vector<128x128xf32>
    %c0_1 = arith.constant 0 : index
    %c0_2 = arith.constant 0 : index
    %1 = vector.load %arg2[%c0_1, %c0_2] : memref<128x128xf32, #tpu.memory_space<vmem>>, vector<128x128xf32>
    %c0_3 = arith.constant 0 : index
    %c0_4 = arith.constant 0 : index
    %2 = vector.load %arg3[%c0_3, %c0_4] : memref<1x128xf32, #tpu.memory_space<vmem>>, vector<1x128xf32>
    %c0_5 = arith.constant 0 : index
    %c0_6 = arith.constant 0 : index
    %c0_7 = arith.constant 0 : index
    %3 = vector.load %arg0[%c0_5, %c0_6, %c0_7] : memref<8x8x128xf32, #tpu.memory_space<vmem>>, vector<8x8x128xf32>
    %4 = vector.shape_cast %3 : vector<8x8x128xf32> to vector<64x128xf32>
    %cst = arith.constant dense<0.000000e+00> : vector<64x128xf32>
    %5 = tpu.matmul %4, %0, %cst {dimension_numbers = #tpu.dot_dimension_numbers<[1], [0], [0], [1], [0, 0, 1, 1], [], []>} : vector<64x128xf32>, vector<128x128xf32>, vector<64x128xf32> -> vector<64x128xf32>
    %6 = vector.broadcast %2 : vector<1x128xf32> to vector<64x128xf32>
    %7 = arith.addf %5, %6 : vector<64x128xf32>
    %8 = vector.shape_cast %7 : vector<64x128xf32> to vector<8x8x128xf32>
    %c0_8 = arith.constant 0 : index
    %c0_9 = arith.constant 0 : index
    %c0_10 = arith.constant 0 : index
    %9 = vector.load %arg11[%c0_8, %c0_9, %c0_10] : memref<8x8x128xf32, #tpu.memory_space<vmem>>, vector<8x8x128xf32>
    tpu.vector_store %arg11[%c0_8, %c0_9, %c0_10], %8 {strides = array<i32>} : memref<8x8x128xf32, #tpu.memory_space<vmem>>, vector<8x8x128xf32>,
    %cst_11 = arith.constant 0.000000e+00 : f32
    %10 = vector.broadcast %cst_11 : f32 to vector<8x128xf32>
    %c0_i32 = arith.constant 0 : i32
    %11 = arith.index_cast %c0_i32 : i32 to index
    %c0_12 = arith.constant 0 : index
    %c0_13 = arith.constant 0 : index
    %12 = vector.load %arg11[%11, %c0_12, %c0_13] : memref<8x8x128xf32, #tpu.memory_space<vmem>>, vector<1x8x128xf32>
    %13 = vector.shape_cast %12 : vector<1x8x128xf32> to vector<8x128xf32>
    %cst_14 = arith.constant dense<0.000000e+00> : vector<8x128xf32>
    %14 = tpu.matmul %10, %1, %cst_14 {dimension_numbers = #tpu.dot_dimension_numbers<[1], [0], [0], [1], [0, 0, 1, 1], [], []>} : vector<8x128xf32>, vector<128x128xf32>, vector<8x128xf32> -> vector<8x128xf32>
    %15 = arith.addf %13, %14 : vector<8x128xf32>
    %16 = math.tanh %15 : vector<8x128xf32>
    %17 = arith.index_cast %c0_i32 : i32 to index
    %c0_15 = arith.constant 0 : index
    %c0_16 = arith.constant 0 : index
    %18 = vector.load %arg10[%17, %c0_15, %c0_16] : memref<8x8x128xf32, #tpu.memory_space<vmem>>, vector<1x8x128xf32>
    %19 = vector.shape_cast %18 : vector<1x8x128xf32> to vector<8x128xf32>
    %20 = vector.shape_cast %16 : vector<8x128xf32> to vector<1x8x128xf32>
    tpu.vector_store %arg10[%17, %c0_15, %c0_16], %20 {strides = array<i32>} : memref<8x8x128xf32, #tpu.memory_space<vmem>>, vector<1x8x128xf32>,
    %c1_i32 = arith.constant 1 : i32
    %21 = arith.index_cast %c1_i32 : i32 to index
    %c0_17 = arith.constant 0 : index
    %c0_18 = arith.constant 0 : index
    %22 = vector.load %arg11[%21, %c0_17, %c0_18] : memref<8x8x128xf32, #tpu.memory_space<vmem>>, vector<1x8x128xf32>
    %23 = vector.shape_cast %22 : vector<1x8x128xf32> to vector<8x128xf32>
    %cst_19 = arith.constant dense<0.000000e+00> : vector<8x128xf32>
    %24 = tpu.matmul %16, %1, %cst_19 {dimension_numbers = #tpu.dot_dimension_numbers<[1], [0], [0], [1], [0, 0, 1, 1], [], []>} : vector<8x128xf32>, vector<128x128xf32>, vector<8x128xf32> -> vector<8x128xf32>
    %25 = arith.addf %23, %24 : vector<8x128xf32>
    %26 = math.tanh %25 : vector<8x128xf32>
    %27 = arith.index_cast %c1_i32 : i32 to index
    %c0_20 = arith.constant 0 : index
    %c0_21 = arith.constant 0 : index
    %28 = vector.load %arg10[%27, %c0_20, %c0_21] : memref<8x8x128xf32, #tpu.memory_space<vmem>>, vector<1x8x128xf32>
    %29 = vector.shape_cast %28 : vector<1x8x128xf32> to vector<8x128xf32>
    %30 = vector.shape_cast %26 : vector<8x128xf32> to vector<1x8x128xf32>
    tpu.vector_store %arg10[%27, %c0_20, %c0_21], %30 {strides = array<i32>} : memref<8x8x128xf32, #tpu.memory_space<vmem>>, vector<1x8x128xf32>,
    %c2_i32 = arith.constant 2 : i32
    %31 = arith.index_cast %c2_i32 : i32 to index
    %c0_22 = arith.constant 0 : index
    %c0_23 = arith.constant 0 : index
    %32 = vector.load %arg11[%31, %c0_22, %c0_23] : memref<8x8x128xf32, #tpu.memory_space<vmem>>, vector<1x8x128xf32>
    %33 = vector.shape_cast %32 : vector<1x8x128xf32> to vector<8x128xf32>
    %cst_24 = arith.constant dense<0.000000e+00> : vector<8x128xf32>
    %34 = tpu.matmul %26, %1, %cst_24 {dimension_numbers = #tpu.dot_dimension_numbers<[1], [0], [0], [1], [0, 0, 1, 1], [], []>} : vector<8x128xf32>, vector<128x128xf32>, vector<8x128xf32> -> vector<8x128xf32>
    %35 = arith.addf %33, %34 : vector<8x128xf32>
    %36 = math.tanh %35 : vector<8x128xf32>
    %37 = arith.index_cast %c2_i32 : i32 to index
    %c0_25 = arith.constant 0 : index
    %c0_26 = arith.constant 0 : index
    %38 = vector.load %arg10[%37, %c0_25, %c0_26] : memref<8x8x128xf32, #tpu.memory_space<vmem>>, vector<1x8x128xf32>
    %39 = vector.shape_cast %38 : vector<1x8x128xf32> to vector<8x128xf32>
    %40 = vector.shape_cast %36 : vector<8x128xf32> to vector<1x8x128xf32>
    tpu.vector_store %arg10[%37, %c0_25, %c0_26], %40 {strides = array<i32>} : memref<8x8x128xf32, #tpu.memory_space<vmem>>, vector<1x8x128xf32>,
    %c3_i32 = arith.constant 3 : i32
    %41 = arith.index_cast %c3_i32 : i32 to index
    %c0_27 = arith.constant 0 : index
    %c0_28 = arith.constant 0 : index
    %42 = vector.load %arg11[%41, %c0_27, %c0_28] : memref<8x8x128xf32, #tpu.memory_space<vmem>>, vector<1x8x128xf32>
    %43 = vector.shape_cast %42 : vector<1x8x128xf32> to vector<8x128xf32>
    %cst_29 = arith.constant dense<0.000000e+00> : vector<8x128xf32>
    %44 = tpu.matmul %36, %1, %cst_29 {dimension_numbers = #tpu.dot_dimension_numbers<[1], [0], [0], [1], [0, 0, 1, 1], [], []>} : vector<8x128xf32>, vector<128x128xf32>, vector<8x128xf32> -> vector<8x128xf32>
    %45 = arith.addf %43, %44 : vector<8x128xf32>
    %46 = math.tanh %45 : vector<8x128xf32>
    %47 = arith.index_cast %c3_i32 : i32 to index
    %c0_30 = arith.constant 0 : index
    %c0_31 = arith.constant 0 : index
    %48 = vector.load %arg10[%47, %c0_30, %c0_31] : memref<8x8x128xf32, #tpu.memory_space<vmem>>, vector<1x8x128xf32>
    %49 = vector.shape_cast %48 : vector<1x8x128xf32> to vector<8x128xf32>
    %50 = vector.shape_cast %46 : vector<8x128xf32> to vector<1x8x128xf32>
    tpu.vector_store %arg10[%47, %c0_30, %c0_31], %50 {strides = array<i32>} : memref<8x8x128xf32, #tpu.memory_space<vmem>>, vector<1x8x128xf32>,
    %c4_i32 = arith.constant 4 : i32
    %51 = arith.index_cast %c4_i32 : i32 to index
    %c0_32 = arith.constant 0 : index
    %c0_33 = arith.constant 0 : index
    %52 = vector.load %arg11[%51, %c0_32, %c0_33] : memref<8x8x128xf32, #tpu.memory_space<vmem>>, vector<1x8x128xf32>
    %53 = vector.shape_cast %52 : vector<1x8x128xf32> to vector<8x128xf32>
    %cst_34 = arith.constant dense<0.000000e+00> : vector<8x128xf32>
    %54 = tpu.matmul %46, %1, %cst_34 {dimension_numbers = #tpu.dot_dimension_numbers<[1], [0], [0], [1], [0, 0, 1, 1], [], []>} : vector<8x128xf32>, vector<128x128xf32>, vector<8x128xf32> -> vector<8x128xf32>
    %55 = arith.addf %53, %54 : vector<8x128xf32>
    %56 = math.tanh %55 : vector<8x128xf32>
    %57 = arith.index_cast %c4_i32 : i32 to index
    %c0_35 = arith.constant 0 : index
    %c0_36 = arith.constant 0 : index
    %58 = vector.load %arg10[%57, %c0_35, %c0_36] : memref<8x8x128xf32, #tpu.memory_space<vmem>>, vector<1x8x128xf32>
    %59 = vector.shape_cast %58 : vector<1x8x128xf32> to vector<8x128xf32>
    %60 = vector.shape_cast %56 : vector<8x128xf32> to vector<1x8x128xf32>
    tpu.vector_store %arg10[%57, %c0_35, %c0_36], %60 {strides = array<i32>} : memref<8x8x128xf32, #tpu.memory_space<vmem>>, vector<1x8x128xf32>,
    %c5_i32 = arith.constant 5 : i32
    %61 = arith.index_cast %c5_i32 : i32 to index
    %c0_37 = arith.constant 0 : index
    %c0_38 = arith.constant 0 : index
    %62 = vector.load %arg11[%61, %c0_37, %c0_38] : memref<8x8x128xf32, #tpu.memory_space<vmem>>, vector<1x8x128xf32>
    %63 = vector.shape_cast %62 : vector<1x8x128xf32> to vector<8x128xf32>
    %cst_39 = arith.constant dense<0.000000e+00> : vector<8x128xf32>
    %64 = tpu.matmul %56, %1, %cst_39 {dimension_numbers = #tpu.dot_dimension_numbers<[1], [0], [0], [1], [0, 0, 1, 1], [], []>} : vector<8x128xf32>, vector<128x128xf32>, vector<8x128xf32> -> vector<8x128xf32>
    %65 = arith.addf %63, %64 : vector<8x128xf32>
    %66 = math.tanh %65 : vector<8x128xf32>
    %67 = arith.index_cast %c5_i32 : i32 to index
    %c0_40 = arith.constant 0 : index
    %c0_41 = arith.constant 0 : index
    %68 = vector.load %arg10[%67, %c0_40, %c0_41] : memref<8x8x128xf32, #tpu.memory_space<vmem>>, vector<1x8x128xf32>
    %69 = vector.shape_cast %68 : vector<1x8x128xf32> to vector<8x128xf32>
    %70 = vector.shape_cast %66 : vector<8x128xf32> to vector<1x8x128xf32>
    tpu.vector_store %arg10[%67, %c0_40, %c0_41], %70 {strides = array<i32>} : memref<8x8x128xf32, #tpu.memory_space<vmem>>, vector<1x8x128xf32>,
    %c6_i32 = arith.constant 6 : i32
    %71 = arith.index_cast %c6_i32 : i32 to index
    %c0_42 = arith.constant 0 : index
    %c0_43 = arith.constant 0 : index
    %72 = vector.load %arg11[%71, %c0_42, %c0_43] : memref<8x8x128xf32, #tpu.memory_space<vmem>>, vector<1x8x128xf32>
    %73 = vector.shape_cast %72 : vector<1x8x128xf32> to vector<8x128xf32>
    %cst_44 = arith.constant dense<0.000000e+00> : vector<8x128xf32>
    %74 = tpu.matmul %66, %1, %cst_44 {dimension_numbers = #tpu.dot_dimension_numbers<[1], [0], [0], [1], [0, 0, 1, 1], [], []>} : vector<8x128xf32>, vector<128x128xf32>, vector<8x128xf32> -> vector<8x128xf32>
    %75 = arith.addf %73, %74 : vector<8x128xf32>
    %76 = math.tanh %75 : vector<8x128xf32>
    %77 = arith.index_cast %c6_i32 : i32 to index
    %c0_45 = arith.constant 0 : index
    %c0_46 = arith.constant 0 : index
    %78 = vector.load %arg10[%77, %c0_45, %c0_46] : memref<8x8x128xf32, #tpu.memory_space<vmem>>, vector<1x8x128xf32>
    %79 = vector.shape_cast %78 : vector<1x8x128xf32> to vector<8x128xf32>
    %80 = vector.shape_cast %76 : vector<8x128xf32> to vector<1x8x128xf32>
    tpu.vector_store %arg10[%77, %c0_45, %c0_46], %80 {strides = array<i32>} : memref<8x8x128xf32, #tpu.memory_space<vmem>>, vector<1x8x128xf32>,
    %c7_i32 = arith.constant 7 : i32
    %81 = arith.index_cast %c7_i32 : i32 to index
    %c0_47 = arith.constant 0 : index
    %c0_48 = arith.constant 0 : index
    %82 = vector.load %arg11[%81, %c0_47, %c0_48] : memref<8x8x128xf32, #tpu.memory_space<vmem>>, vector<1x8x128xf32>
    %83 = vector.shape_cast %82 : vector<1x8x128xf32> to vector<8x128xf32>
    %cst_49 = arith.constant dense<0.000000e+00> : vector<8x128xf32>
    %84 = tpu.matmul %76, %1, %cst_49 {dimension_numbers = #tpu.dot_dimension_numbers<[1], [0], [0], [1], [0, 0, 1, 1], [], []>} : vector<8x128xf32>, vector<128x128xf32>, vector<8x128xf32> -> vector<8x128xf32>
    %85 = arith.addf %83, %84 : vector<8x128xf32>
    %86 = math.tanh %85 : vector<8x128xf32>
    %87 = arith.index_cast %c7_i32 : i32 to index
    %c0_50 = arith.constant 0 : index
    %c0_51 = arith.constant 0 : index
    %88 = vector.load %arg10[%87, %c0_50, %c0_51] : memref<8x8x128xf32, #tpu.memory_space<vmem>>, vector<1x8x128xf32>
    %89 = vector.shape_cast %88 : vector<1x8x128xf32> to vector<8x128xf32>
    %90 = vector.shape_cast %86 : vector<8x128xf32> to vector<1x8x128xf32>
    tpu.vector_store %arg10[%87, %c0_50, %c0_51], %90 {strides = array<i32>} : memref<8x8x128xf32, #tpu.memory_space<vmem>>, vector<1x8x128xf32>,
    %c8_i32 = arith.constant 8 : i32
    %c0_52 = arith.constant 0 : index
    %c0_53 = arith.constant 0 : index
    %91 = vector.load %arg4[%c0_52, %c0_53] : memref<128x128xf32, #tpu.memory_space<vmem>>, vector<128x128xf32>
    %c0_54 = arith.constant 0 : index
    %c0_55 = arith.constant 0 : index
    %92 = vector.load %arg5[%c0_54, %c0_55] : memref<128x128xf32, #tpu.memory_space<vmem>>, vector<128x128xf32>
    %c0_56 = arith.constant 0 : index
    %c0_57 = arith.constant 0 : index
    %93 = vector.load %arg6[%c0_56, %c0_57] : memref<1x128xf32, #tpu.memory_space<vmem>>, vector<1x128xf32>
    %c0_58 = arith.constant 0 : index
    %c0_59 = arith.constant 0 : index
    %c0_60 = arith.constant 0 : index
    %94 = vector.load %arg10[%c0_58, %c0_59, %c0_60] : memref<8x8x128xf32, #tpu.memory_space<vmem>>, vector<8x8x128xf32>
    %95 = vector.shape_cast %94 : vector<8x8x128xf32> to vector<64x128xf32>
    %cst_61 = arith.constant dense<0.000000e+00> : vector<64x128xf32>
    %96 = tpu.matmul %95, %91, %cst_61 {dimension_numbers = #tpu.dot_dimension_numbers<[1], [0], [0], [1], [0, 0, 1, 1], [], []>} : vector<64x128xf32>, vector<128x128xf32>, vector<64x128xf32> -> vector<64x128xf32>
    %97 = vector.broadcast %93 : vector<1x128xf32> to vector<64x128xf32>
    %98 = arith.addf %96, %97 : vector<64x128xf32>
    %99 = vector.shape_cast %98 : vector<64x128xf32> to vector<8x8x128xf32>
    %c0_62 = arith.constant 0 : index
    %c0_63 = arith.constant 0 : index
    %c0_64 = arith.constant 0 : index
    %100 = vector.load %arg11[%c0_62, %c0_63, %c0_64] : memref<8x8x128xf32, #tpu.memory_space<vmem>>, vector<8x8x128xf32>
    tpu.vector_store %arg11[%c0_62, %c0_63, %c0_64], %99 {strides = array<i32>} : memref<8x8x128xf32, #tpu.memory_space<vmem>>, vector<8x8x128xf32>,
    %cst_65 = arith.constant 0.000000e+00 : f32
    %101 = vector.broadcast %cst_65 : f32 to vector<8x128xf32>
    %c0_i32_66 = arith.constant 0 : i32
    %102 = arith.index_cast %c0_i32_66 : i32 to index
    %c0_67 = arith.constant 0 : index
    %c0_68 = arith.constant 0 : index
    %103 = vector.load %arg11[%102, %c0_67, %c0_68] : memref<8x8x128xf32, #tpu.memory_space<vmem>>, vector<1x8x128xf32>
    %104 = vector.shape_cast %103 : vector<1x8x128xf32> to vector<8x128xf32>
    %cst_69 = arith.constant dense<0.000000e+00> : vector<8x128xf32>
    %105 = tpu.matmul %101, %92, %cst_69 {dimension_numbers = #tpu.dot_dimension_numbers<[1], [0], [0], [1], [0, 0, 1, 1], [], []>} : vector<8x128xf32>, vector<128x128xf32>, vector<8x128xf32> -> vector<8x128xf32>
    %106 = arith.addf %104, %105 : vector<8x128xf32>
    %107 = math.tanh %106 : vector<8x128xf32>
    %108 = arith.index_cast %c0_i32_66 : i32 to index
    %c0_70 = arith.constant 0 : index
    %c0_71 = arith.constant 0 : index
    %109 = vector.load %arg10[%108, %c0_70, %c0_71] : memref<8x8x128xf32, #tpu.memory_space<vmem>>, vector<1x8x128xf32>
    %110 = vector.shape_cast %109 : vector<1x8x128xf32> to vector<8x128xf32>
    %111 = vector.shape_cast %107 : vector<8x128xf32> to vector<1x8x128xf32>
    tpu.vector_store %arg10[%108, %c0_70, %c0_71], %111 {strides = array<i32>} : memref<8x8x128xf32, #tpu.memory_space<vmem>>, vector<1x8x128xf32>,
    %c1_i32_72 = arith.constant 1 : i32
    %112 = arith.index_cast %c1_i32_72 : i32 to index
    %c0_73 = arith.constant 0 : index
    %c0_74 = arith.constant 0 : index
    %113 = vector.load %arg11[%112, %c0_73, %c0_74] : memref<8x8x128xf32, #tpu.memory_space<vmem>>, vector<1x8x128xf32>
    %114 = vector.shape_cast %113 : vector<1x8x128xf32> to vector<8x128xf32>
    %cst_75 = arith.constant dense<0.000000e+00> : vector<8x128xf32>
    %115 = tpu.matmul %107, %92, %cst_75 {dimension_numbers = #tpu.dot_dimension_numbers<[1], [0], [0], [1], [0, 0, 1, 1], [], []>} : vector<8x128xf32>, vector<128x128xf32>, vector<8x128xf32> -> vector<8x128xf32>
    %116 = arith.addf %114, %115 : vector<8x128xf32>
    %117 = math.tanh %116 : vector<8x128xf32>
    %118 = arith.index_cast %c1_i32_72 : i32 to index
    %c0_76 = arith.constant 0 : index
    %c0_77 = arith.constant 0 : index
    %119 = vector.load %arg10[%118, %c0_76, %c0_77] : memref<8x8x128xf32, #tpu.memory_space<vmem>>, vector<1x8x128xf32>
    %120 = vector.shape_cast %119 : vector<1x8x128xf32> to vector<8x128xf32>
    %121 = vector.shape_cast %117 : vector<8x128xf32> to vector<1x8x128xf32>
    tpu.vector_store %arg10[%118, %c0_76, %c0_77], %121 {strides = array<i32>} : memref<8x8x128xf32, #tpu.memory_space<vmem>>, vector<1x8x128xf32>,
    %c2_i32_78 = arith.constant 2 : i32
    %122 = arith.index_cast %c2_i32_78 : i32 to index
    %c0_79 = arith.constant 0 : index
    %c0_80 = arith.constant 0 : index
    %123 = vector.load %arg11[%122, %c0_79, %c0_80] : memref<8x8x128xf32, #tpu.memory_space<vmem>>, vector<1x8x128xf32>
    %124 = vector.shape_cast %123 : vector<1x8x128xf32> to vector<8x128xf32>
    %cst_81 = arith.constant dense<0.000000e+00> : vector<8x128xf32>
    %125 = tpu.matmul %117, %92, %cst_81 {dimension_numbers = #tpu.dot_dimension_numbers<[1], [0], [0], [1], [0, 0, 1, 1], [], []>} : vector<8x128xf32>, vector<128x128xf32>, vector<8x128xf32> -> vector<8x128xf32>
    %126 = arith.addf %124, %125 : vector<8x128xf32>
    %127 = math.tanh %126 : vector<8x128xf32>
    %128 = arith.index_cast %c2_i32_78 : i32 to index
    %c0_82 = arith.constant 0 : index
    %c0_83 = arith.constant 0 : index
    %129 = vector.load %arg10[%128, %c0_82, %c0_83] : memref<8x8x128xf32, #tpu.memory_space<vmem>>, vector<1x8x128xf32>
    %130 = vector.shape_cast %129 : vector<1x8x128xf32> to vector<8x128xf32>
    %131 = vector.shape_cast %127 : vector<8x128xf32> to vector<1x8x128xf32>
    tpu.vector_store %arg10[%128, %c0_82, %c0_83], %131 {strides = array<i32>} : memref<8x8x128xf32, #tpu.memory_space<vmem>>, vector<1x8x128xf32>,
    %c3_i32_84 = arith.constant 3 : i32
    %132 = arith.index_cast %c3_i32_84 : i32 to index
    %c0_85 = arith.constant 0 : index
    %c0_86 = arith.constant 0 : index
    %133 = vector.load %arg11[%132, %c0_85, %c0_86] : memref<8x8x128xf32, #tpu.memory_space<vmem>>, vector<1x8x128xf32>
    %134 = vector.shape_cast %133 : vector<1x8x128xf32> to vector<8x128xf32>
    %cst_87 = arith.constant dense<0.000000e+00> : vector<8x128xf32>
    %135 = tpu.matmul %127, %92, %cst_87 {dimension_numbers = #tpu.dot_dimension_numbers<[1], [0], [0], [1], [0, 0, 1, 1], [], []>} : vector<8x128xf32>, vector<128x128xf32>, vector<8x128xf32> -> vector<8x128xf32>
    %136 = arith.addf %134, %135 : vector<8x128xf32>
    %137 = math.tanh %136 : vector<8x128xf32>
    %138 = arith.index_cast %c3_i32_84 : i32 to index
    %c0_88 = arith.constant 0 : index
    %c0_89 = arith.constant 0 : index
    %139 = vector.load %arg10[%138, %c0_88, %c0_89] : memref<8x8x128xf32, #tpu.memory_space<vmem>>, vector<1x8x128xf32>
    %140 = vector.shape_cast %139 : vector<1x8x128xf32> to vector<8x128xf32>
    %141 = vector.shape_cast %137 : vector<8x128xf32> to vector<1x8x128xf32>
    tpu.vector_store %arg10[%138, %c0_88, %c0_89], %141 {strides = array<i32>} : memref<8x8x128xf32, #tpu.memory_space<vmem>>, vector<1x8x128xf32>,
    %c4_i32_90 = arith.constant 4 : i32
    %142 = arith.index_cast %c4_i32_90 : i32 to index
    %c0_91 = arith.constant 0 : index
    %c0_92 = arith.constant 0 : index
    %143 = vector.load %arg11[%142, %c0_91, %c0_92] : memref<8x8x128xf32, #tpu.memory_space<vmem>>, vector<1x8x128xf32>
    %144 = vector.shape_cast %143 : vector<1x8x128xf32> to vector<8x128xf32>
    %cst_93 = arith.constant dense<0.000000e+00> : vector<8x128xf32>
    %145 = tpu.matmul %137, %92, %cst_93 {dimension_numbers = #tpu.dot_dimension_numbers<[1], [0], [0], [1], [0, 0, 1, 1], [], []>} : vector<8x128xf32>, vector<128x128xf32>, vector<8x128xf32> -> vector<8x128xf32>
    %146 = arith.addf %144, %145 : vector<8x128xf32>
    %147 = math.tanh %146 : vector<8x128xf32>
    %148 = arith.index_cast %c4_i32_90 : i32 to index
    %c0_94 = arith.constant 0 : index
    %c0_95 = arith.constant 0 : index
    %149 = vector.load %arg10[%148, %c0_94, %c0_95] : memref<8x8x128xf32, #tpu.memory_space<vmem>>, vector<1x8x128xf32>
    %150 = vector.shape_cast %149 : vector<1x8x128xf32> to vector<8x128xf32>
    %151 = vector.shape_cast %147 : vector<8x128xf32> to vector<1x8x128xf32>
    tpu.vector_store %arg10[%148, %c0_94, %c0_95], %151 {strides = array<i32>} : memref<8x8x128xf32, #tpu.memory_space<vmem>>, vector<1x8x128xf32>,
    %c5_i32_96 = arith.constant 5 : i32
    %152 = arith.index_cast %c5_i32_96 : i32 to index
    %c0_97 = arith.constant 0 : index
    %c0_98 = arith.constant 0 : index
    %153 = vector.load %arg11[%152, %c0_97, %c0_98] : memref<8x8x128xf32, #tpu.memory_space<vmem>>, vector<1x8x128xf32>
    %154 = vector.shape_cast %153 : vector<1x8x128xf32> to vector<8x128xf32>
    %cst_99 = arith.constant dense<0.000000e+00> : vector<8x128xf32>
    %155 = tpu.matmul %147, %92, %cst_99 {dimension_numbers = #tpu.dot_dimension_numbers<[1], [0], [0], [1], [0, 0, 1, 1], [], []>} : vector<8x128xf32>, vector<128x128xf32>, vector<8x128xf32> -> vector<8x128xf32>
    %156 = arith.addf %154, %155 : vector<8x128xf32>
    %157 = math.tanh %156 : vector<8x128xf32>
    %158 = arith.index_cast %c5_i32_96 : i32 to index
    %c0_100 = arith.constant 0 : index
    %c0_101 = arith.constant 0 : index
    %159 = vector.load %arg10[%158, %c0_100, %c0_101] : memref<8x8x128xf32, #tpu.memory_space<vmem>>, vector<1x8x128xf32>
    %160 = vector.shape_cast %159 : vector<1x8x128xf32> to vector<8x128xf32>
    %161 = vector.shape_cast %157 : vector<8x128xf32> to vector<1x8x128xf32>
    tpu.vector_store %arg10[%158, %c0_100, %c0_101], %161 {strides = array<i32>} : memref<8x8x128xf32, #tpu.memory_space<vmem>>, vector<1x8x128xf32>,
    %c6_i32_102 = arith.constant 6 : i32
    %162 = arith.index_cast %c6_i32_102 : i32 to index
    %c0_103 = arith.constant 0 : index
    %c0_104 = arith.constant 0 : index
    %163 = vector.load %arg11[%162, %c0_103, %c0_104] : memref<8x8x128xf32, #tpu.memory_space<vmem>>, vector<1x8x128xf32>
    %164 = vector.shape_cast %163 : vector<1x8x128xf32> to vector<8x128xf32>
    %cst_105 = arith.constant dense<0.000000e+00> : vector<8x128xf32>
    %165 = tpu.matmul %157, %92, %cst_105 {dimension_numbers = #tpu.dot_dimension_numbers<[1], [0], [0], [1], [0, 0, 1, 1], [], []>} : vector<8x128xf32>, vector<128x128xf32>, vector<8x128xf32> -> vector<8x128xf32>
    %166 = arith.addf %164, %165 : vector<8x128xf32>
    %167 = math.tanh %166 : vector<8x128xf32>
    %168 = arith.index_cast %c6_i32_102 : i32 to index
    %c0_106 = arith.constant 0 : index
    %c0_107 = arith.constant 0 : index
    %169 = vector.load %arg10[%168, %c0_106, %c0_107] : memref<8x8x128xf32, #tpu.memory_space<vmem>>, vector<1x8x128xf32>
    %170 = vector.shape_cast %169 : vector<1x8x128xf32> to vector<8x128xf32>
    %171 = vector.shape_cast %167 : vector<8x128xf32> to vector<1x8x128xf32>
    tpu.vector_store %arg10[%168, %c0_106, %c0_107], %171 {strides = array<i32>} : memref<8x8x128xf32, #tpu.memory_space<vmem>>, vector<1x8x128xf32>,
    %c7_i32_108 = arith.constant 7 : i32
    %172 = arith.index_cast %c7_i32_108 : i32 to index
    %c0_109 = arith.constant 0 : index
    %c0_110 = arith.constant 0 : index
    %173 = vector.load %arg11[%172, %c0_109, %c0_110] : memref<8x8x128xf32, #tpu.memory_space<vmem>>, vector<1x8x128xf32>
    %174 = vector.shape_cast %173 : vector<1x8x128xf32> to vector<8x128xf32>
    %cst_111 = arith.constant dense<0.000000e+00> : vector<8x128xf32>
    %175 = tpu.matmul %167, %92, %cst_111 {dimension_numbers = #tpu.dot_dimension_numbers<[1], [0], [0], [1], [0, 0, 1, 1], [], []>} : vector<8x128xf32>, vector<128x128xf32>, vector<8x128xf32> -> vector<8x128xf32>
    %176 = arith.addf %174, %175 : vector<8x128xf32>
    %177 = math.tanh %176 : vector<8x128xf32>
    %178 = arith.index_cast %c7_i32_108 : i32 to index
    %c0_112 = arith.constant 0 : index
    %c0_113 = arith.constant 0 : index
    %179 = vector.load %arg10[%178, %c0_112, %c0_113] : memref<8x8x128xf32, #tpu.memory_space<vmem>>, vector<1x8x128xf32>
    %180 = vector.shape_cast %179 : vector<1x8x128xf32> to vector<8x128xf32>
    %181 = vector.shape_cast %177 : vector<8x128xf32> to vector<1x8x128xf32>
    tpu.vector_store %arg10[%178, %c0_112, %c0_113], %181 {strides = array<i32>} : memref<8x8x128xf32, #tpu.memory_space<vmem>>, vector<1x8x128xf32>,
    %c8_i32_114 = arith.constant 8 : i32
    %c0_115 = arith.constant 0 : index
    %c0_116 = arith.constant 0 : index
    %182 = vector.load %arg7[%c0_115, %c0_116] : memref<128x128xf32, #tpu.memory_space<vmem>>, vector<128x128xf32>
    %c0_117 = arith.constant 0 : index
    %c0_118 = arith.constant 0 : index
    %183 = vector.load %arg8[%c0_117, %c0_118] : memref<128x128xf32, #tpu.memory_space<vmem>>, vector<128x128xf32>
    %c0_119 = arith.constant 0 : index
    %c0_120 = arith.constant 0 : index
    %184 = vector.load %arg9[%c0_119, %c0_120] : memref<1x128xf32, #tpu.memory_space<vmem>>, vector<1x128xf32>
    %c0_121 = arith.constant 0 : index
    %c0_122 = arith.constant 0 : index
    %c0_123 = arith.constant 0 : index
    %185 = vector.load %arg10[%c0_121, %c0_122, %c0_123] : memref<8x8x128xf32, #tpu.memory_space<vmem>>, vector<8x8x128xf32>
    %186 = vector.shape_cast %185 : vector<8x8x128xf32> to vector<64x128xf32>
    %cst_124 = arith.constant dense<0.000000e+00> : vector<64x128xf32>
    %187 = tpu.matmul %186, %182, %cst_124 {dimension_numbers = #tpu.dot_dimension_numbers<[1], [0], [0], [1], [0, 0, 1, 1], [], []>} : vector<64x128xf32>, vector<128x128xf32>, vector<64x128xf32> -> vector<64x128xf32>
    %188 = vector.broadcast %184 : vector<1x128xf32> to vector<64x128xf32>
    %189 = arith.addf %187, %188 : vector<64x128xf32>
    %190 = vector.shape_cast %189 : vector<64x128xf32> to vector<8x8x128xf32>
    %c0_125 = arith.constant 0 : index
    %c0_126 = arith.constant 0 : index
    %c0_127 = arith.constant 0 : index
    %191 = vector.load %arg11[%c0_125, %c0_126, %c0_127] : memref<8x8x128xf32, #tpu.memory_space<vmem>>, vector<8x8x128xf32>
    tpu.vector_store %arg11[%c0_125, %c0_126, %c0_127], %190 {strides = array<i32>} : memref<8x8x128xf32, #tpu.memory_space<vmem>>, vector<8x8x128xf32>,
    %cst_128 = arith.constant 0.000000e+00 : f32
    %192 = vector.broadcast %cst_128 : f32 to vector<8x128xf32>
    %c0_i32_129 = arith.constant 0 : i32
    %193 = arith.index_cast %c0_i32_129 : i32 to index
    %c0_130 = arith.constant 0 : index
    %c0_131 = arith.constant 0 : index
    %194 = vector.load %arg11[%193, %c0_130, %c0_131] : memref<8x8x128xf32, #tpu.memory_space<vmem>>, vector<1x8x128xf32>
    %195 = vector.shape_cast %194 : vector<1x8x128xf32> to vector<8x128xf32>
    %cst_132 = arith.constant dense<0.000000e+00> : vector<8x128xf32>
    %196 = tpu.matmul %192, %183, %cst_132 {dimension_numbers = #tpu.dot_dimension_numbers<[1], [0], [0], [1], [0, 0, 1, 1], [], []>} : vector<8x128xf32>, vector<128x128xf32>, vector<8x128xf32> -> vector<8x128xf32>
    %197 = arith.addf %195, %196 : vector<8x128xf32>
    %198 = math.tanh %197 : vector<8x128xf32>
    %199 = arith.index_cast %c0_i32_129 : i32 to index
    %c0_133 = arith.constant 0 : index
    %c0_134 = arith.constant 0 : index
    %200 = vector.load %arg10[%199, %c0_133, %c0_134] : memref<8x8x128xf32, #tpu.memory_space<vmem>>, vector<1x8x128xf32>
    %201 = vector.shape_cast %200 : vector<1x8x128xf32> to vector<8x128xf32>
    %202 = vector.shape_cast %198 : vector<8x128xf32> to vector<1x8x128xf32>
    tpu.vector_store %arg10[%199, %c0_133, %c0_134], %202 {strides = array<i32>} : memref<8x8x128xf32, #tpu.memory_space<vmem>>, vector<1x8x128xf32>,
    %c1_i32_135 = arith.constant 1 : i32
    %203 = arith.index_cast %c1_i32_135 : i32 to index
    %c0_136 = arith.constant 0 : index
    %c0_137 = arith.constant 0 : index
    %204 = vector.load %arg11[%203, %c0_136, %c0_137] : memref<8x8x128xf32, #tpu.memory_space<vmem>>, vector<1x8x128xf32>
    %205 = vector.shape_cast %204 : vector<1x8x128xf32> to vector<8x128xf32>
    %cst_138 = arith.constant dense<0.000000e+00> : vector<8x128xf32>
    %206 = tpu.matmul %198, %183, %cst_138 {dimension_numbers = #tpu.dot_dimension_numbers<[1], [0], [0], [1], [0, 0, 1, 1], [], []>} : vector<8x128xf32>, vector<128x128xf32>, vector<8x128xf32> -> vector<8x128xf32>
    %207 = arith.addf %205, %206 : vector<8x128xf32>
    %208 = math.tanh %207 : vector<8x128xf32>
    %209 = arith.index_cast %c1_i32_135 : i32 to index
    %c0_139 = arith.constant 0 : index
    %c0_140 = arith.constant 0 : index
    %210 = vector.load %arg10[%209, %c0_139, %c0_140] : memref<8x8x128xf32, #tpu.memory_space<vmem>>, vector<1x8x128xf32>
    %211 = vector.shape_cast %210 : vector<1x8x128xf32> to vector<8x128xf32>
    %212 = vector.shape_cast %208 : vector<8x128xf32> to vector<1x8x128xf32>
    tpu.vector_store %arg10[%209, %c0_139, %c0_140], %212 {strides = array<i32>} : memref<8x8x128xf32, #tpu.memory_space<vmem>>, vector<1x8x128xf32>,
    %c2_i32_141 = arith.constant 2 : i32
    %213 = arith.index_cast %c2_i32_141 : i32 to index
    %c0_142 = arith.constant 0 : index
    %c0_143 = arith.constant 0 : index
    %214 = vector.load %arg11[%213, %c0_142, %c0_143] : memref<8x8x128xf32, #tpu.memory_space<vmem>>, vector<1x8x128xf32>
    %215 = vector.shape_cast %214 : vector<1x8x128xf32> to vector<8x128xf32>
    %cst_144 = arith.constant dense<0.000000e+00> : vector<8x128xf32>
    %216 = tpu.matmul %208, %183, %cst_144 {dimension_numbers = #tpu.dot_dimension_numbers<[1], [0], [0], [1], [0, 0, 1, 1], [], []>} : vector<8x128xf32>, vector<128x128xf32>, vector<8x128xf32> -> vector<8x128xf32>
    %217 = arith.addf %215, %216 : vector<8x128xf32>
    %218 = math.tanh %217 : vector<8x128xf32>
    %219 = arith.index_cast %c2_i32_141 : i32 to index
    %c0_145 = arith.constant 0 : index
    %c0_146 = arith.constant 0 : index
    %220 = vector.load %arg10[%219, %c0_145, %c0_146] : memref<8x8x128xf32, #tpu.memory_space<vmem>>, vector<1x8x128xf32>
    %221 = vector.shape_cast %220 : vector<1x8x128xf32> to vector<8x128xf32>
    %222 = vector.shape_cast %218 : vector<8x128xf32> to vector<1x8x128xf32>
    tpu.vector_store %arg10[%219, %c0_145, %c0_146], %222 {strides = array<i32>} : memref<8x8x128xf32, #tpu.memory_space<vmem>>, vector<1x8x128xf32>,
    %c3_i32_147 = arith.constant 3 : i32
    %223 = arith.index_cast %c3_i32_147 : i32 to index
    %c0_148 = arith.constant 0 : index
    %c0_149 = arith.constant 0 : index
    %224 = vector.load %arg11[%223, %c0_148, %c0_149] : memref<8x8x128xf32, #tpu.memory_space<vmem>>, vector<1x8x128xf32>
    %225 = vector.shape_cast %224 : vector<1x8x128xf32> to vector<8x128xf32>
    %cst_150 = arith.constant dense<0.000000e+00> : vector<8x128xf32>
    %226 = tpu.matmul %218, %183, %cst_150 {dimension_numbers = #tpu.dot_dimension_numbers<[1], [0], [0], [1], [0, 0, 1, 1], [], []>} : vector<8x128xf32>, vector<128x128xf32>, vector<8x128xf32> -> vector<8x128xf32>
    %227 = arith.addf %225, %226 : vector<8x128xf32>
    %228 = math.tanh %227 : vector<8x128xf32>
    %229 = arith.index_cast %c3_i32_147 : i32 to index
    %c0_151 = arith.constant 0 : index
    %c0_152 = arith.constant 0 : index
    %230 = vector.load %arg10[%229, %c0_151, %c0_152] : memref<8x8x128xf32, #tpu.memory_space<vmem>>, vector<1x8x128xf32>
    %231 = vector.shape_cast %230 : vector<1x8x128xf32> to vector<8x128xf32>
    %232 = vector.shape_cast %228 : vector<8x128xf32> to vector<1x8x128xf32>
    tpu.vector_store %arg10[%229, %c0_151, %c0_152], %232 {strides = array<i32>} : memref<8x8x128xf32, #tpu.memory_space<vmem>>, vector<1x8x128xf32>,
    %c4_i32_153 = arith.constant 4 : i32
    %233 = arith.index_cast %c4_i32_153 : i32 to index
    %c0_154 = arith.constant 0 : index
    %c0_155 = arith.constant 0 : index
    %234 = vector.load %arg11[%233, %c0_154, %c0_155] : memref<8x8x128xf32, #tpu.memory_space<vmem>>, vector<1x8x128xf32>
    %235 = vector.shape_cast %234 : vector<1x8x128xf32> to vector<8x128xf32>
    %cst_156 = arith.constant dense<0.000000e+00> : vector<8x128xf32>
    %236 = tpu.matmul %228, %183, %cst_156 {dimension_numbers = #tpu.dot_dimension_numbers<[1], [0], [0], [1], [0, 0, 1, 1], [], []>} : vector<8x128xf32>, vector<128x128xf32>, vector<8x128xf32> -> vector<8x128xf32>
    %237 = arith.addf %235, %236 : vector<8x128xf32>
    %238 = math.tanh %237 : vector<8x128xf32>
    %239 = arith.index_cast %c4_i32_153 : i32 to index
    %c0_157 = arith.constant 0 : index
    %c0_158 = arith.constant 0 : index
    %240 = vector.load %arg10[%239, %c0_157, %c0_158] : memref<8x8x128xf32, #tpu.memory_space<vmem>>, vector<1x8x128xf32>
    %241 = vector.shape_cast %240 : vector<1x8x128xf32> to vector<8x128xf32>
    %242 = vector.shape_cast %238 : vector<8x128xf32> to vector<1x8x128xf32>
    tpu.vector_store %arg10[%239, %c0_157, %c0_158], %242 {strides = array<i32>} : memref<8x8x128xf32, #tpu.memory_space<vmem>>, vector<1x8x128xf32>,
    %c5_i32_159 = arith.constant 5 : i32
    %243 = arith.index_cast %c5_i32_159 : i32 to index
    %c0_160 = arith.constant 0 : index
    %c0_161 = arith.constant 0 : index
    %244 = vector.load %arg11[%243, %c0_160, %c0_161] : memref<8x8x128xf32, #tpu.memory_space<vmem>>, vector<1x8x128xf32>
    %245 = vector.shape_cast %244 : vector<1x8x128xf32> to vector<8x128xf32>
    %cst_162 = arith.constant dense<0.000000e+00> : vector<8x128xf32>
    %246 = tpu.matmul %238, %183, %cst_162 {dimension_numbers = #tpu.dot_dimension_numbers<[1], [0], [0], [1], [0, 0, 1, 1], [], []>} : vector<8x128xf32>, vector<128x128xf32>, vector<8x128xf32> -> vector<8x128xf32>
    %247 = arith.addf %245, %246 : vector<8x128xf32>
    %248 = math.tanh %247 : vector<8x128xf32>
    %249 = arith.index_cast %c5_i32_159 : i32 to index
    %c0_163 = arith.constant 0 : index
    %c0_164 = arith.constant 0 : index
    %250 = vector.load %arg10[%249, %c0_163, %c0_164] : memref<8x8x128xf32, #tpu.memory_space<vmem>>, vector<1x8x128xf32>
    %251 = vector.shape_cast %250 : vector<1x8x128xf32> to vector<8x128xf32>
    %252 = vector.shape_cast %248 : vector<8x128xf32> to vector<1x8x128xf32>
    tpu.vector_store %arg10[%249, %c0_163, %c0_164], %252 {strides = array<i32>} : memref<8x8x128xf32, #tpu.memory_space<vmem>>, vector<1x8x128xf32>,
    %c6_i32_165 = arith.constant 6 : i32
    %253 = arith.index_cast %c6_i32_165 : i32 to index
    %c0_166 = arith.constant 0 : index
    %c0_167 = arith.constant 0 : index
    %254 = vector.load %arg11[%253, %c0_166, %c0_167] : memref<8x8x128xf32, #tpu.memory_space<vmem>>, vector<1x8x128xf32>
    %255 = vector.shape_cast %254 : vector<1x8x128xf32> to vector<8x128xf32>
    %cst_168 = arith.constant dense<0.000000e+00> : vector<8x128xf32>
    %256 = tpu.matmul %248, %183, %cst_168 {dimension_numbers = #tpu.dot_dimension_numbers<[1], [0], [0], [1], [0, 0, 1, 1], [], []>} : vector<8x128xf32>, vector<128x128xf32>, vector<8x128xf32> -> vector<8x128xf32>
    %257 = arith.addf %255, %256 : vector<8x128xf32>
    %258 = math.tanh %257 : vector<8x128xf32>
    %259 = arith.index_cast %c6_i32_165 : i32 to index
    %c0_169 = arith.constant 0 : index
    %c0_170 = arith.constant 0 : index
    %260 = vector.load %arg10[%259, %c0_169, %c0_170] : memref<8x8x128xf32, #tpu.memory_space<vmem>>, vector<1x8x128xf32>
    %261 = vector.shape_cast %260 : vector<1x8x128xf32> to vector<8x128xf32>
    %262 = vector.shape_cast %258 : vector<8x128xf32> to vector<1x8x128xf32>
    tpu.vector_store %arg10[%259, %c0_169, %c0_170], %262 {strides = array<i32>} : memref<8x8x128xf32, #tpu.memory_space<vmem>>, vector<1x8x128xf32>,
    %c7_i32_171 = arith.constant 7 : i32
    %263 = arith.index_cast %c7_i32_171 : i32 to index
    %c0_172 = arith.constant 0 : index
    %c0_173 = arith.constant 0 : index
    %264 = vector.load %arg11[%263, %c0_172, %c0_173] : memref<8x8x128xf32, #tpu.memory_space<vmem>>, vector<1x8x128xf32>
    %265 = vector.shape_cast %264 : vector<1x8x128xf32> to vector<8x128xf32>
    %cst_174 = arith.constant dense<0.000000e+00> : vector<8x128xf32>
    %266 = tpu.matmul %258, %183, %cst_174 {dimension_numbers = #tpu.dot_dimension_numbers<[1], [0], [0], [1], [0, 0, 1, 1], [], []>} : vector<8x128xf32>, vector<128x128xf32>, vector<8x128xf32> -> vector<8x128xf32>
    %267 = arith.addf %265, %266 : vector<8x128xf32>
    %268 = math.tanh %267 : vector<8x128xf32>
    %269 = arith.index_cast %c7_i32_171 : i32 to index
    %c0_175 = arith.constant 0 : index
    %c0_176 = arith.constant 0 : index
    %270 = vector.load %arg10[%269, %c0_175, %c0_176] : memref<8x8x128xf32, #tpu.memory_space<vmem>>, vector<1x8x128xf32>
    %271 = vector.shape_cast %270 : vector<1x8x128xf32> to vector<8x128xf32>
    %272 = vector.shape_cast %268 : vector<8x128xf32> to vector<1x8x128xf32>
    tpu.vector_store %arg10[%269, %c0_175, %c0_176], %272 {strides = array<i32>} : memref<8x8x128xf32, #tpu.memory_space<vmem>>, vector<1x8x128xf32>,
    %c8_i32_177 = arith.constant 8 : i32
    return
  }
}

</mosaic_0001>

<llo_original>
// kernel: tpu_custom_call.1
$region0: #{tpu_custom_call.1}
  #allocation0 [shape = 'u32[]', space=smem, size = 0x4, offset = 0x4, fixed_abs, tag = 'smem constant byte address 0x4 - core index']
  #allocation1 [shape = 'u32[144,128]{1,0:T(1,128)}', space=vmem, size = 0x12000, scoped, tag = 'internal scratch']
  #allocation2 [shape = 'f32[8,8,128]{2,1,0:T(8,128)}', space=vmem, size = 0x8000, scoped, tag = 'scratch operand']
  %s0 = inlined_call_operand.hbm [shape: f32[8,8,128], index: 0, kind: input, shape index: {}]
  %s1 = inlined_call_operand.hbm [shape: f32[128,128], index: 1, kind: input, shape index: {}]
  %s2 = inlined_call_operand.hbm [shape: f32[128,128], index: 2, kind: input, shape index: {}]
  %s3 = inlined_call_operand.vmem [shape: f32[1,128], index: 3, kind: input, shape index: {}]
  %s4 = inlined_call_operand.hbm [shape: f32[128,128], index: 4, kind: input, shape index: {}]
  %s5 = inlined_call_operand.hbm [shape: f32[128,128], index: 5, kind: input, shape index: {}]
  %s6 = inlined_call_operand.vmem [shape: f32[1,128], index: 6, kind: input, shape index: {}]
  %s7 = inlined_call_operand.hbm [shape: f32[128,128], index: 7, kind: input, shape index: {}]
  %s8 = inlined_call_operand.hbm [shape: f32[128,128], index: 8, kind: input, shape index: {}]
  %s9 = inlined_call_operand.vmem [shape: f32[1,128], index: 9, kind: input, shape index: {}]
  %s10 = inlined_call_operand.hbm [shape: f32[8,8,128], index: 10, kind: output, shape index: {}]
  %s11 = sld [smem:[#allocation0]]
  $region78: #{tpu_custom_call.1} parent=0
    _
  %s13 = ssub.s32 1, %s11
  %s14 = scalar_select 0, %s13, %s11
  $region1: #{tpu_custom_call.1} parent=0
    #allocation3 [shape = 'u8[32768]{0}', space=vmem, size = 0x8000, scoped, tag = 'input window, operand 0, single buffered']
    #allocation4 [shape = 's32[1]{0}', space=sflag, size = 0x4, scoped, tag = 'scoped memory for tpu_custom_call.1']
    #allocation5 [shape = 's32[1]{0}', space=sflag, size = 0x4, scoped, tag = 'scoped memory for tpu_custom_call.1']
    #allocation6 [shape = 'u8[65536]{0}', space=vmem, size = 0x10000, scoped, tag = 'input window, operand 1, single buffered']
    #allocation7 [shape = 's32[1]{0}', space=sflag, size = 0x4, scoped, tag = 'scoped memory for tpu_custom_call.1']
    #allocation8 [shape = 'u8[65536]{0}', space=vmem, size = 0x10000, scoped, tag = 'input window, operand 2, single buffered']
    #allocation9 [shape = 'u8[65536]{0}', space=vmem, size = 0x10000, scoped, tag = 'input window, operand 4, single buffered']
    #allocation10 [shape = 's32[1]{0}', space=sflag, size = 0x4, scoped, tag = 'scoped memory for tpu_custom_call.1']
    #allocation11 [shape = 'u8[65536]{0}', space=vmem, size = 0x10000, scoped, tag = 'input window, operand 5, single buffered']
    #allocation12 [shape = 'u8[65536]{0}', space=vmem, size = 0x10000, scoped, tag = 'input window, operand 7, single buffered']
    #allocation13 [shape = 's32[1]{0}', space=sflag, size = 0x4, scoped, tag = 'scoped memory for tpu_custom_call.1']
    #allocation14 [shape = 'u8[65536]{0}', space=vmem, size = 0x10000, scoped, tag = 'input window, operand 8, single buffered']
    #allocation15 [shape = 'u8[32768]{0}', space=vmem, size = 0x8000, scoped, tag = 'output window, operand 0, single buffered']
    %15 = vsyncpa [#allocation4], 0
    %16 = vsyncpa [#allocation7], 0
    %17 = vsyncpa [#allocation10], 0
    %18 = vsyncpa [#allocation13], 0
    %19 = vsyncpa [#allocation5], 0
    // Predicated region
    $region2: #{tpu_custom_call.1} parent=1 // pred_check
      _
    $region3: #{tpu_custom_call.1} parent=1 // pred_check_branch
      %21 = sbr.rel (0) target = $region5
    $region4: #{tpu_custom_call.1} parent=1 // pred_region
      %s23 = ssub.s32 1024, 1024
      %24 = vsyncadd [#allocation4], %s23
      %s25 = sshll.u32 [#allocation3], 4
      %s26 = int_to_ptr.vmem [resolvable:$true] %s25
      %31 = dma.hbm_to_vmem [thread:$0]  %s0, 1024, %s26, [#allocation4], 128, 128, 8
    $region5: #{tpu_custom_call.1} parent=1 // pred_fallthru
      _
    // Predicated region
    $region6: #{tpu_custom_call.1} parent=1 // pred_check
      _
    $region7: #{tpu_custom_call.1} parent=1 // pred_check_branch
      %33 = sbr.rel (0) target = $region9
    $region8: #{tpu_custom_call.1} parent=1 // pred_region
      %s35 = ssub.s32 2048, 2048
      %36 = vsyncadd [#allocation7], %s35
      %s37 = sshll.u32 [#allocation6], 4
      %s38 = int_to_ptr.vmem [resolvable:$true] %s37
      %43 = dma.hbm_to_vmem [thread:$0]  %s1, 2048, %s38, [#allocation7], 128, 128, 8
    $region9: #{tpu_custom_call.1} parent=1 // pred_fallthru
      _
    // Predicated region
    $region10: #{tpu_custom_call.1} parent=1 // pred_check
      _
    $region11: #{tpu_custom_call.1} parent=1 // pred_check_branch
      %45 = sbr.rel (0) target = $region13
    $region12: #{tpu_custom_call.1} parent=1 // pred_region
      %s47 = ssub.s32 2048, 2048
      %48 = vsyncadd [#allocation7], %s47
      %s49 = sshll.u32 [#allocation8], 4
      %s50 = int_to_ptr.vmem [resolvable:$true] %s49
      %55 = dma.hbm_to_vmem [thread:$0]  %s2, 2048, %s50, [#allocation7], 128, 128, 8
    $region13: #{tpu_custom_call.1} parent=1 // pred_fallthru
      _
    // Predicated region
    $region14: #{tpu_custom_call.1} parent=1 // pred_check
      _
    $region15: #{tpu_custom_call.1} parent=1 // pred_check_branch
      %57 = sbr.rel (0) target = $region17
    $region16: #{tpu_custom_call.1} parent=1 // pred_region
      _
    $region17: #{tpu_custom_call.1} parent=1 // pred_fallthru
      _
    // Predicated region
    $region18: #{tpu_custom_call.1} parent=1 // pred_check
      _
    $region19: #{tpu_custom_call.1} parent=1 // pred_check_branch
      %59 = sbr.rel (0) target = $region21
    $region20: #{tpu_custom_call.1} parent=1 // pred_region
      %s61 = ssub.s32 2048, 2048
      %62 = vsyncadd [#allocation10], %s61
      %s63 = sshll.u32 [#allocation9], 4
      %s64 = int_to_ptr.vmem [resolvable:$true] %s63
      %69 = dma.hbm_to_vmem [thread:$0]  %s4, 2048, %s64, [#allocation10], 128, 128, 8
    $region21: #{tpu_custom_call.1} parent=1 // pred_fallthru
      _
    // Predicated region
    $region22: #{tpu_custom_call.1} parent=1 // pred_check
      _
    $region23: #{tpu_custom_call.1} parent=1 // pred_check_branch
      %71 = sbr.rel (0) target = $region25
    $region24: #{tpu_custom_call.1} parent=1 // pred_region
      %s73 = ssub.s32 2048, 2048
      %74 = vsyncadd [#allocation10], %s73
      %s75 = sshll.u32 [#allocation11], 4
      %s76 = int_to_ptr.vmem [resolvable:$true] %s75
      %81 = dma.hbm_to_vmem [thread:$0]  %s5, 2048, %s76, [#allocation10], 128, 128, 8
    $region25: #{tpu_custom_call.1} parent=1 // pred_fallthru
      _
    // Predicated region
    $region26: #{tpu_custom_call.1} parent=1 // pred_check
      _
    $region27: #{tpu_custom_call.1} parent=1 // pred_check_branch
      %83 = sbr.rel (0) target = $region29
    $region28: #{tpu_custom_call.1} parent=1 // pred_region
      _
    $region29: #{tpu_custom_call.1} parent=1 // pred_fallthru
      _
    // Predicated region
    $region30: #{tpu_custom_call.1} parent=1 // pred_check
      _
    $region31: #{tpu_custom_call.1} parent=1 // pred_check_branch
      %85 = sbr.rel (0) target = $region33
    $region32: #{tpu_custom_call.1} parent=1 // pred_region
      %s87 = ssub.s32 2048, 2048
      %88 = vsyncadd [#allocation13], %s87
      %s89 = sshll.u32 [#allocation12], 4
      %s90 = int_to_ptr.vmem [resolvable:$true] %s89
      %95 = dma.hbm_to_vmem [thread:$0]  %s7, 2048, %s90, [#allocation13], 128, 128, 8
    $region33: #{tpu_custom_call.1} parent=1 // pred_fallthru
      _
    // Predicated region
    $region34: #{tpu_custom_call.1} parent=1 // pred_check
      _
    $region35: #{tpu_custom_call.1} parent=1 // pred_check_branch
      %97 = sbr.rel (0) target = $region37
    $region36: #{tpu_custom_call.1} parent=1 // pred_region
      %s99 = ssub.s32 2048, 2048
      %100 = vsyncadd [#allocation13], %s99
      %s101 = sshll.u32 [#allocation14], 4
      %s102 = int_to_ptr.vmem [resolvable:$true] %s101
      %107 = dma.hbm_to_vmem [thread:$0]  %s8, 2048, %s102, [#allocation13], 128, 128, 8
    $region37: #{tpu_custom_call.1} parent=1 // pred_fallthru
      _
    // Predicated region
    $region38: #{tpu_custom_call.1} parent=1 // pred_check
      _
    $region39: #{tpu_custom_call.1} parent=1 // pred_check_branch
      %109 = sbr.rel (0) target = $region41
    $region40: #{tpu_custom_call.1} parent=1 // pred_region
      _
    $region41: #{tpu_custom_call.1} parent=1 // pred_fallthru
      _
    // Predicated region
    $region42: #{tpu_custom_call.1} parent=1 // pred_check
      _
    $region43: #{tpu_custom_call.1} parent=1 // pred_check_branch
      %111 = sbr.rel (0) target = $region45
    $region44: #{tpu_custom_call.1} parent=1 // pred_region
      %112 = dma.done [#allocation4], 1024
    $region45: #{tpu_custom_call.1} parent=1 // pred_fallthru
      _
    // Predicated region
    $region46: #{tpu_custom_call.1} parent=1 // pred_check
      _
    $region47: #{tpu_custom_call.1} parent=1 // pred_check_branch
      %114 = sbr.rel (0) target = $region49
    $region48: #{tpu_custom_call.1} parent=1 // pred_region
      %115 = dma.done [#allocation7], 2048
    $region49: #{tpu_custom_call.1} parent=1 // pred_fallthru
      _
    // Predicated region
    $region50: #{tpu_custom_call.1} parent=1 // pred_check
      _
    $region51: #{tpu_custom_call.1} parent=1 // pred_check_branch
      %117 = sbr.rel (0) target = $region53
    $region52: #{tpu_custom_call.1} parent=1 // pred_region
      %118 = dma.done [#allocation7], 2048
    $region53: #{tpu_custom_call.1} parent=1 // pred_fallthru
      _
    // Predicated region
    $region54: #{tpu_custom_call.1} parent=1 // pred_check
      _
    $region55: #{tpu_custom_call.1} parent=1 // pred_check_branch
      %120 = sbr.rel (0) target = $region57
    $region56: #{tpu_custom_call.1} parent=1 // pred_region
      %121 = dma.done [#allocation10], 2048
    $region57: #{tpu_custom_call.1} parent=1 // pred_fallthru
      _
    // Predicated region
    $region58: #{tpu_custom_call.1} parent=1 // pred_check
      _
    $region59: #{tpu_custom_call.1} parent=1 // pred_check_branch
      %123 = sbr.rel (0) target = $region61
    $region60: #{tpu_custom_call.1} parent=1 // pred_region
      %124 = dma.done [#allocation10], 2048
    $region61: #{tpu_custom_call.1} parent=1 // pred_fallthru
      _
    // Predicated region
    $region62: #{tpu_custom_call.1} parent=1 // pred_check
      _
    $region63: #{tpu_custom_call.1} parent=1 // pred_check_branch
      %126 = sbr.rel (0) target = $region65
    $region64: #{tpu_custom_call.1} parent=1 // pred_region
      %127 = dma.done [#allocation13], 2048
    $region65: #{tpu_custom_call.1} parent=1 // pred_fallthru
      _
    // Predicated region
    $region66: #{tpu_custom_call.1} parent=1 // pred_check
      _
    $region67: #{tpu_custom_call.1} parent=1 // pred_check_branch
      %129 = sbr.rel (0) target = $region69
    $region68: #{tpu_custom_call.1} parent=1 // pred_region
      %130 = dma.done [#allocation13], 2048
    $region69: #{tpu_custom_call.1} parent=1 // pred_fallthru
      _
    %v131 = vld [vmem:[#allocation6] sm:$0xff]
    %v132 = vld [vmem:[#allocation6 + $0x8] sm:$0xff]
    %v133 = vld [vmem:[#allocation6 + $0x10] sm:$0xff]
    %v134 = vld [vmem:[#allocation6 + $0x18] sm:$0xff]
    %v135 = vld [vmem:[#allocation6 + $0x20] sm:$0xff]
    %v136 = vld [vmem:[#allocation6 + $0x28] sm:$0xff]
    %v137 = vld [vmem:[#allocation6 + $0x30] sm:$0xff]
    %v138 = vld [vmem:[#allocation6 + $0x38] sm:$0xff]
    %v139 = vld [vmem:[#allocation6 + $0x40] sm:$0xff]
    %v140 = vld [vmem:[#allocation6 + $0x48] sm:$0xff]
    %v141 = vld [vmem:[#allocation6 + $0x50] sm:$0xff]
    %v142 = vld [vmem:[#allocation6 + $0x58] sm:$0xff]
    %v143 = vld [vmem:[#allocation6 + $0x60] sm:$0xff]
    %v144 = vld [vmem:[#allocation6 + $0x68] sm:$0xff]
    %v145 = vld [vmem:[#allocation6 + $0x70] sm:$0xff]
    %v146 = vld [vmem:[#allocation6 + $0x78] sm:$0xff]
    %v147 = vld [vmem:[#allocation8] sm:$0xff]
    %v148 = vld [vmem:[#allocation8 + $0x8] sm:$0xff]
    %v149 = vld [vmem:[#allocation8 + $0x10] sm:$0xff]
    %v150 = vld [vmem:[#allocation8 + $0x18] sm:$0xff]
    %v151 = vld [vmem:[#allocation8 + $0x20] sm:$0xff]
    %v152 = vld [vmem:[#allocation8 + $0x28] sm:$0xff]
    %v153 = vld [vmem:[#allocation8 + $0x30] sm:$0xff]
    %v154 = vld [vmem:[#allocation8 + $0x38] sm:$0xff]
    %v155 = vld [vmem:[#allocation8 + $0x40] sm:$0xff]
    %v156 = vld [vmem:[#allocation8 + $0x48] sm:$0xff]
    %v157 = vld [vmem:[#allocation8 + $0x50] sm:$0xff]
    %v158 = vld [vmem:[#allocation8 + $0x58] sm:$0xff]
    %v159 = vld [vmem:[#allocation8 + $0x60] sm:$0xff]
    %v160 = vld [vmem:[#allocation8 + $0x68] sm:$0xff]
    %v161 = vld [vmem:[#allocation8 + $0x70] sm:$0xff]
    %v162 = vld [vmem:[#allocation8 + $0x78] sm:$0xff]
    %v163 = vld [vmem:[%s3] sm:$0x1]
    %v164 = vld [vmem:[#allocation3] sm:$0xff]
    %v165 = vld [vmem:[#allocation3 + $0x8] sm:$0xff]
    %v166 = vld [vmem:[#allocation3 + $0x10] sm:$0xff]
    %v167 = vld [vmem:[#allocation3 + $0x18] sm:$0xff]
    %v168 = vld [vmem:[#allocation3 + $0x20] sm:$0xff]
    %v169 = vld [vmem:[#allocation3 + $0x28] sm:$0xff]
    %v170 = vld [vmem:[#allocation3 + $0x30] sm:$0xff]
    %v171 = vld [vmem:[#allocation3 + $0x38] sm:$0xff]
    %v173 = vlaneseq
    %v174 = vshrl.u32 %v173, 7
    %v175 = vsub.s32 0, %v174
    %v176 = vrot.slane %v163, %v175
    %178 = vmatprep.subr.mxu0 0.0
    %179 = vmatpush1.msra.mxu0 %v146
    %180 = vmatprep.subr.mxu0 0.0
    %181 = vmatpush1.msra.mxu0 %v145
    %182 = vmatprep.subr.mxu0 0.0
    %183 = vmatpush1.msra.mxu0 %v144
    %184 = vmatprep.subr.mxu0 0.0
    %185 = vmatpush1.msra.mxu0 %v143
    %186 = vmatprep.subr.mxu0 0.0
    %187 = vmatpush1.msra.mxu0 %v142
    %188 = vmatprep.subr.mxu0 0.0
    %189 = vmatpush1.msra.mxu0 %v141
    %190 = vmatprep.subr.mxu0 0.0
    %191 = vmatpush1.msra.mxu0 %v140
    %192 = vmatprep.subr.mxu0 0.0
    %193 = vmatpush1.msra.mxu0 %v139
    %194 = vmatprep.subr.mxu0 0.0
    %195 = vmatpush1.msra.mxu0 %v138
    %196 = vmatprep.subr.mxu0 0.0
    %197 = vmatpush1.msra.mxu0 %v137
    %198 = vmatprep.subr.mxu0 0.0
    %199 = vmatpush1.msra.mxu0 %v136
    %200 = vmatprep.subr.mxu0 0.0
    %201 = vmatpush1.msra.mxu0 %v135
    %202 = vmatprep.subr.mxu0 0.0
    %203 = vmatpush1.msra.mxu0 %v134
    %204 = vmatprep.subr.mxu0 0.0
    %205 = vmatpush1.msra.mxu0 %v133
    %206 = vmatprep.subr.mxu0 0.0
    %207 = vmatpush1.msra.mxu0 %v132
    %208 = vmatprep.subr.mxu0 0.0
    %209 = vmatpush1.msra.mxu0 %v131
    %210 = vmatprep.subr.mxu0 0.0
    %211 = vmatpush2.msra.mxu0 0.0
    %212 = vmatprep.subr.mxu0 0.0
    %213 = vmatpush2.msra.mxu0 0.0
    %214 = vmatprep.subr.mxu0 0.0
    %215 = vmatpush2.msra.mxu0 0.0
    %216 = vmatprep.subr.mxu0 0.0
    %217 = vmatpush2.msra.mxu0 0.0
    %218 = vmatprep.subr.mxu0 0.0
    %219 = vmatpush2.msra.mxu0 0.0
    %220 = vmatprep.subr.mxu0 0.0
    %221 = vmatpush2.msra.mxu0 0.0
    %222 = vmatprep.subr.mxu0 0.0
    %223 = vmatpush2.msra.mxu0 0.0
    %224 = vmatprep.subr.mxu0 0.0
    %225 = vmatpush2.msra.mxu0 0.0
    %226 = vmatprep.subr.mxu0 0.0
    %227 = vmatpush2.msra.mxu0 0.0
    %228 = vmatprep.subr.mxu0 0.0
    %229 = vmatpush2.msra.mxu0 0.0
    %230 = vmatprep.subr.mxu0 0.0
    %231 = vmatpush2.msra.mxu0 0.0
    %232 = vmatprep.subr.mxu0 0.0
    %233 = vmatpush2.msra.mxu0 0.0
    %234 = vmatprep.subr.mxu0 0.0
    %235 = vmatpush2.msra.mxu0 0.0
    %236 = vmatprep.subr.mxu0 0.0
    %237 = vmatpush2.msra.mxu0 0.0
    %238 = vmatprep.subr.mxu0 0.0
    %239 = vmatpush2.msra.mxu0 0.0
    %240 = vmatprep.subr.mxu0 0.0
    %241 = vmatpush2.msra.mxu0 0.0
    %242 = vmatprep.mubr.f32.mxu0 0.0
    %243 = vmatmul.mubr.f32.gmra.mxu0 %v164
    %v244 = vpop.f32.mrf.mxu0
    %v245 = vadd.f32 %v176, %v244
    %v246 = vpop.f32.mrf.mxu0
    %247 = vmatprep.mubr.f32.mxu0 0.0
    %248 = vmatmul.mubr.f32.gmra.mxu0 %v165
    %v249 = vpop.f32.mrf.mxu0
    %v250 = vadd.f32 %v176, %v249
    %v251 = vpop.f32.mrf.mxu0
    %252 = vmatprep.mubr.f32.mxu0 0.0
    %253 = vmatmul.mubr.f32.gmra.mxu0 %v166
    %v254 = vpop.f32.mrf.mxu0
    %v255 = vadd.f32 %v176, %v254
    %v256 = vpop.f32.mrf.mxu0
    %257 = vmatprep.mubr.f32.mxu0 0.0
    %258 = vmatmul.mubr.f32.gmra.mxu0 %v167
    %v259 = vpop.f32.mrf.mxu0
    %v260 = vadd.f32 %v176, %v259
    %v261 = vpop.f32.mrf.mxu0
    %262 = vmatprep.mubr.f32.mxu0 0.0
    %263 = vmatmul.mubr.f32.gmra.mxu0 %v168
    %v264 = vpop.f32.mrf.mxu0
    %v265 = vadd.f32 %v176, %v264
    %v266 = vpop.f32.mrf.mxu0
    %267 = vmatprep.mubr.f32.mxu0 0.0
    %268 = vmatmul.mubr.f32.gmra.mxu0 %v169
    %v269 = vpop.f32.mrf.mxu0
    %v270 = vadd.f32 %v176, %v269
    %v271 = vpop.f32.mrf.mxu0
    %272 = vmatprep.mubr.f32.mxu0 0.0
    %273 = vmatmul.mubr.f32.gmra.mxu0 %v170
    %v274 = vpop.f32.mrf.mxu0
    %v275 = vadd.f32 %v176, %v274
    %v276 = vpop.f32.mrf.mxu0
    %277 = vmatprep.mubr.f32.mxu0 0.0
    %278 = vmatmul.mubr.f32.gmra.mxu0 %v171
    %v279 = vpop.f32.mrf.mxu0
    %v280 = vadd.f32 %v176, %v279
    %v281 = vpop.f32.mrf.mxu0
    %282 = vdwg.mxu0
    %283 = vst [vmem:[#allocation2] sm:$0xff] %v245
    %284 = vst [vmem:[#allocation2 + $0x8] sm:$0xff] %v250
    %285 = vst [vmem:[#allocation2 + $0x10] sm:$0xff] %v255
    %286 = vst [vmem:[#allocation2 + $0x18] sm:$0xff] %v260
    %287 = vst [vmem:[#allocation2 + $0x20] sm:$0xff] %v265
    %288 = vst [vmem:[#allocation2 + $0x28] sm:$0xff] %v270
    %289 = vst [vmem:[#allocation2 + $0x30] sm:$0xff] %v275
    %290 = vst [vmem:[#allocation2 + $0x38] sm:$0xff] %v280
    %v291 = vld [vmem:[#allocation2] sm:$0xff]
    %292 = vmatprep.subr.mxu0 0.0
    %293 = vmatpush1.msra.mxu0 %v162
    %294 = vmatprep.subr.mxu0 0.0
    %295 = vmatpush1.msra.mxu0 %v161
    %296 = vmatprep.subr.mxu0 0.0
    %297 = vmatpush1.msra.mxu0 %v160
    %298 = vmatprep.subr.mxu0 0.0
    %299 = vmatpush1.msra.mxu0 %v159
    %300 = vmatprep.subr.mxu0 0.0
    %301 = vmatpush1.msra.mxu0 %v158
    %302 = vmatprep.subr.mxu0 0.0
    %303 = vmatpush1.msra.mxu0 %v157
    %304 = vmatprep.subr.mxu0 0.0
    %305 = vmatpush1.msra.mxu0 %v156
    %306 = vmatprep.subr.mxu0 0.0
    %307 = vmatpush1.msra.mxu0 %v155
    %308 = vmatprep.subr.mxu0 0.0
    %309 = vmatpush1.msra.mxu0 %v154
    %310 = vmatprep.subr.mxu0 0.0
    %311 = vmatpush1.msra.mxu0 %v153
    %312 = vmatprep.subr.mxu0 0.0
    %313 = vmatpush1.msra.mxu0 %v152
    %314 = vmatprep.subr.mxu0 0.0
    %315 = vmatpush1.msra.mxu0 %v151
    %316 = vmatprep.subr.mxu0 0.0
    %317 = vmatpush1.msra.mxu0 %v150
    %318 = vmatprep.subr.mxu0 0.0
    %319 = vmatpush1.msra.mxu0 %v149
    %320 = vmatprep.subr.mxu0 0.0
    %321 = vmatpush1.msra.mxu0 %v148
    %322 = vmatprep.subr.mxu0 0.0
    %323 = vmatpush1.msra.mxu0 %v147
    %324 = vmatprep.subr.mxu0 0.0
    %325 = vmatpush2.msra.mxu0 0.0
    %326 = vmatprep.subr.mxu0 0.0
    %327 = vmatpush2.msra.mxu0 0.0
    %328 = vmatprep.subr.mxu0 0.0
    %329 = vmatpush2.msra.mxu0 0.0
    %330 = vmatprep.subr.mxu0 0.0
    %331 = vmatpush2.msra.mxu0 0.0
    %332 = vmatprep.subr.mxu0 0.0
    %333 = vmatpush2.msra.mxu0 0.0
    %334 = vmatprep.subr.mxu0 0.0
    %335 = vmatpush2.msra.mxu0 0.0
    %336 = vmatprep.subr.mxu0 0.0
    %337 = vmatpush2.msra.mxu0 0.0
    %338 = vmatprep.subr.mxu0 0.0
    %339 = vmatpush2.msra.mxu0 0.0
    %340 = vmatprep.subr.mxu0 0.0
    %341 = vmatpush2.msra.mxu0 0.0
    %342 = vmatprep.subr.mxu0 0.0
    %343 = vmatpush2.msra.mxu0 0.0
    %344 = vmatprep.subr.mxu0 0.0
    %345 = vmatpush2.msra.mxu0 0.0
    %346 = vmatprep.subr.mxu0 0.0
    %347 = vmatpush2.msra.mxu0 0.0
    %348 = vmatprep.subr.mxu0 0.0
    %349 = vmatpush2.msra.mxu0 0.0
    %350 = vmatprep.subr.mxu0 0.0
    %351 = vmatpush2.msra.mxu0 0.0
    %352 = vmatprep.subr.mxu0 0.0
    %353 = vmatpush2.msra.mxu0 0.0
    %354 = vmatprep.subr.mxu0 0.0
    %355 = vmatpush2.msra.mxu0 0.0
    %356 = vmatprep.mubr.f32.mxu0 0.0
    %357 = vmatmul.mubr.f32.gmra.mxu0 0.0
    %v358 = vpop.f32.mrf.mxu0
    %v359 = vadd.f32 0.0, %v358
    %v360 = vpop.f32.mrf.mxu0
    %361 = vdwg.mxu0
    %v362 = vadd.f32 %v291, %v359
    %v363 = vtanh.pop %v362
    %364 = vst [vmem:[#allocation15] sm:$0xff] %v363
    %s365 = scalar_lea.vmem [#allocation2], 8
    %v366 = vld [vmem:[%s365] sm:$0xff]
    %367 = vmatprep.subr.mxu0 0.0
    %368 = vmatpush1.msra.mxu0 %v162
    %369 = vmatprep.subr.mxu0 0.0
    %370 = vmatpush1.msra.mxu0 %v161
    %371 = vmatprep.subr.mxu0 0.0
    %372 = vmatpush1.msra.mxu0 %v160
    %373 = vmatprep.subr.mxu0 0.0
    %374 = vmatpush1.msra.mxu0 %v159
    %375 = vmatprep.subr.mxu0 0.0
    %376 = vmatpush1.msra.mxu0 %v158
    %377 = vmatprep.subr.mxu0 0.0
    %378 = vmatpush1.msra.mxu0 %v157
    %379 = vmatprep.subr.mxu0 0.0
    %380 = vmatpush1.msra.mxu0 %v156
    %381 = vmatprep.subr.mxu0 0.0
    %382 = vmatpush1.msra.mxu0 %v155
    %383 = vmatprep.subr.mxu0 0.0
    %384 = vmatpush1.msra.mxu0 %v154
    %385 = vmatprep.subr.mxu0 0.0
    %386 = vmatpush1.msra.mxu0 %v153
    %387 = vmatprep.subr.mxu0 0.0
    %388 = vmatpush1.msra.mxu0 %v152
    %389 = vmatprep.subr.mxu0 0.0
    %390 = vmatpush1.msra.mxu0 %v151
    %391 = vmatprep.subr.mxu0 0.0
    %392 = vmatpush1.msra.mxu0 %v150
    %393 = vmatprep.subr.mxu0 0.0
    %394 = vmatpush1.msra.mxu0 %v149
    %395 = vmatprep.subr.mxu0 0.0
    %396 = vmatpush1.msra.mxu0 %v148
    %397 = vmatprep.subr.mxu0 0.0
    %398 = vmatpush1.msra.mxu0 %v147
    %399 = vmatprep.subr.mxu0 0.0
    %400 = vmatpush2.msra.mxu0 0.0
    %401 = vmatprep.subr.mxu0 0.0
    %402 = vmatpush2.msra.mxu0 0.0
    %403 = vmatprep.subr.mxu0 0.0
    %404 = vmatpush2.msra.mxu0 0.0
    %405 = vmatprep.subr.mxu0 0.0
    %406 = vmatpush2.msra.mxu0 0.0
    %407 = vmatprep.subr.mxu0 0.0
    %408 = vmatpush2.msra.mxu0 0.0
    %409 = vmatprep.subr.mxu0 0.0
    %410 = vmatpush2.msra.mxu0 0.0
    %411 = vmatprep.subr.mxu0 0.0
    %412 = vmatpush2.msra.mxu0 0.0
    %413 = vmatprep.subr.mxu0 0.0
    %414 = vmatpush2.msra.mxu0 0.0
    %415 = vmatprep.subr.mxu0 0.0
    %416 = vmatpush2.msra.mxu0 0.0
    %417 = vmatprep.subr.mxu0 0.0
    %418 = vmatpush2.msra.mxu0 0.0
    %419 = vmatprep.subr.mxu0 0.0
    %420 = vmatpush2.msra.mxu0 0.0
    %421 = vmatprep.subr.mxu0 0.0
    %422 = vmatpush2.msra.mxu0 0.0
    %423 = vmatprep.subr.mxu0 0.0
    %424 = vmatpush2.msra.mxu0 0.0
    %425 = vmatprep.subr.mxu0 0.0
    %426 = vmatpush2.msra.mxu0 0.0
    %427 = vmatprep.subr.mxu0 0.0
    %428 = vmatpush2.msra.mxu0 0.0
    %429 = vmatprep.subr.mxu0 0.0
    %430 = vmatpush2.msra.mxu0 0.0
    %431 = vmatprep.mubr.f32.mxu0 0.0
    %432 = vmatmul.mubr.f32.gmra.mxu0 %v363
    %v433 = vpop.f32.mrf.mxu0
    %v434 = vadd.f32 0.0, %v433
    %v435 = vpop.f32.mrf.mxu0
    %436 = vdwg.mxu0
    %v437 = vadd.f32 %v366, %v434
    %v438 = vtanh.pop %v437
    %s439 = scalar_lea.vmem [#allocation15], 8
    %440 = vst [vmem:[%s439] sm:$0xff] %v438
    %s441 = scalar_lea.vmem [#allocation2], 16
    %v442 = vld [vmem:[%s441] sm:$0xff]
    %443 = vmatprep.subr.mxu0 0.0
    %444 = vmatpush1.msra.mxu0 %v162
    %445 = vmatprep.subr.mxu0 0.0
    %446 = vmatpush1.msra.mxu0 %v161
    %447 = vmatprep.subr.mxu0 0.0
    %448 = vmatpush1.msra.mxu0 %v160
    %449 = vmatprep.subr.mxu0 0.0
    %450 = vmatpush1.msra.mxu0 %v159
    %451 = vmatprep.subr.mxu0 0.0
    %452 = vmatpush1.msra.mxu0 %v158
    %453 = vmatprep.subr.mxu0 0.0
    %454 = vmatpush1.msra.mxu0 %v157
    %455 = vmatprep.subr.mxu0 0.0
    %456 = vmatpush1.msra.mxu0 %v156
    %457 = vmatprep.subr.mxu0 0.0
    %458 = vmatpush1.msra.mxu0 %v155
    %459 = vmatprep.subr.mxu0 0.0
    %460 = vmatpush1.msra.mxu0 %v154
    %461 = vmatprep.subr.mxu0 0.0
    %462 = vmatpush1.msra.mxu0 %v153
    %463 = vmatprep.subr.mxu0 0.0
    %464 = vmatpush1.msra.mxu0 %v152
    %465 = vmatprep.subr.mxu0 0.0
    %466 = vmatpush1.msra.mxu0 %v151
    %467 = vmatprep.subr.mxu0 0.0
    %468 = vmatpush1.msra.mxu0 %v150
    %469 = vmatprep.subr.mxu0 0.0
    %470 = vmatpush1.msra.mxu0 %v149
    %471 = vmatprep.subr.mxu0 0.0
    %472 = vmatpush1.msra.mxu0 %v148
    %473 = vmatprep.subr.mxu0 0.0
    %474 = vmatpush1.msra.mxu0 %v147
    %475 = vmatprep.subr.mxu0 0.0
    %476 = vmatpush2.msra.mxu0 0.0
    %477 = vmatprep.subr.mxu0 0.0
    %478 = vmatpush2.msra.mxu0 0.0
    %479 = vmatprep.subr.mxu0 0.0
    %480 = vmatpush2.msra.mxu0 0.0
    %481 = vmatprep.subr.mxu0 0.0
    %482 = vmatpush2.msra.mxu0 0.0
    %483 = vmatprep.subr.mxu0 0.0
    %484 = vmatpush2.msra.mxu0 0.0
    %485 = vmatprep.subr.mxu0 0.0
    %486 = vmatpush2.msra.mxu0 0.0
    %487 = vmatprep.subr.mxu0 0.0
    %488 = vmatpush2.msra.mxu0 0.0
    %489 = vmatprep.subr.mxu0 0.0
    %490 = vmatpush2.msra.mxu0 0.0
    %491 = vmatprep.subr.mxu0 0.0
    %492 = vmatpush2.msra.mxu0 0.0
    %493 = vmatprep.subr.mxu0 0.0
    %494 = vmatpush2.msra.mxu0 0.0
    %495 = vmatprep.subr.mxu0 0.0
    %496 = vmatpush2.msra.mxu0 0.0
    %497 = vmatprep.subr.mxu0 0.0
    %498 = vmatpush2.msra.mxu0 0.0
    %499 = vmatprep.subr.mxu0 0.0
    %500 = vmatpush2.msra.mxu0 0.0
    %501 = vmatprep.subr.mxu0 0.0
    %502 = vmatpush2.msra.mxu0 0.0
    %503 = vmatprep.subr.mxu0 0.0
    %504 = vmatpush2.msra.mxu0 0.0
    %505 = vmatprep.subr.mxu0 0.0
    %506 = vmatpush2.msra.mxu0 0.0
    %507 = vmatprep.mubr.f32.mxu0 0.0
    %508 = vmatmul.mubr.f32.gmra.mxu0 %v438
    %v509 = vpop.f32.mrf.mxu0
    %v510 = vadd.f32 0.0, %v509
    %v511 = vpop.f32.mrf.mxu0
    %512 = vdwg.mxu0
    %v513 = vadd.f32 %v442, %v510
    %v514 = vtanh.pop %v513
    %s515 = scalar_lea.vmem [#allocation15], 16
    %516 = vst [vmem:[%s515] sm:$0xff] %v514
    %s517 = scalar_lea.vmem [#allocation2], 24
    %v518 = vld [vmem:[%s517] sm:$0xff]
    %519 = vmatprep.subr.mxu0 0.0
    %520 = vmatpush1.msra.mxu0 %v162
    %521 = vmatprep.subr.mxu0 0.0
    %522 = vmatpush1.msra.mxu0 %v161
    %523 = vmatprep.subr.mxu0 0.0
    %524 = vmatpush1.msra.mxu0 %v160
    %525 = vmatprep.subr.mxu0 0.0
    %526 = vmatpush1.msra.mxu0 %v159
    %527 = vmatprep.subr.mxu0 0.0
    %528 = vmatpush1.msra.mxu0 %v158
    %529 = vmatprep.subr.mxu0 0.0
    %530 = vmatpush1.msra.mxu0 %v157
    %531 = vmatprep.subr.mxu0 0.0
    %532 = vmatpush1.msra.mxu0 %v156
    %533 = vmatprep.subr.mxu0 0.0
    %534 = vmatpush1.msra.mxu0 %v155
    %535 = vmatprep.subr.mxu0 0.0
    %536 = vmatpush1.msra.mxu0 %v154
    %537 = vmatprep.subr.mxu0 0.0
    %538 = vmatpush1.msra.mxu0 %v153
    %539 = vmatprep.subr.mxu0 0.0
    %540 = vmatpush1.msra.mxu0 %v152
    %541 = vmatprep.subr.mxu0 0.0
    %542 = vmatpush1.msra.mxu0 %v151
    %543 = vmatprep.subr.mxu0 0.0
    %544 = vmatpush1.msra.mxu0 %v150
    %545 = vmatprep.subr.mxu0 0.0
    %546 = vmatpush1.msra.mxu0 %v149
    %547 = vmatprep.subr.mxu0 0.0
    %548 = vmatpush1.msra.mxu0 %v148
    %549 = vmatprep.subr.mxu0 0.0
    %550 = vmatpush1.msra.mxu0 %v147
    %551 = vmatprep.subr.mxu0 0.0
    %552 = vmatpush2.msra.mxu0 0.0
    %553 = vmatprep.subr.mxu0 0.0
    %554 = vmatpush2.msra.mxu0 0.0
    %555 = vmatprep.subr.mxu0 0.0
    %556 = vmatpush2.msra.mxu0 0.0
    %557 = vmatprep.subr.mxu0 0.0
    %558 = vmatpush2.msra.mxu0 0.0
    %559 = vmatprep.subr.mxu0 0.0
    %560 = vmatpush2.msra.mxu0 0.0
    %561 = vmatprep.subr.mxu0 0.0
    %562 = vmatpush2.msra.mxu0 0.0
    %563 = vmatprep.subr.mxu0 0.0
    %564 = vmatpush2.msra.mxu0 0.0
    %565 = vmatprep.subr.mxu0 0.0
    %566 = vmatpush2.msra.mxu0 0.0
    %567 = vmatprep.subr.mxu0 0.0
    %568 = vmatpush2.msra.mxu0 0.0
    %569 = vmatprep.subr.mxu0 0.0
    %570 = vmatpush2.msra.mxu0 0.0
    %571 = vmatprep.subr.mxu0 0.0
    %572 = vmatpush2.msra.mxu0 0.0
    %573 = vmatprep.subr.mxu0 0.0
    %574 = vmatpush2.msra.mxu0 0.0
    %575 = vmatprep.subr.mxu0 0.0
    %576 = vmatpush2.msra.mxu0 0.0
    %577 = vmatprep.subr.mxu0 0.0
    %578 = vmatpush2.msra.mxu0 0.0
    %579 = vmatprep.subr.mxu0 0.0
    %580 = vmatpush2.msra.mxu0 0.0
    %581 = vmatprep.subr.mxu0 0.0
    %582 = vmatpush2.msra.mxu0 0.0
    %583 = vmatprep.mubr.f32.mxu0 0.0
    %584 = vmatmul.mubr.f32.gmra.mxu0 %v514
    %v585 = vpop.f32.mrf.mxu0
    %v586 = vadd.f32 0.0, %v585
    %v587 = vpop.f32.mrf.mxu0
    %588 = vdwg.mxu0
    %v589 = vadd.f32 %v518, %v586
    %v590 = vtanh.pop %v589
    %s591 = scalar_lea.vmem [#allocation15], 24
    %592 = vst [vmem:[%s591] sm:$0xff] %v590
    %s593 = scalar_lea.vmem [#allocation2], 32
    %v594 = vld [vmem:[%s593] sm:$0xff]
    %595 = vmatprep.subr.mxu0 0.0
    %596 = vmatpush1.msra.mxu0 %v162
    %597 = vmatprep.subr.mxu0 0.0
    %598 = vmatpush1.msra.mxu0 %v161
    %599 = vmatprep.subr.mxu0 0.0
    %600 = vmatpush1.msra.mxu0 %v160
    %601 = vmatprep.subr.mxu0 0.0
    %602 = vmatpush1.msra.mxu0 %v159
    %603 = vmatprep.subr.mxu0 0.0
    %604 = vmatpush1.msra.mxu0 %v158
    %605 = vmatprep.subr.mxu0 0.0
    %606 = vmatpush1.msra.mxu0 %v157
    %607 = vmatprep.subr.mxu0 0.0
    %608 = vmatpush1.msra.mxu0 %v156
    %609 = vmatprep.subr.mxu0 0.0
    %610 = vmatpush1.msra.mxu0 %v155
    %611 = vmatprep.subr.mxu0 0.0
    %612 = vmatpush1.msra.mxu0 %v154
    %613 = vmatprep.subr.mxu0 0.0
    %614 = vmatpush1.msra.mxu0 %v153
    %615 = vmatprep.subr.mxu0 0.0
    %616 = vmatpush1.msra.mxu0 %v152
    %617 = vmatprep.subr.mxu0 0.0
    %618 = vmatpush1.msra.mxu0 %v151
    %619 = vmatprep.subr.mxu0 0.0
    %620 = vmatpush1.msra.mxu0 %v150
    %621 = vmatprep.subr.mxu0 0.0
    %622 = vmatpush1.msra.mxu0 %v149
    %623 = vmatprep.subr.mxu0 0.0
    %624 = vmatpush1.msra.mxu0 %v148
    %625 = vmatprep.subr.mxu0 0.0
    %626 = vmatpush1.msra.mxu0 %v147
    %627 = vmatprep.subr.mxu0 0.0
    %628 = vmatpush2.msra.mxu0 0.0
    %629 = vmatprep.subr.mxu0 0.0
    %630 = vmatpush2.msra.mxu0 0.0
    %631 = vmatprep.subr.mxu0 0.0
    %632 = vmatpush2.msra.mxu0 0.0
    %633 = vmatprep.subr.mxu0 0.0
    %634 = vmatpush2.msra.mxu0 0.0
    %635 = vmatprep.subr.mxu0 0.0
    %636 = vmatpush2.msra.mxu0 0.0
    %637 = vmatprep.subr.mxu0 0.0
    %638 = vmatpush2.msra.mxu0 0.0
    %639 = vmatprep.subr.mxu0 0.0
    %640 = vmatpush2.msra.mxu0 0.0
    %641 = vmatprep.subr.mxu0 0.0
    %642 = vmatpush2.msra.mxu0 0.0
    %643 = vmatprep.subr.mxu0 0.0
    %644 = vmatpush2.msra.mxu0 0.0
    %645 = vmatprep.subr.mxu0 0.0
    %646 = vmatpush2.msra.mxu0 0.0
    %647 = vmatprep.subr.mxu0 0.0
    %648 = vmatpush2.msra.mxu0 0.0
    %649 = vmatprep.subr.mxu0 0.0
    %650 = vmatpush2.msra.mxu0 0.0
    %651 = vmatprep.subr.mxu0 0.0
    %652 = vmatpush2.msra.mxu0 0.0
    %653 = vmatprep.subr.mxu0 0.0
    %654 = vmatpush2.msra.mxu0 0.0
    %655 = vmatprep.subr.mxu0 0.0
    %656 = vmatpush2.msra.mxu0 0.0
    %657 = vmatprep.subr.mxu0 0.0
    %658 = vmatpush2.msra.mxu0 0.0
    %659 = vmatprep.mubr.f32.mxu0 0.0
    %660 = vmatmul.mubr.f32.gmra.mxu0 %v590
    %v661 = vpop.f32.mrf.mxu0
    %v662 = vadd.f32 0.0, %v661
    %v663 = vpop.f32.mrf.mxu0
    %664 = vdwg.mxu0
    %v665 = vadd.f32 %v594, %v662
    %v666 = vtanh.pop %v665
    %s667 = scalar_lea.vmem [#allocation15], 32
    %668 = vst [vmem:[%s667] sm:$0xff] %v666
    %s669 = scalar_lea.vmem [#allocation2], 40
    %v670 = vld [vmem:[%s669] sm:$0xff]
    %671 = vmatprep.subr.mxu0 0.0
    %672 = vmatpush1.msra.mxu0 %v162
    %673 = vmatprep.subr.mxu0 0.0
    %674 = vmatpush1.msra.mxu0 %v161
    %675 = vmatprep.subr.mxu0 0.0
    %676 = vmatpush1.msra.mxu0 %v160
    %677 = vmatprep.subr.mxu0 0.0
    %678 = vmatpush1.msra.mxu0 %v159
    %679 = vmatprep.subr.mxu0 0.0
    %680 = vmatpush1.msra.mxu0 %v158
    %681 = vmatprep.subr.mxu0 0.0
    %682 = vmatpush1.msra.mxu0 %v157
    %683 = vmatprep.subr.mxu0 0.0
    %684 = vmatpush1.msra.mxu0 %v156
    %685 = vmatprep.subr.mxu0 0.0
    %686 = vmatpush1.msra.mxu0 %v155
    %687 = vmatprep.subr.mxu0 0.0
    %688 = vmatpush1.msra.mxu0 %v154
    %689 = vmatprep.subr.mxu0 0.0
    %690 = vmatpush1.msra.mxu0 %v153
    %691 = vmatprep.subr.mxu0 0.0
    %692 = vmatpush1.msra.mxu0 %v152
    %693 = vmatprep.subr.mxu0 0.0
    %694 = vmatpush1.msra.mxu0 %v151
    %695 = vmatprep.subr.mxu0 0.0
    %696 = vmatpush1.msra.mxu0 %v150
    %697 = vmatprep.subr.mxu0 0.0
    %698 = vmatpush1.msra.mxu0 %v149
    %699 = vmatprep.subr.mxu0 0.0
    %700 = vmatpush1.msra.mxu0 %v148
    %701 = vmatprep.subr.mxu0 0.0
    %702 = vmatpush1.msra.mxu0 %v147
    %703 = vmatprep.subr.mxu0 0.0
    %704 = vmatpush2.msra.mxu0 0.0
    %705 = vmatprep.subr.mxu0 0.0
    %706 = vmatpush2.msra.mxu0 0.0
    %707 = vmatprep.subr.mxu0 0.0
    %708 = vmatpush2.msra.mxu0 0.0
    %709 = vmatprep.subr.mxu0 0.0
    %710 = vmatpush2.msra.mxu0 0.0
    %711 = vmatprep.subr.mxu0 0.0
    %712 = vmatpush2.msra.mxu0 0.0
    %713 = vmatprep.subr.mxu0 0.0
    %714 = vmatpush2.msra.mxu0 0.0
    %715 = vmatprep.subr.mxu0 0.0
    %716 = vmatpush2.msra.mxu0 0.0
    %717 = vmatprep.subr.mxu0 0.0
    %718 = vmatpush2.msra.mxu0 0.0
    %719 = vmatprep.subr.mxu0 0.0
    %720 = vmatpush2.msra.mxu0 0.0
    %721 = vmatprep.subr.mxu0 0.0
    %722 = vmatpush2.msra.mxu0 0.0
    %723 = vmatprep.subr.mxu0 0.0
    %724 = vmatpush2.msra.mxu0 0.0
    %725 = vmatprep.subr.mxu0 0.0
    %726 = vmatpush2.msra.mxu0 0.0
    %727 = vmatprep.subr.mxu0 0.0
    %728 = vmatpush2.msra.mxu0 0.0
    %729 = vmatprep.subr.mxu0 0.0
    %730 = vmatpush2.msra.mxu0 0.0
    %731 = vmatprep.subr.mxu0 0.0
    %732 = vmatpush2.msra.mxu0 0.0
    %733 = vmatprep.subr.mxu0 0.0
    %734 = vmatpush2.msra.mxu0 0.0
    %735 = vmatprep.mubr.f32.mxu0 0.0
    %736 = vmatmul.mubr.f32.gmra.mxu0 %v666
    %v737 = vpop.f32.mrf.mxu0
    %v738 = vadd.f32 0.0, %v737
    %v739 = vpop.f32.mrf.mxu0
    %740 = vdwg.mxu0
    %v741 = vadd.f32 %v670, %v738
    %v742 = vtanh.pop %v741
    %s743 = scalar_lea.vmem [#allocation15], 40
    %744 = vst [vmem:[%s743] sm:$0xff] %v742
    %s745 = scalar_lea.vmem [#allocation2], 48
    %v746 = vld [vmem:[%s745] sm:$0xff]
    %747 = vmatprep.subr.mxu0 0.0
    %748 = vmatpush1.msra.mxu0 %v162
    %749 = vmatprep.subr.mxu0 0.0
    %750 = vmatpush1.msra.mxu0 %v161
    %751 = vmatprep.subr.mxu0 0.0
    %752 = vmatpush1.msra.mxu0 %v160
    %753 = vmatprep.subr.mxu0 0.0
    %754 = vmatpush1.msra.mxu0 %v159
    %755 = vmatprep.subr.mxu0 0.0
    %756 = vmatpush1.msra.mxu0 %v158
    %757 = vmatprep.subr.mxu0 0.0
    %758 = vmatpush1.msra.mxu0 %v157
    %759 = vmatprep.subr.mxu0 0.0
    %760 = vmatpush1.msra.mxu0 %v156
    %761 = vmatprep.subr.mxu0 0.0
    %762 = vmatpush1.msra.mxu0 %v155
    %763 = vmatprep.subr.mxu0 0.0
    %764 = vmatpush1.msra.mxu0 %v154
    %765 = vmatprep.subr.mxu0 0.0
    %766 = vmatpush1.msra.mxu0 %v153
    %767 = vmatprep.subr.mxu0 0.0
    %768 = vmatpush1.msra.mxu0 %v152
    %769 = vmatprep.subr.mxu0 0.0
    %770 = vmatpush1.msra.mxu0 %v151
    %771 = vmatprep.subr.mxu0 0.0
    %772 = vmatpush1.msra.mxu0 %v150
    %773 = vmatprep.subr.mxu0 0.0
    %774 = vmatpush1.msra.mxu0 %v149
    %775 = vmatprep.subr.mxu0 0.0
    %776 = vmatpush1.msra.mxu0 %v148
    %777 = vmatprep.subr.mxu0 0.0
    %778 = vmatpush1.msra.mxu0 %v147
    %779 = vmatprep.subr.mxu0 0.0
    %780 = vmatpush2.msra.mxu0 0.0
    %781 = vmatprep.subr.mxu0 0.0
    %782 = vmatpush2.msra.mxu0 0.0
    %783 = vmatprep.subr.mxu0 0.0
    %784 = vmatpush2.msra.mxu0 0.0
    %785 = vmatprep.subr.mxu0 0.0
    %786 = vmatpush2.msra.mxu0 0.0
    %787 = vmatprep.subr.mxu0 0.0
    %788 = vmatpush2.msra.mxu0 0.0
    %789 = vmatprep.subr.mxu0 0.0
    %790 = vmatpush2.msra.mxu0 0.0
    %791 = vmatprep.subr.mxu0 0.0
    %792 = vmatpush2.msra.mxu0 0.0
    %793 = vmatprep.subr.mxu0 0.0
    %794 = vmatpush2.msra.mxu0 0.0
    %795 = vmatprep.subr.mxu0 0.0
    %796 = vmatpush2.msra.mxu0 0.0
    %797 = vmatprep.subr.mxu0 0.0
    %798 = vmatpush2.msra.mxu0 0.0
    %799 = vmatprep.subr.mxu0 0.0
    %800 = vmatpush2.msra.mxu0 0.0
    %801 = vmatprep.subr.mxu0 0.0
    %802 = vmatpush2.msra.mxu0 0.0
    %803 = vmatprep.subr.mxu0 0.0
    %804 = vmatpush2.msra.mxu0 0.0
    %805 = vmatprep.subr.mxu0 0.0
    %806 = vmatpush2.msra.mxu0 0.0
    %807 = vmatprep.subr.mxu0 0.0
    %808 = vmatpush2.msra.mxu0 0.0
    %809 = vmatprep.subr.mxu0 0.0
    %810 = vmatpush2.msra.mxu0 0.0
    %811 = vmatprep.mubr.f32.mxu0 0.0
    %812 = vmatmul.mubr.f32.gmra.mxu0 %v742
    %v813 = vpop.f32.mrf.mxu0
    %v814 = vadd.f32 0.0, %v813
    %v815 = vpop.f32.mrf.mxu0
    %816 = vdwg.mxu0
    %v817 = vadd.f32 %v746, %v814
    %v818 = vtanh.pop %v817
    %s819 = scalar_lea.vmem [#allocation15], 48
    %820 = vst [vmem:[%s819] sm:$0xff] %v818
    %s821 = scalar_lea.vmem [#allocation2], 56
    %v822 = vld [vmem:[%s821] sm:$0xff]
    %823 = vmatprep.subr.mxu0 0.0
    %824 = vmatpush1.msra.mxu0 %v162
    %825 = vmatprep.subr.mxu0 0.0
    %826 = vmatpush1.msra.mxu0 %v161
    %827 = vmatprep.subr.mxu0 0.0
    %828 = vmatpush1.msra.mxu0 %v160
    %829 = vmatprep.subr.mxu0 0.0
    %830 = vmatpush1.msra.mxu0 %v159
    %831 = vmatprep.subr.mxu0 0.0
    %832 = vmatpush1.msra.mxu0 %v158
    %833 = vmatprep.subr.mxu0 0.0
    %834 = vmatpush1.msra.mxu0 %v157
    %835 = vmatprep.subr.mxu0 0.0
    %836 = vmatpush1.msra.mxu0 %v156
    %837 = vmatprep.subr.mxu0 0.0
    %838 = vmatpush1.msra.mxu0 %v155
    %839 = vmatprep.subr.mxu0 0.0
    %840 = vmatpush1.msra.mxu0 %v154
    %841 = vmatprep.subr.mxu0 0.0
    %842 = vmatpush1.msra.mxu0 %v153
    %843 = vmatprep.subr.mxu0 0.0
    %844 = vmatpush1.msra.mxu0 %v152
    %845 = vmatprep.subr.mxu0 0.0
    %846 = vmatpush1.msra.mxu0 %v151
    %847 = vmatprep.subr.mxu0 0.0
    %848 = vmatpush1.msra.mxu0 %v150
    %849 = vmatprep.subr.mxu0 0.0
    %850 = vmatpush1.msra.mxu0 %v149
    %851 = vmatprep.subr.mxu0 0.0
    %852 = vmatpush1.msra.mxu0 %v148
    %853 = vmatprep.subr.mxu0 0.0
    %854 = vmatpush1.msra.mxu0 %v147
    %855 = vmatprep.subr.mxu0 0.0
    %856 = vmatpush2.msra.mxu0 0.0
    %857 = vmatprep.subr.mxu0 0.0
    %858 = vmatpush2.msra.mxu0 0.0
    %859 = vmatprep.subr.mxu0 0.0
    %860 = vmatpush2.msra.mxu0 0.0
    %861 = vmatprep.subr.mxu0 0.0
    %862 = vmatpush2.msra.mxu0 0.0
    %863 = vmatprep.subr.mxu0 0.0
    %864 = vmatpush2.msra.mxu0 0.0
    %865 = vmatprep.subr.mxu0 0.0
    %866 = vmatpush2.msra.mxu0 0.0
    %867 = vmatprep.subr.mxu0 0.0
    %868 = vmatpush2.msra.mxu0 0.0
    %869 = vmatprep.subr.mxu0 0.0
    %870 = vmatpush2.msra.mxu0 0.0
    %871 = vmatprep.subr.mxu0 0.0
    %872 = vmatpush2.msra.mxu0 0.0
    %873 = vmatprep.subr.mxu0 0.0
    %874 = vmatpush2.msra.mxu0 0.0
    %875 = vmatprep.subr.mxu0 0.0
    %876 = vmatpush2.msra.mxu0 0.0
    %877 = vmatprep.subr.mxu0 0.0
    %878 = vmatpush2.msra.mxu0 0.0
    %879 = vmatprep.subr.mxu0 0.0
    %880 = vmatpush2.msra.mxu0 0.0
    %881 = vmatprep.subr.mxu0 0.0
    %882 = vmatpush2.msra.mxu0 0.0
    %883 = vmatprep.subr.mxu0 0.0
    %884 = vmatpush2.msra.mxu0 0.0
    %885 = vmatprep.subr.mxu0 0.0
    %886 = vmatpush2.msra.mxu0 0.0
    %887 = vmatprep.mubr.f32.mxu0 0.0
    %888 = vmatmul.mubr.f32.gmra.mxu0 %v818
    %v889 = vpop.f32.mrf.mxu0
    %v890 = vadd.f32 0.0, %v889
    %v891 = vpop.f32.mrf.mxu0
    %892 = vdwg.mxu0
    %v893 = vadd.f32 %v822, %v890
    %v894 = vtanh.pop %v893
    %s895 = scalar_lea.vmem [#allocation15], 56
    %896 = vst [vmem:[%s895] sm:$0xff] %v894
    %v897 = vld [vmem:[#allocation9] sm:$0xff]
    %v898 = vld [vmem:[#allocation9 + $0x8] sm:$0xff]
    %v899 = vld [vmem:[#allocation9 + $0x10] sm:$0xff]
    %v900 = vld [vmem:[#allocation9 + $0x18] sm:$0xff]
    %v901 = vld [vmem:[#allocation9 + $0x20] sm:$0xff]
    %v902 = vld [vmem:[#allocation9 + $0x28] sm:$0xff]
    %v903 = vld [vmem:[#allocation9 + $0x30] sm:$0xff]
    %v904 = vld [vmem:[#allocation9 + $0x38] sm:$0xff]
    %v905 = vld [vmem:[#allocation9 + $0x40] sm:$0xff]
    %v906 = vld [vmem:[#allocation9 + $0x48] sm:$0xff]
    %v907 = vld [vmem:[#allocation9 + $0x50] sm:$0xff]
    %v908 = vld [vmem:[#allocation9 + $0x58] sm:$0xff]
    %v909 = vld [vmem:[#allocation9 + $0x60] sm:$0xff]
    %v910 = vld [vmem:[#allocation9 + $0x68] sm:$0xff]
    %v911 = vld [vmem:[#allocation9 + $0x70] sm:$0xff]
    %v912 = vld [vmem:[#allocation9 + $0x78] sm:$0xff]
    %v913 = vld [vmem:[#allocation11] sm:$0xff]
    %v914 = vld [vmem:[#allocation11 + $0x8] sm:$0xff]
    %v915 = vld [vmem:[#allocation11 + $0x10] sm:$0xff]
    %v916 = vld [vmem:[#allocation11 + $0x18] sm:$0xff]
    %v917 = vld [vmem:[#allocation11 + $0x20] sm:$0xff]
    %v918 = vld [vmem:[#allocation11 + $0x28] sm:$0xff]
    %v919 = vld [vmem:[#allocation11 + $0x30] sm:$0xff]
    %v920 = vld [vmem:[#allocation11 + $0x38] sm:$0xff]
    %v921 = vld [vmem:[#allocation11 + $0x40] sm:$0xff]
    %v922 = vld [vmem:[#allocation11 + $0x48] sm:$0xff]
    %v923 = vld [vmem:[#allocation11 + $0x50] sm:$0xff]
    %v924 = vld [vmem:[#allocation11 + $0x58] sm:$0xff]
    %v925 = vld [vmem:[#allocation11 + $0x60] sm:$0xff]
    %v926 = vld [vmem:[#allocation11 + $0x68] sm:$0xff]
    %v927 = vld [vmem:[#allocation11 + $0x70] sm:$0xff]
    %v928 = vld [vmem:[#allocation11 + $0x78] sm:$0xff]
    %v929 = vld [vmem:[%s6] sm:$0x1]
    %v930 = vld [vmem:[#allocation15] sm:$0xff]
    %v931 = vld [vmem:[#allocation15 + $0x8] sm:$0xff]
    %v932 = vld [vmem:[#allocation15 + $0x10] sm:$0xff]
    %v933 = vld [vmem:[#allocation15 + $0x18] sm:$0xff]
    %v934 = vld [vmem:[#allocation15 + $0x20] sm:$0xff]
    %v935 = vld [vmem:[#allocation15 + $0x28] sm:$0xff]
    %v936 = vld [vmem:[#allocation15 + $0x30] sm:$0xff]
    %v937 = vld [vmem:[#allocation15 + $0x38] sm:$0xff]
    %v939 = vlaneseq
    %v940 = vshrl.u32 %v939, 7
    %v941 = vsub.s32 0, %v940
    %v942 = vrot.slane %v929, %v941
    %944 = vmatprep.subr.mxu0 0.0
    %945 = vmatpush1.msra.mxu0 %v912
    %946 = vmatprep.subr.mxu0 0.0
    %947 = vmatpush1.msra.mxu0 %v911
    %948 = vmatprep.subr.mxu0 0.0
    %949 = vmatpush1.msra.mxu0 %v910
    %950 = vmatprep.subr.mxu0 0.0
    %951 = vmatpush1.msra.mxu0 %v909
    %952 = vmatprep.subr.mxu0 0.0
    %953 = vmatpush1.msra.mxu0 %v908
    %954 = vmatprep.subr.mxu0 0.0
    %955 = vmatpush1.msra.mxu0 %v907
    %956 = vmatprep.subr.mxu0 0.0
    %957 = vmatpush1.msra.mxu0 %v906
    %958 = vmatprep.subr.mxu0 0.0
    %959 = vmatpush1.msra.mxu0 %v905
    %960 = vmatprep.subr.mxu0 0.0
    %961 = vmatpush1.msra.mxu0 %v904
    %962 = vmatprep.subr.mxu0 0.0
    %963 = vmatpush1.msra.mxu0 %v903
    %964 = vmatprep.subr.mxu0 0.0
    %965 = vmatpush1.msra.mxu0 %v902
    %966 = vmatprep.subr.mxu0 0.0
    %967 = vmatpush1.msra.mxu0 %v901
    %968 = vmatprep.subr.mxu0 0.0
    %969 = vmatpush1.msra.mxu0 %v900
    %970 = vmatprep.subr.mxu0 0.0
    %971 = vmatpush1.msra.mxu0 %v899
    %972 = vmatprep.subr.mxu0 0.0
    %973 = vmatpush1.msra.mxu0 %v898
    %974 = vmatprep.subr.mxu0 0.0
    %975 = vmatpush1.msra.mxu0 %v897
    %976 = vmatprep.subr.mxu0 0.0
    %977 = vmatpush2.msra.mxu0 0.0
    %978 = vmatprep.subr.mxu0 0.0
    %979 = vmatpush2.msra.mxu0 0.0
    %980 = vmatprep.subr.mxu0 0.0
    %981 = vmatpush2.msra.mxu0 0.0
    %982 = vmatprep.subr.mxu0 0.0
    %983 = vmatpush2.msra.mxu0 0.0
    %984 = vmatprep.subr.mxu0 0.0
    %985 = vmatpush2.msra.mxu0 0.0
    %986 = vmatprep.subr.mxu0 0.0
    %987 = vmatpush2.msra.mxu0 0.0
    %988 = vmatprep.subr.mxu0 0.0
    %989 = vmatpush2.msra.mxu0 0.0
    %990 = vmatprep.subr.mxu0 0.0
    %991 = vmatpush2.msra.mxu0 0.0
    %992 = vmatprep.subr.mxu0 0.0
    %993 = vmatpush2.msra.mxu0 0.0
    %994 = vmatprep.subr.mxu0 0.0
    %995 = vmatpush2.msra.mxu0 0.0
    %996 = vmatprep.subr.mxu0 0.0
    %997 = vmatpush2.msra.mxu0 0.0
    %998 = vmatprep.subr.mxu0 0.0
    %999 = vmatpush2.msra.mxu0 0.0
    %1000 = vmatprep.subr.mxu0 0.0
    %1001 = vmatpush2.msra.mxu0 0.0
    %1002 = vmatprep.subr.mxu0 0.0
    %1003 = vmatpush2.msra.mxu0 0.0
    %1004 = vmatprep.subr.mxu0 0.0
    %1005 = vmatpush2.msra.mxu0 0.0
    %1006 = vmatprep.subr.mxu0 0.0
    %1007 = vmatpush2.msra.mxu0 0.0
    %1008 = vmatprep.mubr.f32.mxu0 0.0
    %1009 = vmatmul.mubr.f32.gmra.mxu0 %v930
    %v1010 = vpop.f32.mrf.mxu0
    %v1011 = vadd.f32 %v942, %v1010
    %v1012 = vpop.f32.mrf.mxu0
    %1013 = vmatprep.mubr.f32.mxu0 0.0
    %1014 = vmatmul.mubr.f32.gmra.mxu0 %v931
    %v1015 = vpop.f32.mrf.mxu0
    %v1016 = vadd.f32 %v942, %v1015
    %v1017 = vpop.f32.mrf.mxu0
    %1018 = vmatprep.mubr.f32.mxu0 0.0
    %1019 = vmatmul.mubr.f32.gmra.mxu0 %v932
    %v1020 = vpop.f32.mrf.mxu0
    %v1021 = vadd.f32 %v942, %v1020
    %v1022 = vpop.f32.mrf.mxu0
    %1023 = vmatprep.mubr.f32.mxu0 0.0
    %1024 = vmatmul.mubr.f32.gmra.mxu0 %v933
    %v1025 = vpop.f32.mrf.mxu0
    %v1026 = vadd.f32 %v942, %v1025
    %v1027 = vpop.f32.mrf.mxu0
    %1028 = vmatprep.mubr.f32.mxu0 0.0
    %1029 = vmatmul.mubr.f32.gmra.mxu0 %v934
    %v1030 = vpop.f32.mrf.mxu0
    %v1031 = vadd.f32 %v942, %v1030
    %v1032 = vpop.f32.mrf.mxu0
    %1033 = vmatprep.mubr.f32.mxu0 0.0
    %1034 = vmatmul.mubr.f32.gmra.mxu0 %v935
    %v1035 = vpop.f32.mrf.mxu0
    %v1036 = vadd.f32 %v942, %v1035
    %v1037 = vpop.f32.mrf.mxu0
    %1038 = vmatprep.mubr.f32.mxu0 0.0
    %1039 = vmatmul.mubr.f32.gmra.mxu0 %v936
    %v1040 = vpop.f32.mrf.mxu0
    %v1041 = vadd.f32 %v942, %v1040
    %v1042 = vpop.f32.mrf.mxu0
    %1043 = vmatprep.mubr.f32.mxu0 0.0
    %1044 = vmatmul.mubr.f32.gmra.mxu0 %v937
    %v1045 = vpop.f32.mrf.mxu0
    %v1046 = vadd.f32 %v942, %v1045
    %v1047 = vpop.f32.mrf.mxu0
    %1048 = vdwg.mxu0
    %1049 = vst [vmem:[#allocation2] sm:$0xff] %v1011
    %1050 = vst [vmem:[#allocation2 + $0x8] sm:$0xff] %v1016
    %1051 = vst [vmem:[#allocation2 + $0x10] sm:$0xff] %v1021
    %1052 = vst [vmem:[#allocation2 + $0x18] sm:$0xff] %v1026
    %1053 = vst [vmem:[#allocation2 + $0x20] sm:$0xff] %v1031
    %1054 = vst [vmem:[#allocation2 + $0x28] sm:$0xff] %v1036
    %1055 = vst [vmem:[#allocation2 + $0x30] sm:$0xff] %v1041
    %1056 = vst [vmem:[#allocation2 + $0x38] sm:$0xff] %v1046
    %v1057 = vld [vmem:[#allocation2] sm:$0xff]
    %1058 = vmatprep.subr.mxu0 0.0
    %1059 = vmatpush1.msra.mxu0 %v928
    %1060 = vmatprep.subr.mxu0 0.0
    %1061 = vmatpush1.msra.mxu0 %v927
    %1062 = vmatprep.subr.mxu0 0.0
    %1063 = vmatpush1.msra.mxu0 %v926
    %1064 = vmatprep.subr.mxu0 0.0
    %1065 = vmatpush1.msra.mxu0 %v925
    %1066 = vmatprep.subr.mxu0 0.0
    %1067 = vmatpush1.msra.mxu0 %v924
    %1068 = vmatprep.subr.mxu0 0.0
    %1069 = vmatpush1.msra.mxu0 %v923
    %1070 = vmatprep.subr.mxu0 0.0
    %1071 = vmatpush1.msra.mxu0 %v922
    %1072 = vmatprep.subr.mxu0 0.0
    %1073 = vmatpush1.msra.mxu0 %v921
    %1074 = vmatprep.subr.mxu0 0.0
    %1075 = vmatpush1.msra.mxu0 %v920
    %1076 = vmatprep.subr.mxu0 0.0
    %1077 = vmatpush1.msra.mxu0 %v919
    %1078 = vmatprep.subr.mxu0 0.0
    %1079 = vmatpush1.msra.mxu0 %v918
    %1080 = vmatprep.subr.mxu0 0.0
    %1081 = vmatpush1.msra.mxu0 %v917
    %1082 = vmatprep.subr.mxu0 0.0
    %1083 = vmatpush1.msra.mxu0 %v916
    %1084 = vmatprep.subr.mxu0 0.0
    %1085 = vmatpush1.msra.mxu0 %v915
    %1086 = vmatprep.subr.mxu0 0.0
    %1087 = vmatpush1.msra.mxu0 %v914
    %1088 = vmatprep.subr.mxu0 0.0
    %1089 = vmatpush1.msra.mxu0 %v913
    %1090 = vmatprep.subr.mxu0 0.0
    %1091 = vmatpush2.msra.mxu0 0.0
    %1092 = vmatprep.subr.mxu0 0.0
    %1093 = vmatpush2.msra.mxu0 0.0
    %1094 = vmatprep.subr.mxu0 0.0
    %1095 = vmatpush2.msra.mxu0 0.0
    %1096 = vmatprep.subr.mxu0 0.0
    %1097 = vmatpush2.msra.mxu0 0.0
    %1098 = vmatprep.subr.mxu0 0.0
    %1099 = vmatpush2.msra.mxu0 0.0
    %1100 = vmatprep.subr.mxu0 0.0
    %1101 = vmatpush2.msra.mxu0 0.0
    %1102 = vmatprep.subr.mxu0 0.0
    %1103 = vmatpush2.msra.mxu0 0.0
    %1104 = vmatprep.subr.mxu0 0.0
    %1105 = vmatpush2.msra.mxu0 0.0
    %1106 = vmatprep.subr.mxu0 0.0
    %1107 = vmatpush2.msra.mxu0 0.0
    %1108 = vmatprep.subr.mxu0 0.0
    %1109 = vmatpush2.msra.mxu0 0.0
    %1110 = vmatprep.subr.mxu0 0.0
    %1111 = vmatpush2.msra.mxu0 0.0
    %1112 = vmatprep.subr.mxu0 0.0
    %1113 = vmatpush2.msra.mxu0 0.0
    %1114 = vmatprep.subr.mxu0 0.0
    %1115 = vmatpush2.msra.mxu0 0.0
    %1116 = vmatprep.subr.mxu0 0.0
    %1117 = vmatpush2.msra.mxu0 0.0
    %1118 = vmatprep.subr.mxu0 0.0
    %1119 = vmatpush2.msra.mxu0 0.0
    %1120 = vmatprep.subr.mxu0 0.0
    %1121 = vmatpush2.msra.mxu0 0.0
    %1122 = vmatprep.mubr.f32.mxu0 0.0
    %1123 = vmatmul.mubr.f32.gmra.mxu0 0.0
    %v1124 = vpop.f32.mrf.mxu0
    %v1125 = vadd.f32 0.0, %v1124
    %v1126 = vpop.f32.mrf.mxu0
    %1127 = vdwg.mxu0
    %v1128 = vadd.f32 %v1057, %v1125
    %v1129 = vtanh.pop %v1128
    %1130 = vst [vmem:[#allocation15] sm:$0xff] %v1129
    %v1131 = vld [vmem:[%s365] sm:$0xff]
    %1132 = vmatprep.subr.mxu0 0.0
    %1133 = vmatpush1.msra.mxu0 %v928
    %1134 = vmatprep.subr.mxu0 0.0
    %1135 = vmatpush1.msra.mxu0 %v927
    %1136 = vmatprep.subr.mxu0 0.0
    %1137 = vmatpush1.msra.mxu0 %v926
    %1138 = vmatprep.subr.mxu0 0.0
    %1139 = vmatpush1.msra.mxu0 %v925
    %1140 = vmatprep.subr.mxu0 0.0
    %1141 = vmatpush1.msra.mxu0 %v924
    %1142 = vmatprep.subr.mxu0 0.0
    %1143 = vmatpush1.msra.mxu0 %v923
    %1144 = vmatprep.subr.mxu0 0.0
    %1145 = vmatpush1.msra.mxu0 %v922
    %1146 = vmatprep.subr.mxu0 0.0
    %1147 = vmatpush1.msra.mxu0 %v921
    %1148 = vmatprep.subr.mxu0 0.0
    %1149 = vmatpush1.msra.mxu0 %v920
    %1150 = vmatprep.subr.mxu0 0.0
    %1151 = vmatpush1.msra.mxu0 %v919
    %1152 = vmatprep.subr.mxu0 0.0
    %1153 = vmatpush1.msra.mxu0 %v918
    %1154 = vmatprep.subr.mxu0 0.0
    %1155 = vmatpush1.msra.mxu0 %v917
    %1156 = vmatprep.subr.mxu0 0.0
    %1157 = vmatpush1.msra.mxu0 %v916
    %1158 = vmatprep.subr.mxu0 0.0
    %1159 = vmatpush1.msra.mxu0 %v915
    %1160 = vmatprep.subr.mxu0 0.0
    %1161 = vmatpush1.msra.mxu0 %v914
    %1162 = vmatprep.subr.mxu0 0.0
    %1163 = vmatpush1.msra.mxu0 %v913
    %1164 = vmatprep.subr.mxu0 0.0
    %1165 = vmatpush2.msra.mxu0 0.0
    %1166 = vmatprep.subr.mxu0 0.0
    %1167 = vmatpush2.msra.mxu0 0.0
    %1168 = vmatprep.subr.mxu0 0.0
    %1169 = vmatpush2.msra.mxu0 0.0
    %1170 = vmatprep.subr.mxu0 0.0
    %1171 = vmatpush2.msra.mxu0 0.0
    %1172 = vmatprep.subr.mxu0 0.0
    %1173 = vmatpush2.msra.mxu0 0.0
    %1174 = vmatprep.subr.mxu0 0.0
    %1175 = vmatpush2.msra.mxu0 0.0
    %1176 = vmatprep.subr.mxu0 0.0
    %1177 = vmatpush2.msra.mxu0 0.0
    %1178 = vmatprep.subr.mxu0 0.0
    %1179 = vmatpush2.msra.mxu0 0.0
    %1180 = vmatprep.subr.mxu0 0.0
    %1181 = vmatpush2.msra.mxu0 0.0
    %1182 = vmatprep.subr.mxu0 0.0
    %1183 = vmatpush2.msra.mxu0 0.0
    %1184 = vmatprep.subr.mxu0 0.0
    %1185 = vmatpush2.msra.mxu0 0.0
    %1186 = vmatprep.subr.mxu0 0.0
    %1187 = vmatpush2.msra.mxu0 0.0
    %1188 = vmatprep.subr.mxu0 0.0
    %1189 = vmatpush2.msra.mxu0 0.0
    %1190 = vmatprep.subr.mxu0 0.0
    %1191 = vmatpush2.msra.mxu0 0.0
    %1192 = vmatprep.subr.mxu0 0.0
    %1193 = vmatpush2.msra.mxu0 0.0
    %1194 = vmatprep.subr.mxu0 0.0
    %1195 = vmatpush2.msra.mxu0 0.0
    %1196 = vmatprep.mubr.f32.mxu0 0.0
    %1197 = vmatmul.mubr.f32.gmra.mxu0 %v1129
    %v1198 = vpop.f32.mrf.mxu0
    %v1199 = vadd.f32 0.0, %v1198
    %v1200 = vpop.f32.mrf.mxu0
    %1201 = vdwg.mxu0
    %v1202 = vadd.f32 %v1131, %v1199
    %v1203 = vtanh.pop %v1202
    %1204 = vst [vmem:[%s439] sm:$0xff] %v1203
    %v1205 = vld [vmem:[%s441] sm:$0xff]
    %1206 = vmatprep.subr.mxu0 0.0
    %1207 = vmatpush1.msra.mxu0 %v928
    %1208 = vmatprep.subr.mxu0 0.0
    %1209 = vmatpush1.msra.mxu0 %v927
    %1210 = vmatprep.subr.mxu0 0.0
    %1211 = vmatpush1.msra.mxu0 %v926
    %1212 = vmatprep.subr.mxu0 0.0
    %1213 = vmatpush1.msra.mxu0 %v925
    %1214 = vmatprep.subr.mxu0 0.0
    %1215 = vmatpush1.msra.mxu0 %v924
    %1216 = vmatprep.subr.mxu0 0.0
    %1217 = vmatpush1.msra.mxu0 %v923
    %1218 = vmatprep.subr.mxu0 0.0
    %1219 = vmatpush1.msra.mxu0 %v922
    %1220 = vmatprep.subr.mxu0 0.0
    %1221 = vmatpush1.msra.mxu0 %v921
    %1222 = vmatprep.subr.mxu0 0.0
    %1223 = vmatpush1.msra.mxu0 %v920
    %1224 = vmatprep.subr.mxu0 0.0
    %1225 = vmatpush1.msra.mxu0 %v919
    %1226 = vmatprep.subr.mxu0 0.0
    %1227 = vmatpush1.msra.mxu0 %v918
    %1228 = vmatprep.subr.mxu0 0.0
    %1229 = vmatpush1.msra.mxu0 %v917
    %1230 = vmatprep.subr.mxu0 0.0
    %1231 = vmatpush1.msra.mxu0 %v916
    %1232 = vmatprep.subr.mxu0 0.0
    %1233 = vmatpush1.msra.mxu0 %v915
    %1234 = vmatprep.subr.mxu0 0.0
    %1235 = vmatpush1.msra.mxu0 %v914
    %1236 = vmatprep.subr.mxu0 0.0
    %1237 = vmatpush1.msra.mxu0 %v913
    %1238 = vmatprep.subr.mxu0 0.0
    %1239 = vmatpush2.msra.mxu0 0.0
    %1240 = vmatprep.subr.mxu0 0.0
    %1241 = vmatpush2.msra.mxu0 0.0
    %1242 = vmatprep.subr.mxu0 0.0
    %1243 = vmatpush2.msra.mxu0 0.0
    %1244 = vmatprep.subr.mxu0 0.0
    %1245 = vmatpush2.msra.mxu0 0.0
    %1246 = vmatprep.subr.mxu0 0.0
    %1247 = vmatpush2.msra.mxu0 0.0
    %1248 = vmatprep.subr.mxu0 0.0
    %1249 = vmatpush2.msra.mxu0 0.0
    %1250 = vmatprep.subr.mxu0 0.0
    %1251 = vmatpush2.msra.mxu0 0.0
    %1252 = vmatprep.subr.mxu0 0.0
    %1253 = vmatpush2.msra.mxu0 0.0
    %1254 = vmatprep.subr.mxu0 0.0
    %1255 = vmatpush2.msra.mxu0 0.0
    %1256 = vmatprep.subr.mxu0 0.0
    %1257 = vmatpush2.msra.mxu0 0.0
    %1258 = vmatprep.subr.mxu0 0.0
    %1259 = vmatpush2.msra.mxu0 0.0
    %1260 = vmatprep.subr.mxu0 0.0
    %1261 = vmatpush2.msra.mxu0 0.0
    %1262 = vmatprep.subr.mxu0 0.0
    %1263 = vmatpush2.msra.mxu0 0.0
    %1264 = vmatprep.subr.mxu0 0.0
    %1265 = vmatpush2.msra.mxu0 0.0
    %1266 = vmatprep.subr.mxu0 0.0
    %1267 = vmatpush2.msra.mxu0 0.0
    %1268 = vmatprep.subr.mxu0 0.0
    %1269 = vmatpush2.msra.mxu0 0.0
    %1270 = vmatprep.mubr.f32.mxu0 0.0
    %1271 = vmatmul.mubr.f32.gmra.mxu0 %v1203
    %v1272 = vpop.f32.mrf.mxu0
    %v1273 = vadd.f32 0.0, %v1272
    %v1274 = vpop.f32.mrf.mxu0
    %1275 = vdwg.mxu0
    %v1276 = vadd.f32 %v1205, %v1273
    %v1277 = vtanh.pop %v1276
    %1278 = vst [vmem:[%s515] sm:$0xff] %v1277
    %v1279 = vld [vmem:[%s517] sm:$0xff]
    %1280 = vmatprep.subr.mxu0 0.0
    %1281 = vmatpush1.msra.mxu0 %v928
    %1282 = vmatprep.subr.mxu0 0.0
    %1283 = vmatpush1.msra.mxu0 %v927
    %1284 = vmatprep.subr.mxu0 0.0
    %1285 = vmatpush1.msra.mxu0 %v926
    %1286 = vmatprep.subr.mxu0 0.0
    %1287 = vmatpush1.msra.mxu0 %v925
    %1288 = vmatprep.subr.mxu0 0.0
    %1289 = vmatpush1.msra.mxu0 %v924
    %1290 = vmatprep.subr.mxu0 0.0
    %1291 = vmatpush1.msra.mxu0 %v923
    %1292 = vmatprep.subr.mxu0 0.0
    %1293 = vmatpush1.msra.mxu0 %v922
    %1294 = vmatprep.subr.mxu0 0.0
    %1295 = vmatpush1.msra.mxu0 %v921
    %1296 = vmatprep.subr.mxu0 0.0
    %1297 = vmatpush1.msra.mxu0 %v920
    %1298 = vmatprep.subr.mxu0 0.0
    %1299 = vmatpush1.msra.mxu0 %v919
    %1300 = vmatprep.subr.mxu0 0.0
    %1301 = vmatpush1.msra.mxu0 %v918
    %1302 = vmatprep.subr.mxu0 0.0
    %1303 = vmatpush1.msra.mxu0 %v917
    %1304 = vmatprep.subr.mxu0 0.0
    %1305 = vmatpush1.msra.mxu0 %v916
    %1306 = vmatprep.subr.mxu0 0.0
    %1307 = vmatpush1.msra.mxu0 %v915
    %1308 = vmatprep.subr.mxu0 0.0
    %1309 = vmatpush1.msra.mxu0 %v914
    %1310 = vmatprep.subr.mxu0 0.0
    %1311 = vmatpush1.msra.mxu0 %v913
    %1312 = vmatprep.subr.mxu0 0.0
    %1313 = vmatpush2.msra.mxu0 0.0
    %1314 = vmatprep.subr.mxu0 0.0
    %1315 = vmatpush2.msra.mxu0 0.0
    %1316 = vmatprep.subr.mxu0 0.0
    %1317 = vmatpush2.msra.mxu0 0.0
    %1318 = vmatprep.subr.mxu0 0.0
    %1319 = vmatpush2.msra.mxu0 0.0
    %1320 = vmatprep.subr.mxu0 0.0
    %1321 = vmatpush2.msra.mxu0 0.0
    %1322 = vmatprep.subr.mxu0 0.0
    %1323 = vmatpush2.msra.mxu0 0.0
    %1324 = vmatprep.subr.mxu0 0.0
    %1325 = vmatpush2.msra.mxu0 0.0
    %1326 = vmatprep.subr.mxu0 0.0
    %1327 = vmatpush2.msra.mxu0 0.0
    %1328 = vmatprep.subr.mxu0 0.0
    %1329 = vmatpush2.msra.mxu0 0.0
    %1330 = vmatprep.subr.mxu0 0.0
    %1331 = vmatpush2.msra.mxu0 0.0
    %1332 = vmatprep.subr.mxu0 0.0
    %1333 = vmatpush2.msra.mxu0 0.0
    %1334 = vmatprep.subr.mxu0 0.0
    %1335 = vmatpush2.msra.mxu0 0.0
    %1336 = vmatprep.subr.mxu0 0.0
    %1337 = vmatpush2.msra.mxu0 0.0
    %1338 = vmatprep.subr.mxu0 0.0
    %1339 = vmatpush2.msra.mxu0 0.0
    %1340 = vmatprep.subr.mxu0 0.0
    %1341 = vmatpush2.msra.mxu0 0.0
    %1342 = vmatprep.subr.mxu0 0.0
    %1343 = vmatpush2.msra.mxu0 0.0
    %1344 = vmatprep.mubr.f32.mxu0 0.0
    %1345 = vmatmul.mubr.f32.gmra.mxu0 %v1277
    %v1346 = vpop.f32.mrf.mxu0
    %v1347 = vadd.f32 0.0, %v1346
    %v1348 = vpop.f32.mrf.mxu0
    %1349 = vdwg.mxu0
    %v1350 = vadd.f32 %v1279, %v1347
    %v1351 = vtanh.pop %v1350
    %1352 = vst [vmem:[%s591] sm:$0xff] %v1351
    %v1353 = vld [vmem:[%s593] sm:$0xff]
    %1354 = vmatprep.subr.mxu0 0.0
    %1355 = vmatpush1.msra.mxu0 %v928
    %1356 = vmatprep.subr.mxu0 0.0
    %1357 = vmatpush1.msra.mxu0 %v927
    %1358 = vmatprep.subr.mxu0 0.0
    %1359 = vmatpush1.msra.mxu0 %v926
    %1360 = vmatprep.subr.mxu0 0.0
    %1361 = vmatpush1.msra.mxu0 %v925
    %1362 = vmatprep.subr.mxu0 0.0
    %1363 = vmatpush1.msra.mxu0 %v924
    %1364 = vmatprep.subr.mxu0 0.0
    %1365 = vmatpush1.msra.mxu0 %v923
    %1366 = vmatprep.subr.mxu0 0.0
    %1367 = vmatpush1.msra.mxu0 %v922
    %1368 = vmatprep.subr.mxu0 0.0
    %1369 = vmatpush1.msra.mxu0 %v921
    %1370 = vmatprep.subr.mxu0 0.0
    %1371 = vmatpush1.msra.mxu0 %v920
    %1372 = vmatprep.subr.mxu0 0.0
    %1373 = vmatpush1.msra.mxu0 %v919
    %1374 = vmatprep.subr.mxu0 0.0
    %1375 = vmatpush1.msra.mxu0 %v918
    %1376 = vmatprep.subr.mxu0 0.0
    %1377 = vmatpush1.msra.mxu0 %v917
    %1378 = vmatprep.subr.mxu0 0.0
    %1379 = vmatpush1.msra.mxu0 %v916
    %1380 = vmatprep.subr.mxu0 0.0
    %1381 = vmatpush1.msra.mxu0 %v915
    %1382 = vmatprep.subr.mxu0 0.0
    %1383 = vmatpush1.msra.mxu0 %v914
    %1384 = vmatprep.subr.mxu0 0.0
    %1385 = vmatpush1.msra.mxu0 %v913
    %1386 = vmatprep.subr.mxu0 0.0
    %1387 = vmatpush2.msra.mxu0 0.0
    %1388 = vmatprep.subr.mxu0 0.0
    %1389 = vmatpush2.msra.mxu0 0.0
    %1390 = vmatprep.subr.mxu0 0.0
    %1391 = vmatpush2.msra.mxu0 0.0
    %1392 = vmatprep.subr.mxu0 0.0
    %1393 = vmatpush2.msra.mxu0 0.0
    %1394 = vmatprep.subr.mxu0 0.0
    %1395 = vmatpush2.msra.mxu0 0.0
    %1396 = vmatprep.subr.mxu0 0.0
    %1397 = vmatpush2.msra.mxu0 0.0
    %1398 = vmatprep.subr.mxu0 0.0
    %1399 = vmatpush2.msra.mxu0 0.0
    %1400 = vmatprep.subr.mxu0 0.0
    %1401 = vmatpush2.msra.mxu0 0.0
    %1402 = vmatprep.subr.mxu0 0.0
    %1403 = vmatpush2.msra.mxu0 0.0
    %1404 = vmatprep.subr.mxu0 0.0
    %1405 = vmatpush2.msra.mxu0 0.0
    %1406 = vmatprep.subr.mxu0 0.0
    %1407 = vmatpush2.msra.mxu0 0.0
    %1408 = vmatprep.subr.mxu0 0.0
    %1409 = vmatpush2.msra.mxu0 0.0
    %1410 = vmatprep.subr.mxu0 0.0
    %1411 = vmatpush2.msra.mxu0 0.0
    %1412 = vmatprep.subr.mxu0 0.0
    %1413 = vmatpush2.msra.mxu0 0.0
    %1414 = vmatprep.subr.mxu0 0.0
    %1415 = vmatpush2.msra.mxu0 0.0
    %1416 = vmatprep.subr.mxu0 0.0
    %1417 = vmatpush2.msra.mxu0 0.0
    %1418 = vmatprep.mubr.f32.mxu0 0.0
    %1419 = vmatmul.mubr.f32.gmra.mxu0 %v1351
    %v1420 = vpop.f32.mrf.mxu0
    %v1421 = vadd.f32 0.0, %v1420
    %v1422 = vpop.f32.mrf.mxu0
    %1423 = vdwg.mxu0
    %v1424 = vadd.f32 %v1353, %v1421
    %v1425 = vtanh.pop %v1424
    %1426 = vst [vmem:[%s667] sm:$0xff] %v1425
    %v1427 = vld [vmem:[%s669] sm:$0xff]
    %1428 = vmatprep.subr.mxu0 0.0
    %1429 = vmatpush1.msra.mxu0 %v928
    %1430 = vmatprep.subr.mxu0 0.0
    %1431 = vmatpush1.msra.mxu0 %v927
    %1432 = vmatprep.subr.mxu0 0.0
    %1433 = vmatpush1.msra.mxu0 %v926
    %1434 = vmatprep.subr.mxu0 0.0
    %1435 = vmatpush1.msra.mxu0 %v925
    %1436 = vmatprep.subr.mxu0 0.0
    %1437 = vmatpush1.msra.mxu0 %v924
    %1438 = vmatprep.subr.mxu0 0.0
    %1439 = vmatpush1.msra.mxu0 %v923
    %1440 = vmatprep.subr.mxu0 0.0
    %1441 = vmatpush1.msra.mxu0 %v922
    %1442 = vmatprep.subr.mxu0 0.0
    %1443 = vmatpush1.msra.mxu0 %v921
    %1444 = vmatprep.subr.mxu0 0.0
    %1445 = vmatpush1.msra.mxu0 %v920
    %1446 = vmatprep.subr.mxu0 0.0
    %1447 = vmatpush1.msra.mxu0 %v919
    %1448 = vmatprep.subr.mxu0 0.0
    %1449 = vmatpush1.msra.mxu0 %v918
    %1450 = vmatprep.subr.mxu0 0.0
    %1451 = vmatpush1.msra.mxu0 %v917
    %1452 = vmatprep.subr.mxu0 0.0
    %1453 = vmatpush1.msra.mxu0 %v916
    %1454 = vmatprep.subr.mxu0 0.0
    %1455 = vmatpush1.msra.mxu0 %v915
    %1456 = vmatprep.subr.mxu0 0.0
    %1457 = vmatpush1.msra.mxu0 %v914
    %1458 = vmatprep.subr.mxu0 0.0
    %1459 = vmatpush1.msra.mxu0 %v913
    %1460 = vmatprep.subr.mxu0 0.0
    %1461 = vmatpush2.msra.mxu0 0.0
    %1462 = vmatprep.subr.mxu0 0.0
    %1463 = vmatpush2.msra.mxu0 0.0
    %1464 = vmatprep.subr.mxu0 0.0
    %1465 = vmatpush2.msra.mxu0 0.0
    %1466 = vmatprep.subr.mxu0 0.0
    %1467 = vmatpush2.msra.mxu0 0.0
    %1468 = vmatprep.subr.mxu0 0.0
    %1469 = vmatpush2.msra.mxu0 0.0
    %1470 = vmatprep.subr.mxu0 0.0
    %1471 = vmatpush2.msra.mxu0 0.0
    %1472 = vmatprep.subr.mxu0 0.0
    %1473 = vmatpush2.msra.mxu0 0.0
    %1474 = vmatprep.subr.mxu0 0.0
    %1475 = vmatpush2.msra.mxu0 0.0
    %1476 = vmatprep.subr.mxu0 0.0
    %1477 = vmatpush2.msra.mxu0 0.0
    %1478 = vmatprep.subr.mxu0 0.0
    %1479 = vmatpush2.msra.mxu0 0.0
    %1480 = vmatprep.subr.mxu0 0.0
    %1481 = vmatpush2.msra.mxu0 0.0
    %1482 = vmatprep.subr.mxu0 0.0
    %1483 = vmatpush2.msra.mxu0 0.0
    %1484 = vmatprep.subr.mxu0 0.0
    %1485 = vmatpush2.msra.mxu0 0.0
    %1486 = vmatprep.subr.mxu0 0.0
    %1487 = vmatpush2.msra.mxu0 0.0
    %1488 = vmatprep.subr.mxu0 0.0
    %1489 = vmatpush2.msra.mxu0 0.0
    %1490 = vmatprep.subr.mxu0 0.0
    %1491 = vmatpush2.msra.mxu0 0.0
    %1492 = vmatprep.mubr.f32.mxu0 0.0
    %1493 = vmatmul.mubr.f32.gmra.mxu0 %v1425
    %v1494 = vpop.f32.mrf.mxu0
    %v1495 = vadd.f32 0.0, %v1494
    %v1496 = vpop.f32.mrf.mxu0
    %1497 = vdwg.mxu0
    %v1498 = vadd.f32 %v1427, %v1495
    %v1499 = vtanh.pop %v1498
    %1500 = vst [vmem:[%s743] sm:$0xff] %v1499
    %v1501 = vld [vmem:[%s745] sm:$0xff]
    %1502 = vmatprep.subr.mxu0 0.0
    %1503 = vmatpush1.msra.mxu0 %v928
    %1504 = vmatprep.subr.mxu0 0.0
    %1505 = vmatpush1.msra.mxu0 %v927
    %1506 = vmatprep.subr.mxu0 0.0
    %1507 = vmatpush1.msra.mxu0 %v926
    %1508 = vmatprep.subr.mxu0 0.0
    %1509 = vmatpush1.msra.mxu0 %v925
    %1510 = vmatprep.subr.mxu0 0.0
    %1511 = vmatpush1.msra.mxu0 %v924
    %1512 = vmatprep.subr.mxu0 0.0
    %1513 = vmatpush1.msra.mxu0 %v923
    %1514 = vmatprep.subr.mxu0 0.0
    %1515 = vmatpush1.msra.mxu0 %v922
    %1516 = vmatprep.subr.mxu0 0.0
    %1517 = vmatpush1.msra.mxu0 %v921
    %1518 = vmatprep.subr.mxu0 0.0
    %1519 = vmatpush1.msra.mxu0 %v920
    %1520 = vmatprep.subr.mxu0 0.0
    %1521 = vmatpush1.msra.mxu0 %v919
    %1522 = vmatprep.subr.mxu0 0.0
    %1523 = vmatpush1.msra.mxu0 %v918
    %1524 = vmatprep.subr.mxu0 0.0
    %1525 = vmatpush1.msra.mxu0 %v917
    %1526 = vmatprep.subr.mxu0 0.0
    %1527 = vmatpush1.msra.mxu0 %v916
    %1528 = vmatprep.subr.mxu0 0.0
    %1529 = vmatpush1.msra.mxu0 %v915
    %1530 = vmatprep.subr.mxu0 0.0
    %1531 = vmatpush1.msra.mxu0 %v914
    %1532 = vmatprep.subr.mxu0 0.0
    %1533 = vmatpush1.msra.mxu0 %v913
    %1534 = vmatprep.subr.mxu0 0.0
    %1535 = vmatpush2.msra.mxu0 0.0
    %1536 = vmatprep.subr.mxu0 0.0
    %1537 = vmatpush2.msra.mxu0 0.0
    %1538 = vmatprep.subr.mxu0 0.0
    %1539 = vmatpush2.msra.mxu0 0.0
    %1540 = vmatprep.subr.mxu0 0.0
    %1541 = vmatpush2.msra.mxu0 0.0
    %1542 = vmatprep.subr.mxu0 0.0
    %1543 = vmatpush2.msra.mxu0 0.0
    %1544 = vmatprep.subr.mxu0 0.0
    %1545 = vmatpush2.msra.mxu0 0.0
    %1546 = vmatprep.subr.mxu0 0.0
    %1547 = vmatpush2.msra.mxu0 0.0
    %1548 = vmatprep.subr.mxu0 0.0
    %1549 = vmatpush2.msra.mxu0 0.0
    %1550 = vmatprep.subr.mxu0 0.0
    %1551 = vmatpush2.msra.mxu0 0.0
    %1552 = vmatprep.subr.mxu0 0.0
    %1553 = vmatpush2.msra.mxu0 0.0
    %1554 = vmatprep.subr.mxu0 0.0
    %1555 = vmatpush2.msra.mxu0 0.0
    %1556 = vmatprep.subr.mxu0 0.0
    %1557 = vmatpush2.msra.mxu0 0.0
    %1558 = vmatprep.subr.mxu0 0.0
    %1559 = vmatpush2.msra.mxu0 0.0
    %1560 = vmatprep.subr.mxu0 0.0
    %1561 = vmatpush2.msra.mxu0 0.0
    %1562 = vmatprep.subr.mxu0 0.0
    %1563 = vmatpush2.msra.mxu0 0.0
    %1564 = vmatprep.subr.mxu0 0.0
    %1565 = vmatpush2.msra.mxu0 0.0
    %1566 = vmatprep.mubr.f32.mxu0 0.0
    %1567 = vmatmul.mubr.f32.gmra.mxu0 %v1499
    %v1568 = vpop.f32.mrf.mxu0
    %v1569 = vadd.f32 0.0, %v1568
    %v1570 = vpop.f32.mrf.mxu0
    %1571 = vdwg.mxu0
    %v1572 = vadd.f32 %v1501, %v1569
    %v1573 = vtanh.pop %v1572
    %1574 = vst [vmem:[%s819] sm:$0xff] %v1573
    %v1575 = vld [vmem:[%s821] sm:$0xff]
    %1576 = vmatprep.subr.mxu0 0.0
    %1577 = vmatpush1.msra.mxu0 %v928
    %1578 = vmatprep.subr.mxu0 0.0
    %1579 = vmatpush1.msra.mxu0 %v927
    %1580 = vmatprep.subr.mxu0 0.0
    %1581 = vmatpush1.msra.mxu0 %v926
    %1582 = vmatprep.subr.mxu0 0.0
    %1583 = vmatpush1.msra.mxu0 %v925
    %1584 = vmatprep.subr.mxu0 0.0
    %1585 = vmatpush1.msra.mxu0 %v924
    %1586 = vmatprep.subr.mxu0 0.0
    %1587 = vmatpush1.msra.mxu0 %v923
    %1588 = vmatprep.subr.mxu0 0.0
    %1589 = vmatpush1.msra.mxu0 %v922
    %1590 = vmatprep.subr.mxu0 0.0
    %1591 = vmatpush1.msra.mxu0 %v921
    %1592 = vmatprep.subr.mxu0 0.0
    %1593 = vmatpush1.msra.mxu0 %v920
    %1594 = vmatprep.subr.mxu0 0.0
    %1595 = vmatpush1.msra.mxu0 %v919
    %1596 = vmatprep.subr.mxu0 0.0
    %1597 = vmatpush1.msra.mxu0 %v918
    %1598 = vmatprep.subr.mxu0 0.0
    %1599 = vmatpush1.msra.mxu0 %v917
    %1600 = vmatprep.subr.mxu0 0.0
    %1601 = vmatpush1.msra.mxu0 %v916
    %1602 = vmatprep.subr.mxu0 0.0
    %1603 = vmatpush1.msra.mxu0 %v915
    %1604 = vmatprep.subr.mxu0 0.0
    %1605 = vmatpush1.msra.mxu0 %v914
    %1606 = vmatprep.subr.mxu0 0.0
    %1607 = vmatpush1.msra.mxu0 %v913
    %1608 = vmatprep.subr.mxu0 0.0
    %1609 = vmatpush2.msra.mxu0 0.0
    %1610 = vmatprep.subr.mxu0 0.0
    %1611 = vmatpush2.msra.mxu0 0.0
    %1612 = vmatprep.subr.mxu0 0.0
    %1613 = vmatpush2.msra.mxu0 0.0
    %1614 = vmatprep.subr.mxu0 0.0
    %1615 = vmatpush2.msra.mxu0 0.0
    %1616 = vmatprep.subr.mxu0 0.0
    %1617 = vmatpush2.msra.mxu0 0.0
    %1618 = vmatprep.subr.mxu0 0.0
    %1619 = vmatpush2.msra.mxu0 0.0
    %1620 = vmatprep.subr.mxu0 0.0
    %1621 = vmatpush2.msra.mxu0 0.0
    %1622 = vmatprep.subr.mxu0 0.0
    %1623 = vmatpush2.msra.mxu0 0.0
    %1624 = vmatprep.subr.mxu0 0.0
    %1625 = vmatpush2.msra.mxu0 0.0
    %1626 = vmatprep.subr.mxu0 0.0
    %1627 = vmatpush2.msra.mxu0 0.0
    %1628 = vmatprep.subr.mxu0 0.0
    %1629 = vmatpush2.msra.mxu0 0.0
    %1630 = vmatprep.subr.mxu0 0.0
    %1631 = vmatpush2.msra.mxu0 0.0
    %1632 = vmatprep.subr.mxu0 0.0
    %1633 = vmatpush2.msra.mxu0 0.0
    %1634 = vmatprep.subr.mxu0 0.0
    %1635 = vmatpush2.msra.mxu0 0.0
    %1636 = vmatprep.subr.mxu0 0.0
    %1637 = vmatpush2.msra.mxu0 0.0
    %1638 = vmatprep.subr.mxu0 0.0
    %1639 = vmatpush2.msra.mxu0 0.0
    %1640 = vmatprep.mubr.f32.mxu0 0.0
    %1641 = vmatmul.mubr.f32.gmra.mxu0 %v1573
    %v1642 = vpop.f32.mrf.mxu0
    %v1643 = vadd.f32 0.0, %v1642
    %v1644 = vpop.f32.mrf.mxu0
    %1645 = vdwg.mxu0
    %v1646 = vadd.f32 %v1575, %v1643
    %v1647 = vtanh.pop %v1646
    %1648 = vst [vmem:[%s895] sm:$0xff] %v1647
    %v1649 = vld [vmem:[#allocation12] sm:$0xff]
    %v1650 = vld [vmem:[#allocation12 + $0x8] sm:$0xff]
    %v1651 = vld [vmem:[#allocation12 + $0x10] sm:$0xff]
    %v1652 = vld [vmem:[#allocation12 + $0x18] sm:$0xff]
    %v1653 = vld [vmem:[#allocation12 + $0x20] sm:$0xff]
    %v1654 = vld [vmem:[#allocation12 + $0x28] sm:$0xff]
    %v1655 = vld [vmem:[#allocation12 + $0x30] sm:$0xff]
    %v1656 = vld [vmem:[#allocation12 + $0x38] sm:$0xff]
    %v1657 = vld [vmem:[#allocation12 + $0x40] sm:$0xff]
    %v1658 = vld [vmem:[#allocation12 + $0x48] sm:$0xff]
    %v1659 = vld [vmem:[#allocation12 + $0x50] sm:$0xff]
    %v1660 = vld [vmem:[#allocation12 + $0x58] sm:$0xff]
    %v1661 = vld [vmem:[#allocation12 + $0x60] sm:$0xff]
    %v1662 = vld [vmem:[#allocation12 + $0x68] sm:$0xff]
    %v1663 = vld [vmem:[#allocation12 + $0x70] sm:$0xff]
    %v1664 = vld [vmem:[#allocation12 + $0x78] sm:$0xff]
    %v1665 = vld [vmem:[#allocation14] sm:$0xff]
    %v1666 = vld [vmem:[#allocation14 + $0x8] sm:$0xff]
    %v1667 = vld [vmem:[#allocation14 + $0x10] sm:$0xff]
    %v1668 = vld [vmem:[#allocation14 + $0x18] sm:$0xff]
    %v1669 = vld [vmem:[#allocation14 + $0x20] sm:$0xff]
    %v1670 = vld [vmem:[#allocation14 + $0x28] sm:$0xff]
    %v1671 = vld [vmem:[#allocation14 + $0x30] sm:$0xff]
    %v1672 = vld [vmem:[#allocation14 + $0x38] sm:$0xff]
    %v1673 = vld [vmem:[#allocation14 + $0x40] sm:$0xff]
    %v1674 = vld [vmem:[#allocation14 + $0x48] sm:$0xff]
    %v1675 = vld [vmem:[#allocation14 + $0x50] sm:$0xff]
    %v1676 = vld [vmem:[#allocation14 + $0x58] sm:$0xff]
    %v1677 = vld [vmem:[#allocation14 + $0x60] sm:$0xff]
    %v1678 = vld [vmem:[#allocation14 + $0x68] sm:$0xff]
    %v1679 = vld [vmem:[#allocation14 + $0x70] sm:$0xff]
    %v1680 = vld [vmem:[#allocation14 + $0x78] sm:$0xff]
    %v1681 = vld [vmem:[%s9] sm:$0x1]
    %v1682 = vld [vmem:[#allocation15] sm:$0xff]
    %v1683 = vld [vmem:[#allocation15 + $0x8] sm:$0xff]
    %v1684 = vld [vmem:[#allocation15 + $0x10] sm:$0xff]
    %v1685 = vld [vmem:[#allocation15 + $0x18] sm:$0xff]
    %v1686 = vld [vmem:[#allocation15 + $0x20] sm:$0xff]
    %v1687 = vld [vmem:[#allocation15 + $0x28] sm:$0xff]
    %v1688 = vld [vmem:[#allocation15 + $0x30] sm:$0xff]
    %v1689 = vld [vmem:[#allocation15 + $0x38] sm:$0xff]
    %v1691 = vlaneseq
    %v1692 = vshrl.u32 %v1691, 7
    %v1693 = vsub.s32 0, %v1692
    %v1694 = vrot.slane %v1681, %v1693
    %1696 = vmatprep.subr.mxu0 0.0
    %1697 = vmatpush1.msra.mxu0 %v1664
    %1698 = vmatprep.subr.mxu0 0.0
    %1699 = vmatpush1.msra.mxu0 %v1663
    %1700 = vmatprep.subr.mxu0 0.0
    %1701 = vmatpush1.msra.mxu0 %v1662
    %1702 = vmatprep.subr.mxu0 0.0
    %1703 = vmatpush1.msra.mxu0 %v1661
    %1704 = vmatprep.subr.mxu0 0.0
    %1705 = vmatpush1.msra.mxu0 %v1660
    %1706 = vmatprep.subr.mxu0 0.0
    %1707 = vmatpush1.msra.mxu0 %v1659
    %1708 = vmatprep.subr.mxu0 0.0
    %1709 = vmatpush1.msra.mxu0 %v1658
    %1710 = vmatprep.subr.mxu0 0.0
    %1711 = vmatpush1.msra.mxu0 %v1657
    %1712 = vmatprep.subr.mxu0 0.0
    %1713 = vmatpush1.msra.mxu0 %v1656
    %1714 = vmatprep.subr.mxu0 0.0
    %1715 = vmatpush1.msra.mxu0 %v1655
    %1716 = vmatprep.subr.mxu0 0.0
    %1717 = vmatpush1.msra.mxu0 %v1654
    %1718 = vmatprep.subr.mxu0 0.0
    %1719 = vmatpush1.msra.mxu0 %v1653
    %1720 = vmatprep.subr.mxu0 0.0
    %1721 = vmatpush1.msra.mxu0 %v1652
    %1722 = vmatprep.subr.mxu0 0.0
    %1723 = vmatpush1.msra.mxu0 %v1651
    %1724 = vmatprep.subr.mxu0 0.0
    %1725 = vmatpush1.msra.mxu0 %v1650
    %1726 = vmatprep.subr.mxu0 0.0
    %1727 = vmatpush1.msra.mxu0 %v1649
    %1728 = vmatprep.subr.mxu0 0.0
    %1729 = vmatpush2.msra.mxu0 0.0
    %1730 = vmatprep.subr.mxu0 0.0
    %1731 = vmatpush2.msra.mxu0 0.0
    %1732 = vmatprep.subr.mxu0 0.0
    %1733 = vmatpush2.msra.mxu0 0.0
    %1734 = vmatprep.subr.mxu0 0.0
    %1735 = vmatpush2.msra.mxu0 0.0
    %1736 = vmatprep.subr.mxu0 0.0
    %1737 = vmatpush2.msra.mxu0 0.0
    %1738 = vmatprep.subr.mxu0 0.0
    %1739 = vmatpush2.msra.mxu0 0.0
    %1740 = vmatprep.subr.mxu0 0.0
    %1741 = vmatpush2.msra.mxu0 0.0
    %1742 = vmatprep.subr.mxu0 0.0
    %1743 = vmatpush2.msra.mxu0 0.0
    %1744 = vmatprep.subr.mxu0 0.0
    %1745 = vmatpush2.msra.mxu0 0.0
    %1746 = vmatprep.subr.mxu0 0.0
    %1747 = vmatpush2.msra.mxu0 0.0
    %1748 = vmatprep.subr.mxu0 0.0
    %1749 = vmatpush2.msra.mxu0 0.0
    %1750 = vmatprep.subr.mxu0 0.0
    %1751 = vmatpush2.msra.mxu0 0.0
    %1752 = vmatprep.subr.mxu0 0.0
    %1753 = vmatpush2.msra.mxu0 0.0
    %1754 = vmatprep.subr.mxu0 0.0
    %1755 = vmatpush2.msra.mxu0 0.0
    %1756 = vmatprep.subr.mxu0 0.0
    %1757 = vmatpush2.msra.mxu0 0.0
    %1758 = vmatprep.subr.mxu0 0.0
    %1759 = vmatpush2.msra.mxu0 0.0
    %1760 = vmatprep.mubr.f32.mxu0 0.0
    %1761 = vmatmul.mubr.f32.gmra.mxu0 %v1682
    %v1762 = vpop.f32.mrf.mxu0
    %v1763 = vadd.f32 %v1694, %v1762
    %v1764 = vpop.f32.mrf.mxu0
    %1765 = vmatprep.mubr.f32.mxu0 0.0
    %1766 = vmatmul.mubr.f32.gmra.mxu0 %v1683
    %v1767 = vpop.f32.mrf.mxu0
    %v1768 = vadd.f32 %v1694, %v1767
    %v1769 = vpop.f32.mrf.mxu0
    %1770 = vmatprep.mubr.f32.mxu0 0.0
    %1771 = vmatmul.mubr.f32.gmra.mxu0 %v1684
    %v1772 = vpop.f32.mrf.mxu0
    %v1773 = vadd.f32 %v1694, %v1772
    %v1774 = vpop.f32.mrf.mxu0
    %1775 = vmatprep.mubr.f32.mxu0 0.0
    %1776 = vmatmul.mubr.f32.gmra.mxu0 %v1685
    %v1777 = vpop.f32.mrf.mxu0
    %v1778 = vadd.f32 %v1694, %v1777
    %v1779 = vpop.f32.mrf.mxu0
    %1780 = vmatprep.mubr.f32.mxu0 0.0
    %1781 = vmatmul.mubr.f32.gmra.mxu0 %v1686
    %v1782 = vpop.f32.mrf.mxu0
    %v1783 = vadd.f32 %v1694, %v1782
    %v1784 = vpop.f32.mrf.mxu0
    %1785 = vmatprep.mubr.f32.mxu0 0.0
    %1786 = vmatmul.mubr.f32.gmra.mxu0 %v1687
    %v1787 = vpop.f32.mrf.mxu0
    %v1788 = vadd.f32 %v1694, %v1787
    %v1789 = vpop.f32.mrf.mxu0
    %1790 = vmatprep.mubr.f32.mxu0 0.0
    %1791 = vmatmul.mubr.f32.gmra.mxu0 %v1688
    %v1792 = vpop.f32.mrf.mxu0
    %v1793 = vadd.f32 %v1694, %v1792
    %v1794 = vpop.f32.mrf.mxu0
    %1795 = vmatprep.mubr.f32.mxu0 0.0
    %1796 = vmatmul.mubr.f32.gmra.mxu0 %v1689
    %v1797 = vpop.f32.mrf.mxu0
    %v1798 = vadd.f32 %v1694, %v1797
    %v1799 = vpop.f32.mrf.mxu0
    %1800 = vdwg.mxu0
    %1801 = vst [vmem:[#allocation2] sm:$0xff] %v1763
    %1802 = vst [vmem:[#allocation2 + $0x8] sm:$0xff] %v1768
    %1803 = vst [vmem:[#allocation2 + $0x10] sm:$0xff] %v1773
    %1804 = vst [vmem:[#allocation2 + $0x18] sm:$0xff] %v1778
    %1805 = vst [vmem:[#allocation2 + $0x20] sm:$0xff] %v1783
    %1806 = vst [vmem:[#allocation2 + $0x28] sm:$0xff] %v1788
    %1807 = vst [vmem:[#allocation2 + $0x30] sm:$0xff] %v1793
    %1808 = vst [vmem:[#allocation2 + $0x38] sm:$0xff] %v1798
    %v1809 = vld [vmem:[#allocation2] sm:$0xff]
    %1810 = vmatprep.subr.mxu0 0.0
    %1811 = vmatpush1.msra.mxu0 %v1680
    %1812 = vmatprep.subr.mxu0 0.0
    %1813 = vmatpush1.msra.mxu0 %v1679
    %1814 = vmatprep.subr.mxu0 0.0
    %1815 = vmatpush1.msra.mxu0 %v1678
    %1816 = vmatprep.subr.mxu0 0.0
    %1817 = vmatpush1.msra.mxu0 %v1677
    %1818 = vmatprep.subr.mxu0 0.0
    %1819 = vmatpush1.msra.mxu0 %v1676
    %1820 = vmatprep.subr.mxu0 0.0
    %1821 = vmatpush1.msra.mxu0 %v1675
    %1822 = vmatprep.subr.mxu0 0.0
    %1823 = vmatpush1.msra.mxu0 %v1674
    %1824 = vmatprep.subr.mxu0 0.0
    %1825 = vmatpush1.msra.mxu0 %v1673
    %1826 = vmatprep.subr.mxu0 0.0
    %1827 = vmatpush1.msra.mxu0 %v1672
    %1828 = vmatprep.subr.mxu0 0.0
    %1829 = vmatpush1.msra.mxu0 %v1671
    %1830 = vmatprep.subr.mxu0 0.0
    %1831 = vmatpush1.msra.mxu0 %v1670
    %1832 = vmatprep.subr.mxu0 0.0
    %1833 = vmatpush1.msra.mxu0 %v1669
    %1834 = vmatprep.subr.mxu0 0.0
    %1835 = vmatpush1.msra.mxu0 %v1668
    %1836 = vmatprep.subr.mxu0 0.0
    %1837 = vmatpush1.msra.mxu0 %v1667
    %1838 = vmatprep.subr.mxu0 0.0
    %1839 = vmatpush1.msra.mxu0 %v1666
    %1840 = vmatprep.subr.mxu0 0.0
    %1841 = vmatpush1.msra.mxu0 %v1665
    %1842 = vmatprep.subr.mxu0 0.0
    %1843 = vmatpush2.msra.mxu0 0.0
    %1844 = vmatprep.subr.mxu0 0.0
    %1845 = vmatpush2.msra.mxu0 0.0
    %1846 = vmatprep.subr.mxu0 0.0
    %1847 = vmatpush2.msra.mxu0 0.0
    %1848 = vmatprep.subr.mxu0 0.0
    %1849 = vmatpush2.msra.mxu0 0.0
    %1850 = vmatprep.subr.mxu0 0.0
    %1851 = vmatpush2.msra.mxu0 0.0
    %1852 = vmatprep.subr.mxu0 0.0
    %1853 = vmatpush2.msra.mxu0 0.0
    %1854 = vmatprep.subr.mxu0 0.0
    %1855 = vmatpush2.msra.mxu0 0.0
    %1856 = vmatprep.subr.mxu0 0.0
    %1857 = vmatpush2.msra.mxu0 0.0
    %1858 = vmatprep.subr.mxu0 0.0
    %1859 = vmatpush2.msra.mxu0 0.0
    %1860 = vmatprep.subr.mxu0 0.0
    %1861 = vmatpush2.msra.mxu0 0.0
    %1862 = vmatprep.subr.mxu0 0.0
    %1863 = vmatpush2.msra.mxu0 0.0
    %1864 = vmatprep.subr.mxu0 0.0
    %1865 = vmatpush2.msra.mxu0 0.0
    %1866 = vmatprep.subr.mxu0 0.0
    %1867 = vmatpush2.msra.mxu0 0.0
    %1868 = vmatprep.subr.mxu0 0.0
    %1869 = vmatpush2.msra.mxu0 0.0
    %1870 = vmatprep.subr.mxu0 0.0
    %1871 = vmatpush2.msra.mxu0 0.0
    %1872 = vmatprep.subr.mxu0 0.0
    %1873 = vmatpush2.msra.mxu0 0.0
    %1874 = vmatprep.mubr.f32.mxu0 0.0
    %1875 = vmatmul.mubr.f32.gmra.mxu0 0.0
    %v1876 = vpop.f32.mrf.mxu0
    %v1877 = vadd.f32 0.0, %v1876
    %v1878 = vpop.f32.mrf.mxu0
    %1879 = vdwg.mxu0
    %v1880 = vadd.f32 %v1809, %v1877
    %v1881 = vtanh.pop %v1880
    %1882 = vst [vmem:[#allocation15] sm:$0xff] %v1881
    %v1883 = vld [vmem:[%s365] sm:$0xff]
    %1884 = vmatprep.subr.mxu0 0.0
    %1885 = vmatpush1.msra.mxu0 %v1680
    %1886 = vmatprep.subr.mxu0 0.0
    %1887 = vmatpush1.msra.mxu0 %v1679
    %1888 = vmatprep.subr.mxu0 0.0
    %1889 = vmatpush1.msra.mxu0 %v1678
    %1890 = vmatprep.subr.mxu0 0.0
    %1891 = vmatpush1.msra.mxu0 %v1677
    %1892 = vmatprep.subr.mxu0 0.0
    %1893 = vmatpush1.msra.mxu0 %v1676
    %1894 = vmatprep.subr.mxu0 0.0
    %1895 = vmatpush1.msra.mxu0 %v1675
    %1896 = vmatprep.subr.mxu0 0.0
    %1897 = vmatpush1.msra.mxu0 %v1674
    %1898 = vmatprep.subr.mxu0 0.0
    %1899 = vmatpush1.msra.mxu0 %v1673
    %1900 = vmatprep.subr.mxu0 0.0
    %1901 = vmatpush1.msra.mxu0 %v1672
    %1902 = vmatprep.subr.mxu0 0.0
    %1903 = vmatpush1.msra.mxu0 %v1671
    %1904 = vmatprep.subr.mxu0 0.0
    %1905 = vmatpush1.msra.mxu0 %v1670
    %1906 = vmatprep.subr.mxu0 0.0
    %1907 = vmatpush1.msra.mxu0 %v1669
    %1908 = vmatprep.subr.mxu0 0.0
    %1909 = vmatpush1.msra.mxu0 %v1668
    %1910 = vmatprep.subr.mxu0 0.0
    %1911 = vmatpush1.msra.mxu0 %v1667
    %1912 = vmatprep.subr.mxu0 0.0
    %1913 = vmatpush1.msra.mxu0 %v1666
    %1914 = vmatprep.subr.mxu0 0.0
    %1915 = vmatpush1.msra.mxu0 %v1665
    %1916 = vmatprep.subr.mxu0 0.0
    %1917 = vmatpush2.msra.mxu0 0.0
    %1918 = vmatprep.subr.mxu0 0.0
    %1919 = vmatpush2.msra.mxu0 0.0
    %1920 = vmatprep.subr.mxu0 0.0
    %1921 = vmatpush2.msra.mxu0 0.0
    %1922 = vmatprep.subr.mxu0 0.0
    %1923 = vmatpush2.msra.mxu0 0.0
    %1924 = vmatprep.subr.mxu0 0.0
    %1925 = vmatpush2.msra.mxu0 0.0
    %1926 = vmatprep.subr.mxu0 0.0
    %1927 = vmatpush2.msra.mxu0 0.0
    %1928 = vmatprep.subr.mxu0 0.0
    %1929 = vmatpush2.msra.mxu0 0.0
    %1930 = vmatprep.subr.mxu0 0.0
    %1931 = vmatpush2.msra.mxu0 0.0
    %1932 = vmatprep.subr.mxu0 0.0
    %1933 = vmatpush2.msra.mxu0 0.0
    %1934 = vmatprep.subr.mxu0 0.0
    %1935 = vmatpush2.msra.mxu0 0.0
    %1936 = vmatprep.subr.mxu0 0.0
    %1937 = vmatpush2.msra.mxu0 0.0
    %1938 = vmatprep.subr.mxu0 0.0
    %1939 = vmatpush2.msra.mxu0 0.0
    %1940 = vmatprep.subr.mxu0 0.0
    %1941 = vmatpush2.msra.mxu0 0.0
    %1942 = vmatprep.subr.mxu0 0.0
    %1943 = vmatpush2.msra.mxu0 0.0
    %1944 = vmatprep.subr.mxu0 0.0
    %1945 = vmatpush2.msra.mxu0 0.0
    %1946 = vmatprep.subr.mxu0 0.0
    %1947 = vmatpush2.msra.mxu0 0.0
    %1948 = vmatprep.mubr.f32.mxu0 0.0
    %1949 = vmatmul.mubr.f32.gmra.mxu0 %v1881
    %v1950 = vpop.f32.mrf.mxu0
    %v1951 = vadd.f32 0.0, %v1950
    %v1952 = vpop.f32.mrf.mxu0
    %1953 = vdwg.mxu0
    %v1954 = vadd.f32 %v1883, %v1951
    %v1955 = vtanh.pop %v1954
    %1956 = vst [vmem:[%s439] sm:$0xff] %v1955
    %v1957 = vld [vmem:[%s441] sm:$0xff]
    %1958 = vmatprep.subr.mxu0 0.0
    %1959 = vmatpush1.msra.mxu0 %v1680
    %1960 = vmatprep.subr.mxu0 0.0
    %1961 = vmatpush1.msra.mxu0 %v1679
    %1962 = vmatprep.subr.mxu0 0.0
    %1963 = vmatpush1.msra.mxu0 %v1678
    %1964 = vmatprep.subr.mxu0 0.0
    %1965 = vmatpush1.msra.mxu0 %v1677
    %1966 = vmatprep.subr.mxu0 0.0
    %1967 = vmatpush1.msra.mxu0 %v1676
    %1968 = vmatprep.subr.mxu0 0.0
    %1969 = vmatpush1.msra.mxu0 %v1675
    %1970 = vmatprep.subr.mxu0 0.0
    %1971 = vmatpush1.msra.mxu0 %v1674
    %1972 = vmatprep.subr.mxu0 0.0
    %1973 = vmatpush1.msra.mxu0 %v1673
    %1974 = vmatprep.subr.mxu0 0.0
    %1975 = vmatpush1.msra.mxu0 %v1672
    %1976 = vmatprep.subr.mxu0 0.0
    %1977 = vmatpush1.msra.mxu0 %v1671
    %1978 = vmatprep.subr.mxu0 0.0
    %1979 = vmatpush1.msra.mxu0 %v1670
    %1980 = vmatprep.subr.mxu0 0.0
    %1981 = vmatpush1.msra.mxu0 %v1669
    %1982 = vmatprep.subr.mxu0 0.0
    %1983 = vmatpush1.msra.mxu0 %v1668
    %1984 = vmatprep.subr.mxu0 0.0
    %1985 = vmatpush1.msra.mxu0 %v1667
    %1986 = vmatprep.subr.mxu0 0.0
    %1987 = vmatpush1.msra.mxu0 %v1666
    %1988 = vmatprep.subr.mxu0 0.0
    %1989 = vmatpush1.msra.mxu0 %v1665
    %1990 = vmatprep.subr.mxu0 0.0
    %1991 = vmatpush2.msra.mxu0 0.0
    %1992 = vmatprep.subr.mxu0 0.0
    %1993 = vmatpush2.msra.mxu0 0.0
    %1994 = vmatprep.subr.mxu0 0.0
    %1995 = vmatpush2.msra.mxu0 0.0
    %1996 = vmatprep.subr.mxu0 0.0
    %1997 = vmatpush2.msra.mxu0 0.0
    %1998 = vmatprep.subr.mxu0 0.0
    %1999 = vmatpush2.msra.mxu0 0.0
    %2000 = vmatprep.subr.mxu0 0.0
    %2001 = vmatpush2.msra.mxu0 0.0
    %2002 = vmatprep.subr.mxu0 0.0
    %2003 = vmatpush2.msra.mxu0 0.0
    %2004 = vmatprep.subr.mxu0 0.0
    %2005 = vmatpush2.msra.mxu0 0.0
    %2006 = vmatprep.subr.mxu0 0.0
    %2007 = vmatpush2.msra.mxu0 0.0
    %2008 = vmatprep.subr.mxu0 0.0
    %2009 = vmatpush2.msra.mxu0 0.0
    %2010 = vmatprep.subr.mxu0 0.0
    %2011 = vmatpush2.msra.mxu0 0.0
    %2012 = vmatprep.subr.mxu0 0.0
    %2013 = vmatpush2.msra.mxu0 0.0
    %2014 = vmatprep.subr.mxu0 0.0
    %2015 = vmatpush2.msra.mxu0 0.0
    %2016 = vmatprep.subr.mxu0 0.0
    %2017 = vmatpush2.msra.mxu0 0.0
    %2018 = vmatprep.subr.mxu0 0.0
    %2019 = vmatpush2.msra.mxu0 0.0
    %2020 = vmatprep.subr.mxu0 0.0
    %2021 = vmatpush2.msra.mxu0 0.0
    %2022 = vmatprep.mubr.f32.mxu0 0.0
    %2023 = vmatmul.mubr.f32.gmra.mxu0 %v1955
    %v2024 = vpop.f32.mrf.mxu0
    %v2025 = vadd.f32 0.0, %v2024
    %v2026 = vpop.f32.mrf.mxu0
    %2027 = vdwg.mxu0
    %v2028 = vadd.f32 %v1957, %v2025
    %v2029 = vtanh.pop %v2028
    %2030 = vst [vmem:[%s515] sm:$0xff] %v2029
    %v2031 = vld [vmem:[%s517] sm:$0xff]
    %2032 = vmatprep.subr.mxu0 0.0
    %2033 = vmatpush1.msra.mxu0 %v1680
    %2034 = vmatprep.subr.mxu0 0.0
    %2035 = vmatpush1.msra.mxu0 %v1679
    %2036 = vmatprep.subr.mxu0 0.0
    %2037 = vmatpush1.msra.mxu0 %v1678
    %2038 = vmatprep.subr.mxu0 0.0
    %2039 = vmatpush1.msra.mxu0 %v1677
    %2040 = vmatprep.subr.mxu0 0.0
    %2041 = vmatpush1.msra.mxu0 %v1676
    %2042 = vmatprep.subr.mxu0 0.0
    %2043 = vmatpush1.msra.mxu0 %v1675
    %2044 = vmatprep.subr.mxu0 0.0
    %2045 = vmatpush1.msra.mxu0 %v1674
    %2046 = vmatprep.subr.mxu0 0.0
    %2047 = vmatpush1.msra.mxu0 %v1673
    %2048 = vmatprep.subr.mxu0 0.0
    %2049 = vmatpush1.msra.mxu0 %v1672
    %2050 = vmatprep.subr.mxu0 0.0
    %2051 = vmatpush1.msra.mxu0 %v1671
    %2052 = vmatprep.subr.mxu0 0.0
    %2053 = vmatpush1.msra.mxu0 %v1670
    %2054 = vmatprep.subr.mxu0 0.0
    %2055 = vmatpush1.msra.mxu0 %v1669
    %2056 = vmatprep.subr.mxu0 0.0
    %2057 = vmatpush1.msra.mxu0 %v1668
    %2058 = vmatprep.subr.mxu0 0.0
    %2059 = vmatpush1.msra.mxu0 %v1667
    %2060 = vmatprep.subr.mxu0 0.0
    %2061 = vmatpush1.msra.mxu0 %v1666
    %2062 = vmatprep.subr.mxu0 0.0
    %2063 = vmatpush1.msra.mxu0 %v1665
    %2064 = vmatprep.subr.mxu0 0.0
    %2065 = vmatpush2.msra.mxu0 0.0
    %2066 = vmatprep.subr.mxu0 0.0
    %2067 = vmatpush2.msra.mxu0 0.0
    %2068 = vmatprep.subr.mxu0 0.0
    %2069 = vmatpush2.msra.mxu0 0.0
    %2070 = vmatprep.subr.mxu0 0.0
    %2071 = vmatpush2.msra.mxu0 0.0
    %2072 = vmatprep.subr.mxu0 0.0
    %2073 = vmatpush2.msra.mxu0 0.0
    %2074 = vmatprep.subr.mxu0 0.0
    %2075 = vmatpush2.msra.mxu0 0.0
    %2076 = vmatprep.subr.mxu0 0.0
    %2077 = vmatpush2.msra.mxu0 0.0
    %2078 = vmatprep.subr.mxu0 0.0
    %2079 = vmatpush2.msra.mxu0 0.0
    %2080 = vmatprep.subr.mxu0 0.0
    %2081 = vmatpush2.msra.mxu0 0.0
    %2082 = vmatprep.subr.mxu0 0.0
    %2083 = vmatpush2.msra.mxu0 0.0
    %2084 = vmatprep.subr.mxu0 0.0
    %2085 = vmatpush2.msra.mxu0 0.0
    %2086 = vmatprep.subr.mxu0 0.0
    %2087 = vmatpush2.msra.mxu0 0.0
    %2088 = vmatprep.subr.mxu0 0.0
    %2089 = vmatpush2.msra.mxu0 0.0
    %2090 = vmatprep.subr.mxu0 0.0
    %2091 = vmatpush2.msra.mxu0 0.0
    %2092 = vmatprep.subr.mxu0 0.0
    %2093 = vmatpush2.msra.mxu0 0.0
    %2094 = vmatprep.subr.mxu0 0.0
    %2095 = vmatpush2.msra.mxu0 0.0
    %2096 = vmatprep.mubr.f32.mxu0 0.0
    %2097 = vmatmul.mubr.f32.gmra.mxu0 %v2029
    %v2098 = vpop.f32.mrf.mxu0
    %v2099 = vadd.f32 0.0, %v2098
    %v2100 = vpop.f32.mrf.mxu0
    %2101 = vdwg.mxu0
    %v2102 = vadd.f32 %v2031, %v2099
    %v2103 = vtanh.pop %v2102
    %2104 = vst [vmem:[%s591] sm:$0xff] %v2103
    %v2105 = vld [vmem:[%s593] sm:$0xff]
    %2106 = vmatprep.subr.mxu0 0.0
    %2107 = vmatpush1.msra.mxu0 %v1680
    %2108 = vmatprep.subr.mxu0 0.0
    %2109 = vmatpush1.msra.mxu0 %v1679
    %2110 = vmatprep.subr.mxu0 0.0
    %2111 = vmatpush1.msra.mxu0 %v1678
    %2112 = vmatprep.subr.mxu0 0.0
    %2113 = vmatpush1.msra.mxu0 %v1677
    %2114 = vmatprep.subr.mxu0 0.0
    %2115 = vmatpush1.msra.mxu0 %v1676
    %2116 = vmatprep.subr.mxu0 0.0
    %2117 = vmatpush1.msra.mxu0 %v1675
    %2118 = vmatprep.subr.mxu0 0.0
    %2119 = vmatpush1.msra.mxu0 %v1674
    %2120 = vmatprep.subr.mxu0 0.0
    %2121 = vmatpush1.msra.mxu0 %v1673
    %2122 = vmatprep.subr.mxu0 0.0
    %2123 = vmatpush1.msra.mxu0 %v1672
    %2124 = vmatprep.subr.mxu0 0.0
    %2125 = vmatpush1.msra.mxu0 %v1671
    %2126 = vmatprep.subr.mxu0 0.0
    %2127 = vmatpush1.msra.mxu0 %v1670
    %2128 = vmatprep.subr.mxu0 0.0
    %2129 = vmatpush1.msra.mxu0 %v1669
    %2130 = vmatprep.subr.mxu0 0.0
    %2131 = vmatpush1.msra.mxu0 %v1668
    %2132 = vmatprep.subr.mxu0 0.0
    %2133 = vmatpush1.msra.mxu0 %v1667
    %2134 = vmatprep.subr.mxu0 0.0
    %2135 = vmatpush1.msra.mxu0 %v1666
    %2136 = vmatprep.subr.mxu0 0.0
    %2137 = vmatpush1.msra.mxu0 %v1665
    %2138 = vmatprep.subr.mxu0 0.0
    %2139 = vmatpush2.msra.mxu0 0.0
    %2140 = vmatprep.subr.mxu0 0.0
    %2141 = vmatpush2.msra.mxu0 0.0
    %2142 = vmatprep.subr.mxu0 0.0
    %2143 = vmatpush2.msra.mxu0 0.0
    %2144 = vmatprep.subr.mxu0 0.0
    %2145 = vmatpush2.msra.mxu0 0.0
    %2146 = vmatprep.subr.mxu0 0.0
    %2147 = vmatpush2.msra.mxu0 0.0
    %2148 = vmatprep.subr.mxu0 0.0
    %2149 = vmatpush2.msra.mxu0 0.0
    %2150 = vmatprep.subr.mxu0 0.0
    %2151 = vmatpush2.msra.mxu0 0.0
    %2152 = vmatprep.subr.mxu0 0.0
    %2153 = vmatpush2.msra.mxu0 0.0
    %2154 = vmatprep.subr.mxu0 0.0
    %2155 = vmatpush2.msra.mxu0 0.0
    %2156 = vmatprep.subr.mxu0 0.0
    %2157 = vmatpush2.msra.mxu0 0.0
    %2158 = vmatprep.subr.mxu0 0.0
    %2159 = vmatpush2.msra.mxu0 0.0
    %2160 = vmatprep.subr.mxu0 0.0
    %2161 = vmatpush2.msra.mxu0 0.0
    %2162 = vmatprep.subr.mxu0 0.0
    %2163 = vmatpush2.msra.mxu0 0.0
    %2164 = vmatprep.subr.mxu0 0.0
    %2165 = vmatpush2.msra.mxu0 0.0
    %2166 = vmatprep.subr.mxu0 0.0
    %2167 = vmatpush2.msra.mxu0 0.0
    %2168 = vmatprep.subr.mxu0 0.0
    %2169 = vmatpush2.msra.mxu0 0.0
    %2170 = vmatprep.mubr.f32.mxu0 0.0
    %2171 = vmatmul.mubr.f32.gmra.mxu0 %v2103
    %v2172 = vpop.f32.mrf.mxu0
    %v2173 = vadd.f32 0.0, %v2172
    %v2174 = vpop.f32.mrf.mxu0
    %2175 = vdwg.mxu0
    %v2176 = vadd.f32 %v2105, %v2173
    %v2177 = vtanh.pop %v2176
    %2178 = vst [vmem:[%s667] sm:$0xff] %v2177
    %v2179 = vld [vmem:[%s669] sm:$0xff]
    %2180 = vmatprep.subr.mxu0 0.0
    %2181 = vmatpush1.msra.mxu0 %v1680
    %2182 = vmatprep.subr.mxu0 0.0
    %2183 = vmatpush1.msra.mxu0 %v1679
    %2184 = vmatprep.subr.mxu0 0.0
    %2185 = vmatpush1.msra.mxu0 %v1678
    %2186 = vmatprep.subr.mxu0 0.0
    %2187 = vmatpush1.msra.mxu0 %v1677
    %2188 = vmatprep.subr.mxu0 0.0
    %2189 = vmatpush1.msra.mxu0 %v1676
    %2190 = vmatprep.subr.mxu0 0.0
    %2191 = vmatpush1.msra.mxu0 %v1675
    %2192 = vmatprep.subr.mxu0 0.0
    %2193 = vmatpush1.msra.mxu0 %v1674
    %2194 = vmatprep.subr.mxu0 0.0
    %2195 = vmatpush1.msra.mxu0 %v1673
    %2196 = vmatprep.subr.mxu0 0.0
    %2197 = vmatpush1.msra.mxu0 %v1672
    %2198 = vmatprep.subr.mxu0 0.0
    %2199 = vmatpush1.msra.mxu0 %v1671
    %2200 = vmatprep.subr.mxu0 0.0
    %2201 = vmatpush1.msra.mxu0 %v1670
    %2202 = vmatprep.subr.mxu0 0.0
    %2203 = vmatpush1.msra.mxu0 %v1669
    %2204 = vmatprep.subr.mxu0 0.0
    %2205 = vmatpush1.msra.mxu0 %v1668
    %2206 = vmatprep.subr.mxu0 0.0
    %2207 = vmatpush1.msra.mxu0 %v1667
    %2208 = vmatprep.subr.mxu0 0.0
    %2209 = vmatpush1.msra.mxu0 %v1666
    %2210 = vmatprep.subr.mxu0 0.0
    %2211 = vmatpush1.msra.mxu0 %v1665
    %2212 = vmatprep.subr.mxu0 0.0
    %2213 = vmatpush2.msra.mxu0 0.0
    %2214 = vmatprep.subr.mxu0 0.0
    %2215 = vmatpush2.msra.mxu0 0.0
    %2216 = vmatprep.subr.mxu0 0.0
    %2217 = vmatpush2.msra.mxu0 0.0
    %2218 = vmatprep.subr.mxu0 0.0
    %2219 = vmatpush2.msra.mxu0 0.0
    %2220 = vmatprep.subr.mxu0 0.0
    %2221 = vmatpush2.msra.mxu0 0.0
    %2222 = vmatprep.subr.mxu0 0.0
    %2223 = vmatpush2.msra.mxu0 0.0
    %2224 = vmatprep.subr.mxu0 0.0
    %2225 = vmatpush2.msra.mxu0 0.0
    %2226 = vmatprep.subr.mxu0 0.0
    %2227 = vmatpush2.msra.mxu0 0.0
    %2228 = vmatprep.subr.mxu0 0.0
    %2229 = vmatpush2.msra.mxu0 0.0
    %2230 = vmatprep.subr.mxu0 0.0
    %2231 = vmatpush2.msra.mxu0 0.0
    %2232 = vmatprep.subr.mxu0 0.0
    %2233 = vmatpush2.msra.mxu0 0.0
    %2234 = vmatprep.subr.mxu0 0.0
    %2235 = vmatpush2.msra.mxu0 0.0
    %2236 = vmatprep.subr.mxu0 0.0
    %2237 = vmatpush2.msra.mxu0 0.0
    %2238 = vmatprep.subr.mxu0 0.0
    %2239 = vmatpush2.msra.mxu0 0.0
    %2240 = vmatprep.subr.mxu0 0.0
    %2241 = vmatpush2.msra.mxu0 0.0
    %2242 = vmatprep.subr.mxu0 0.0
    %2243 = vmatpush2.msra.mxu0 0.0
    %2244 = vmatprep.mubr.f32.mxu0 0.0
    %2245 = vmatmul.mubr.f32.gmra.mxu0 %v2177
    %v2246 = vpop.f32.mrf.mxu0
    %v2247 = vadd.f32 0.0, %v2246
    %v2248 = vpop.f32.mrf.mxu0
    %2249 = vdwg.mxu0
    %v2250 = vadd.f32 %v2179, %v2247
    %v2251 = vtanh.pop %v2250
    %2252 = vst [vmem:[%s743] sm:$0xff] %v2251
    %v2253 = vld [vmem:[%s745] sm:$0xff]
    %2254 = vmatprep.subr.mxu0 0.0
    %2255 = vmatpush1.msra.mxu0 %v1680
    %2256 = vmatprep.subr.mxu0 0.0
    %2257 = vmatpush1.msra.mxu0 %v1679
    %2258 = vmatprep.subr.mxu0 0.0
    %2259 = vmatpush1.msra.mxu0 %v1678
    %2260 = vmatprep.subr.mxu0 0.0
    %2261 = vmatpush1.msra.mxu0 %v1677
    %2262 = vmatprep.subr.mxu0 0.0
    %2263 = vmatpush1.msra.mxu0 %v1676
    %2264 = vmatprep.subr.mxu0 0.0
    %2265 = vmatpush1.msra.mxu0 %v1675
    %2266 = vmatprep.subr.mxu0 0.0
    %2267 = vmatpush1.msra.mxu0 %v1674
    %2268 = vmatprep.subr.mxu0 0.0
    %2269 = vmatpush1.msra.mxu0 %v1673
    %2270 = vmatprep.subr.mxu0 0.0
    %2271 = vmatpush1.msra.mxu0 %v1672
    %2272 = vmatprep.subr.mxu0 0.0
    %2273 = vmatpush1.msra.mxu0 %v1671
    %2274 = vmatprep.subr.mxu0 0.0
    %2275 = vmatpush1.msra.mxu0 %v1670
    %2276 = vmatprep.subr.mxu0 0.0
    %2277 = vmatpush1.msra.mxu0 %v1669
    %2278 = vmatprep.subr.mxu0 0.0
    %2279 = vmatpush1.msra.mxu0 %v1668
    %2280 = vmatprep.subr.mxu0 0.0
    %2281 = vmatpush1.msra.mxu0 %v1667
    %2282 = vmatprep.subr.mxu0 0.0
    %2283 = vmatpush1.msra.mxu0 %v1666
    %2284 = vmatprep.subr.mxu0 0.0
    %2285 = vmatpush1.msra.mxu0 %v1665
    %2286 = vmatprep.subr.mxu0 0.0
    %2287 = vmatpush2.msra.mxu0 0.0
    %2288 = vmatprep.subr.mxu0 0.0
    %2289 = vmatpush2.msra.mxu0 0.0
    %2290 = vmatprep.subr.mxu0 0.0
    %2291 = vmatpush2.msra.mxu0 0.0
    %2292 = vmatprep.subr.mxu0 0.0
    %2293 = vmatpush2.msra.mxu0 0.0
    %2294 = vmatprep.subr.mxu0 0.0
    %2295 = vmatpush2.msra.mxu0 0.0
    %2296 = vmatprep.subr.mxu0 0.0
    %2297 = vmatpush2.msra.mxu0 0.0
    %2298 = vmatprep.subr.mxu0 0.0
    %2299 = vmatpush2.msra.mxu0 0.0
    %2300 = vmatprep.subr.mxu0 0.0
    %2301 = vmatpush2.msra.mxu0 0.0
    %2302 = vmatprep.subr.mxu0 0.0
    %2303 = vmatpush2.msra.mxu0 0.0
    %2304 = vmatprep.subr.mxu0 0.0
    %2305 = vmatpush2.msra.mxu0 0.0
    %2306 = vmatprep.subr.mxu0 0.0
    %2307 = vmatpush2.msra.mxu0 0.0
    %2308 = vmatprep.subr.mxu0 0.0
    %2309 = vmatpush2.msra.mxu0 0.0
    %2310 = vmatprep.subr.mxu0 0.0
    %2311 = vmatpush2.msra.mxu0 0.0
    %2312 = vmatprep.subr.mxu0 0.0
    %2313 = vmatpush2.msra.mxu0 0.0
    %2314 = vmatprep.subr.mxu0 0.0
    %2315 = vmatpush2.msra.mxu0 0.0
    %2316 = vmatprep.subr.mxu0 0.0
    %2317 = vmatpush2.msra.mxu0 0.0
    %2318 = vmatprep.mubr.f32.mxu0 0.0
    %2319 = vmatmul.mubr.f32.gmra.mxu0 %v2251
    %v2320 = vpop.f32.mrf.mxu0
    %v2321 = vadd.f32 0.0, %v2320
    %v2322 = vpop.f32.mrf.mxu0
    %2323 = vdwg.mxu0
    %v2324 = vadd.f32 %v2253, %v2321
    %v2325 = vtanh.pop %v2324
    %2326 = vst [vmem:[%s819] sm:$0xff] %v2325
    %v2327 = vld [vmem:[%s821] sm:$0xff]
    %2328 = vmatprep.subr.mxu0 0.0
    %2329 = vmatpush1.msra.mxu0 %v1680
    %2330 = vmatprep.subr.mxu0 0.0
    %2331 = vmatpush1.msra.mxu0 %v1679
    %2332 = vmatprep.subr.mxu0 0.0
    %2333 = vmatpush1.msra.mxu0 %v1678
    %2334 = vmatprep.subr.mxu0 0.0
    %2335 = vmatpush1.msra.mxu0 %v1677
    %2336 = vmatprep.subr.mxu0 0.0
    %2337 = vmatpush1.msra.mxu0 %v1676
    %2338 = vmatprep.subr.mxu0 0.0
    %2339 = vmatpush1.msra.mxu0 %v1675
    %2340 = vmatprep.subr.mxu0 0.0
    %2341 = vmatpush1.msra.mxu0 %v1674
    %2342 = vmatprep.subr.mxu0 0.0
    %2343 = vmatpush1.msra.mxu0 %v1673
    %2344 = vmatprep.subr.mxu0 0.0
    %2345 = vmatpush1.msra.mxu0 %v1672
    %2346 = vmatprep.subr.mxu0 0.0
    %2347 = vmatpush1.msra.mxu0 %v1671
    %2348 = vmatprep.subr.mxu0 0.0
    %2349 = vmatpush1.msra.mxu0 %v1670
    %2350 = vmatprep.subr.mxu0 0.0
    %2351 = vmatpush1.msra.mxu0 %v1669
    %2352 = vmatprep.subr.mxu0 0.0
    %2353 = vmatpush1.msra.mxu0 %v1668
    %2354 = vmatprep.subr.mxu0 0.0
    %2355 = vmatpush1.msra.mxu0 %v1667
    %2356 = vmatprep.subr.mxu0 0.0
    %2357 = vmatpush1.msra.mxu0 %v1666
    %2358 = vmatprep.subr.mxu0 0.0
    %2359 = vmatpush1.msra.mxu0 %v1665
    %2360 = vmatprep.subr.mxu0 0.0
    %2361 = vmatpush2.msra.mxu0 0.0
    %2362 = vmatprep.subr.mxu0 0.0
    %2363 = vmatpush2.msra.mxu0 0.0
    %2364 = vmatprep.subr.mxu0 0.0
    %2365 = vmatpush2.msra.mxu0 0.0
    %2366 = vmatprep.subr.mxu0 0.0
    %2367 = vmatpush2.msra.mxu0 0.0
    %2368 = vmatprep.subr.mxu0 0.0
    %2369 = vmatpush2.msra.mxu0 0.0
    %2370 = vmatprep.subr.mxu0 0.0
    %2371 = vmatpush2.msra.mxu0 0.0
    %2372 = vmatprep.subr.mxu0 0.0
    %2373 = vmatpush2.msra.mxu0 0.0
    %2374 = vmatprep.subr.mxu0 0.0
    %2375 = vmatpush2.msra.mxu0 0.0
    %2376 = vmatprep.subr.mxu0 0.0
    %2377 = vmatpush2.msra.mxu0 0.0
    %2378 = vmatprep.subr.mxu0 0.0
    %2379 = vmatpush2.msra.mxu0 0.0
    %2380 = vmatprep.subr.mxu0 0.0
    %2381 = vmatpush2.msra.mxu0 0.0
    %2382 = vmatprep.subr.mxu0 0.0
    %2383 = vmatpush2.msra.mxu0 0.0
    %2384 = vmatprep.subr.mxu0 0.0
    %2385 = vmatpush2.msra.mxu0 0.0
    %2386 = vmatprep.subr.mxu0 0.0
    %2387 = vmatpush2.msra.mxu0 0.0
    %2388 = vmatprep.subr.mxu0 0.0
    %2389 = vmatpush2.msra.mxu0 0.0
    %2390 = vmatprep.subr.mxu0 0.0
    %2391 = vmatpush2.msra.mxu0 0.0
    %2392 = vmatprep.mubr.f32.mxu0 0.0
    %2393 = vmatmul.mubr.f32.gmra.mxu0 %v2325
    %v2394 = vpop.f32.mrf.mxu0
    %v2395 = vadd.f32 0.0, %v2394
    %v2396 = vpop.f32.mrf.mxu0
    %2397 = vdwg.mxu0
    %v2398 = vadd.f32 %v2327, %v2395
    %v2399 = vtanh.pop %v2398
    %2400 = vst [vmem:[%s895] sm:$0xff] %v2399
    // Predicated region
    $region70: #{tpu_custom_call.1} parent=1 // pred_check
      _
    $region71: #{tpu_custom_call.1} parent=1 // pred_check_branch
      %2402 = sbr.rel (0) target = $region73
    $region72: #{tpu_custom_call.1} parent=1 // pred_region
      %s2404 = ssub.s32 1024, 1024
      %2405 = vsyncadd [#allocation5], %s2404
      %s2406 = sshll.u32 [#allocation15], 4
      %s2407 = int_to_ptr.vmem [resolvable:$true] %s2406
      %2412 = dma.vmem_to_hbm [thread:$0]  %s2407, 1024, %s10, [#allocation5], 128, 128, 8
    $region73: #{tpu_custom_call.1} parent=1 // pred_fallthru
      _
    // Predicated region
    $region74: #{tpu_custom_call.1} parent=1 // pred_check
      _
    $region75: #{tpu_custom_call.1} parent=1 // pred_check_branch
      %2414 = sbr.rel (0) target = $region77
    $region76: #{tpu_custom_call.1} parent=1 // pred_region
      %2415 = dma.done [#allocation5], 1024
    $region77: #{tpu_custom_call.1} parent=1 // pred_fallthru
      _
    %2416 = vsyncpa [#allocation4], 1
    %2417 = vsyncpa [#allocation7], 1
    %2418 = vsyncpa [#allocation10], 1
    %2419 = vsyncpa [#allocation13], 1
    %2420 = vsyncpa [#allocation5], 1

</llo_original>
